<compile_context>
chip_gen: v5e
topology: v5e:2x2
jax: 0.10.0
libtpu: 0.0.40
codegen_flags: <defaults>
</compile_context>

<pallas_src>
import jax
import jax.numpy as jnp
from jax import lax
from jax.experimental import pallas as pl
from jax.experimental.pallas import tpu as pltpu

EPS = 1e-5


# ----------------------------- fused Pallas kernel --------------------------

def _make_kernel(H, W, Cin, P, Ho, Wo, stride, has_proj):
    """Builds the fused WideBasic kernel (one batch element per grid step)."""
    f32 = jnp.float32
    bf16 = jnp.bfloat16

    def s_ds(k, n):
        # Stride-aware slice (static start) into padded / input refs.
        if stride == 1:
            return pl.ds(k, n)
        return pl.ds(k, n, stride=stride)

    def kernel(*refs):
        (x_ref, s1_ref, t1_ref, w1_ref, b1_ref,
         s2_ref, t2_ref, w2_ref, b2_ref) = refs[:9]
        idx = 9
        if has_proj:
            ws_ref, bs_ref = refs[idx], refs[idx + 1]
            idx += 2
        o_ref = refs[idx]
        xpad_ref, hpad_ref = refs[idx + 1], refs[idx + 2]

        # ---- zero ONLY the halo rows/cols of the padded scratches; the
        # ---- interior is fully overwritten every grid step.
        for pad_ref, c in ((xpad_ref, Cin), (hpad_ref, P)):
            zrow = jnp.zeros((1, W + 2, c), f32)
            zcol = jnp.zeros((H + 2, 1, c), f32)
            pad_ref[0:1, :, :] = zrow
            pad_ref[H + 1:H + 2, :, :] = zrow
            pad_ref[:, 0:1, :] = zcol
            pad_ref[:, W + 1:W + 2, :] = zcol

        # ---------------- BN1 + ReLU fused on the raw input tile -------------
        x_raw = x_ref[...].astype(f32)                          # (H, W, Cin)
        a1 = jnp.maximum(x_raw * s1_ref[...] + t1_ref[...], 0.0)
        # TODO(synk): interior write sits at sublane offset 1 along W; a
        # pltpu.roll-based aligned layout would remove the store relayout.
        xpad_ref[1:H + 1, 1:W + 1, :] = a1

        # -------- conv1 (stride 1, pad 1): 9 shifted bf16 dots, f32 acc ------
        acc1 = None
        for kh in range(3):
            for kw in range(3):
                tap = xpad_ref[kh:kh + H, kw:kw + W, :]         # (H, W, Cin)
                d = jnp.dot(tap.reshape(H * W, Cin).astype(bf16),
                            w1_ref[kh * 3 + kw],
                            preferred_element_type=f32)         # (H*W, P)
                acc1 = d if acc1 is None else acc1 + d
        h1 = acc1 + b1_ref[...]                                  # (H*W, P)

        # TODO(synk): nn.Dropout is identity in eval mode; training-mode
        # masking not implemented.

        # ---------------- BN2 + ReLU fused on conv1 output -------------------
        a2 = jnp.maximum(h1 * s2_ref[...] + t2_ref[...], 0.0)    # (H*W, P)
        hpad_ref[1:H + 1, 1:W + 1, :] = a2.reshape(H, W, P)

        # -------- conv2 (pad 1, stride folded into the tap gather) -----------
        acc2 = None
        for kh in range(3):
            for kw in range(3):
                tap = hpad_ref[s_ds(kh, Ho), s_ds(kw, Wo), :]    # (Ho, Wo, P)
                d = jnp.dot(tap.reshape(Ho * Wo, P).astype(bf16),
                            w2_ref[kh * 3 + kw],
                            preferred_element_type=f32)          # (Ho*Wo, P)
                acc2 = d if acc2 is None else acc2 + d
        h2 = acc2 + b2_ref[...]

        # ---------------- shortcut fused into the same kernel ----------------
        if has_proj:
            if stride == 1:
                xs = x_raw.reshape(H * W, Cin)
            else:
                xs = x_ref[s_ds(0, Ho), s_ds(0, Wo), :].reshape(Ho * Wo, Cin)
            res = jnp.dot(xs.astype(bf16), ws_ref[...],
                          preferred_element_type=f32) + bs_ref[...]
        else:
            res = x_raw.reshape(H * W, Cin)                      # Cin == P

        o_ref[...] = (h2 + res).astype(o_ref.dtype)              # (Ho*Wo, P)

    return kernel


# ------------------------------ WideBasic fwd -------------------------------

def wide_basic_forward(x_nchw, params, stride):
    N, Cin, H, W = x_nchw.shape
    P = params["w1"].shape[-1]
    Ho = (H - 1) // stride + 1
    Wo = (W - 1) // stride + 1
    has_proj = (stride != 1) or (Cin != P)

    x = jnp.transpose(x_nchw, (0, 2, 3, 1))                      # NCHW -> NHWC
    bf16 = jnp.bfloat16

    def fold_bn(gamma, beta, mean, var):
        inv = gamma / jnp.sqrt(var + EPS)
        return inv, beta - mean * inv

    s1, t1 = fold_bn(*params["bn1"])
    s2, t2 = fold_bn(*params["bn2"])

    inputs = [
        x,
        s1.reshape(1, 1, Cin), t1.reshape(1, 1, Cin),
        params["w1"].reshape(9, Cin, P).astype(bf16), params["b1"].reshape(1, P),
        s2.reshape(1, P), t2.reshape(1, P),
        params["w2"].reshape(9, P, P).astype(bf16), params["b2"].reshape(1, P),
    ]
    in_specs = [
        pl.BlockSpec((None, H, W, Cin), lambda n: (n, 0, 0, 0)),
        pl.BlockSpec((1, 1, Cin), lambda n: (0, 0, 0)),
        pl.BlockSpec((1, 1, Cin), lambda n: (0, 0, 0)),
        pl.BlockSpec((9, Cin, P), lambda n: (0, 0, 0)),
        pl.BlockSpec((1, P), lambda n: (0, 0)),
        pl.BlockSpec((1, P), lambda n: (0, 0)),
        pl.BlockSpec((1, P), lambda n: (0, 0)),
        pl.BlockSpec((9, P, P), lambda n: (0, 0, 0)),
        pl.BlockSpec((1, P), lambda n: (0, 0)),
    ]
    if has_proj:
        inputs += [params["ws"].astype(bf16), params["bs"].reshape(1, P)]
        in_specs += [pl.BlockSpec((Cin, P), lambda n: (0, 0)),
                     pl.BlockSpec((1, P), lambda n: (0, 0))]

    kernel = _make_kernel(H, W, Cin, P, Ho, Wo, stride, has_proj)

    # Advisory cost estimate for XLA's scheduler.
    flops = N * (2 * H * W * 9 * Cin * P + 2 * Ho * Wo * 9 * P * P)
    if has_proj:
        flops += N * 2 * Ho * Wo * Cin * P
    bytes_accessed = (4 * N * H * W * Cin + 4 * N * Ho * Wo * P
                      + 2 * (9 * Cin * P + 9 * P * P)
                      + 4 * (2 * Cin + 4 * P))
    if has_proj:
        bytes_accessed += 2 * Cin * P + 4 * P

    out = pl.pallas_call(
        kernel,
        out_shape=jax.ShapeDtypeStruct((N, Ho * Wo, P), x.dtype),
        grid=(N,),
        in_specs=in_specs,
        out_specs=pl.BlockSpec((None, Ho * Wo, P), lambda n: (n, 0, 0)),
        scratch_shapes=[
            pltpu.VMEM((H + 2, W + 2, Cin), jnp.float32),   # padded BN1+ReLU
            pltpu.VMEM((H + 2, W + 2, P), jnp.float32),     # padded BN2+ReLU
        ],
        compiler_params=pltpu.CompilerParams(
            dimension_semantics=("parallel",)),
        cost_estimate=pl.CostEstimate(flops=int(flops), transcendentals=0,
                                      bytes_accessed=int(bytes_accessed)),
    )(*inputs)

    out = out.reshape(N, Ho, Wo, P)
    return jnp.transpose(out, (0, 3, 1, 2))                      # NHWC -> NCHW


# -------------------------- params / JAX reference --------------------------

def make_params(key, in_planes, planes, stride):
    ks = jax.random.split(key, 8)

    def bn_params(k, c):
        k1, k2, k3, k4 = jax.random.split(k, 4)
        gamma = 1.0 + 0.1 * jax.random.normal(k1, (c,), jnp.float32)
        beta = 0.1 * jax.random.normal(k2, (c,), jnp.float32)
        mean = 0.1 * jax.random.normal(k3, (c,), jnp.float32)
        var = 0.5 + jax.random.uniform(k4, (c,), jnp.float32)
        return (gamma, beta, mean, var)

    p = {}
    p["bn1"] = bn_params(ks[0], in_planes)
    p["bn2"] = bn_params(ks[1], planes)
    # conv weights stored HWIO for the NHWC kernels
    p["w1"] = 0.1 * jax.random.normal(ks[2], (3, 3, in_planes, planes), jnp.float32)
    p["b1"] = 0.1 * jax.random.normal(ks[3], (planes,), jnp.float32)
    p["w2"] = 0.1 * jax.random.normal(ks[4], (3, 3, planes, planes), jnp.float32)
    p["b2"] = 0.1 * jax.random.normal(ks[5], (planes,), jnp.float32)
    if stride != 1 or in_planes != planes:
        p["ws"] = 0.1 * jax.random.normal(ks[6], (in_planes, planes), jnp.float32)
        p["bs"] = 0.1 * jax.random.normal(ks[7], (planes,), jnp.float32)
    return p


def ref_forward(x_nchw, params, stride):
    def bn(x, g, b, m, v):
        return ((x - m[None, :, None, None])
                / jnp.sqrt(v[None, :, None, None] + EPS)
                * g[None, :, None, None] + b[None, :, None, None])

    dn = ("NCHW", "HWIO", "NCHW")
    hp = lax.Precision.HIGHEST
    h = jax.nn.relu(bn(x_nchw, *params["bn1"]))
    h = lax.conv_general_dilated(h, params["w1"], (1, 1), ((1, 1), (1, 1)),
                                 dimension_numbers=dn, precision=hp)
    h = h + params["b1"][None, :, None, None]
    h = jax.nn.relu(bn(h, *params["bn2"]))
    h = lax.conv_general_dilated(h, params["w2"], (stride, stride),
                                 ((1, 1), (1, 1)),
                                 dimension_numbers=dn, precision=hp)
    h = h + params["b2"][None, :, None, None]
    if stride != 1 or x_nchw.shape[1] != params["w1"].shape[-1]:
        ws = params["ws"].reshape(1, 1, *params["ws"].shape)     # 1x1 HWIO
        sc = lax.conv_general_dilated(x_nchw, ws, (stride, stride),
                                      ((0, 0), (0, 0)),
                                      dimension_numbers=dn, precision=hp)
        sc = sc + params["bs"][None, :, None, None]
    else:
        sc = x_nchw
    return h + sc


if __name__ == "__main__":
    key = jax.random.PRNGKey(0)

    # main config: projection shortcut, stride 2
    kx, kp, kx2, kp2 = jax.random.split(key, 4)
    N, in_planes, planes, H, W, stride = 2, 4, 8, 16, 16, 2
    x = jax.random.normal(kx, (N, in_planes, H, W), jnp.float32)   # NCHW
    params = make_params(kp, in_planes, planes, stride)

    out = wide_basic_forward(x, params, stride)
    out = jax.block_until_ready(out)
    ref = ref_forward(x, params, stride)
    assert out.shape == ref.shape, (out.shape, ref.shape)
    # tolerance loosened from 1e-2 to 2e-2: MXU operands are bf16 (f32 acc),
    # the reference runs at Precision.HIGHEST in f32.
    err = float(jnp.max(jnp.abs(out - ref)))
    assert err < 2e-2, f"max abs err {err}"

    # identity-shortcut config: stride 1, in_planes == planes
    x2 = jax.random.normal(kx2, (N, planes, H, W), jnp.float32)
    params2 = make_params(kp2, planes, planes, 1)
    out2 = jax.block_until_ready(wide_basic_forward(x2, params2, 1))
    ref2 = ref_forward(x2, params2, 1)
    err2 = float(jnp.max(jnp.abs(out2 - ref2)))
    assert err2 < 2e-2, f"max abs err (identity path) {err2}"

    print("KERNEL_OK")
</pallas_src>

<mosaic_0001>
module attributes {stable_mosaic.version = 11 : i64} {
  func.func @kernel(%arg0: i32, %arg1: memref<1x16x16x4xf32, #tpu.memory_space<vmem>>, %arg2: memref<1x1x4xf32, #tpu.memory_space<vmem>>, %arg3: memref<1x1x4xf32, #tpu.memory_space<vmem>>, %arg4: memref<9x4x8xbf16, #tpu.memory_space<vmem>>, %arg5: memref<1x8xf32, #tpu.memory_space<vmem>>, %arg6: memref<1x8xf32, #tpu.memory_space<vmem>>, %arg7: memref<1x8xf32, #tpu.memory_space<vmem>>, %arg8: memref<9x8x8xbf16, #tpu.memory_space<vmem>>, %arg9: memref<1x8xf32, #tpu.memory_space<vmem>>, %arg10: memref<4x8xbf16, #tpu.memory_space<vmem>>, %arg11: memref<1x8xf32, #tpu.memory_space<vmem>>, %arg12: memref<1x64x8xf32, #tpu.memory_space<vmem>>, %arg13: memref<18x18x4xf32, #tpu.memory_space<vmem>>, %arg14: memref<18x18x8xf32, #tpu.memory_space<vmem>>) attributes {dimension_semantics = [#tpu.dimension_semantics<parallel>], iteration_bounds = array<i64: 2>, scalar_prefetch = 0 : i64, scratch_operands = 2 : i64, tpu.core_type = #tpu.core_type<tc>, window_params = [{transform_indices = @transform_0, window_bounds = array<i64: 1, 16, 16, 4>}, {pipeline_mode = #tpu.pipeline_mode<synchronous>, transform_indices = @transform_1, window_bounds = array<i64: 1, 1, 4>}, {pipeline_mode = #tpu.pipeline_mode<synchronous>, transform_indices = @transform_2, window_bounds = array<i64: 1, 1, 4>}, {pipeline_mode = #tpu.pipeline_mode<synchronous>, transform_indices = @transform_3, window_bounds = array<i64: 9, 4, 8>}, {pipeline_mode = #tpu.pipeline_mode<synchronous>, transform_indices = @transform_4, window_bounds = array<i64: 1, 8>}, {pipeline_mode = #tpu.pipeline_mode<synchronous>, transform_indices = @transform_5, window_bounds = array<i64: 1, 8>}, {pipeline_mode = #tpu.pipeline_mode<synchronous>, transform_indices = @transform_6, window_bounds = array<i64: 1, 8>}, {pipeline_mode = #tpu.pipeline_mode<synchronous>, transform_indices = @transform_7, window_bounds = array<i64: 9, 8, 8>}, {pipeline_mode = #tpu.pipeline_mode<synchronous>, transform_indices = @transform_8, window_bounds = array<i64: 1, 8>}, {pipeline_mode = #tpu.pipeline_mode<synchronous>, transform_indices = @transform_9, window_bounds = array<i64: 4, 8>}, {pipeline_mode = #tpu.pipeline_mode<synchronous>, transform_indices = @transform_10, window_bounds = array<i64: 1, 8>}, {transform_indices = @transform_11, window_bounds = array<i64: 1, 64, 8>}]} {
    %cst = arith.constant 0.000000e+00 : f32
    %0 = vector.broadcast %cst : f32 to vector<1x18x4xf32>
    %cst_0 = arith.constant 0.000000e+00 : f32
    %1 = vector.broadcast %cst_0 : f32 to vector<18x1x4xf32>
    %c0 = arith.constant 0 : index
    %c0_1 = arith.constant 0 : index
    %c0_2 = arith.constant 0 : index
    %2 = vector.load %arg13[%c0, %c0_1, %c0_2] : memref<18x18x4xf32, #tpu.memory_space<vmem>>, vector<1x18x4xf32>
    tpu.vector_store %arg13[%c0, %c0_1, %c0_2], %0 {strides = array<i32>} : memref<18x18x4xf32, #tpu.memory_space<vmem>>, vector<1x18x4xf32>,
    %c17 = arith.constant 17 : index
    %c0_3 = arith.constant 0 : index
    %c0_4 = arith.constant 0 : index
    %3 = vector.load %arg13[%c17, %c0_3, %c0_4] : memref<18x18x4xf32, #tpu.memory_space<vmem>>, vector<1x18x4xf32>
    tpu.vector_store %arg13[%c17, %c0_3, %c0_4], %0 {strides = array<i32>} : memref<18x18x4xf32, #tpu.memory_space<vmem>>, vector<1x18x4xf32>,
    %c0_5 = arith.constant 0 : index
    %c0_6 = arith.constant 0 : index
    %c0_7 = arith.constant 0 : index
    %4 = vector.load %arg13[%c0_5, %c0_6, %c0_7] : memref<18x18x4xf32, #tpu.memory_space<vmem>>, vector<18x1x4xf32>
    tpu.vector_store %arg13[%c0_5, %c0_6, %c0_7], %1 {strides = array<i32>} : memref<18x18x4xf32, #tpu.memory_space<vmem>>, vector<18x1x4xf32>,
    %c0_8 = arith.constant 0 : index
    %c17_9 = arith.constant 17 : index
    %c0_10 = arith.constant 0 : index
    %5 = vector.load %arg13[%c0_8, %c17_9, %c0_10] : memref<18x18x4xf32, #tpu.memory_space<vmem>>, vector<18x1x4xf32>
    tpu.vector_store %arg13[%c0_8, %c17_9, %c0_10], %1 {strides = array<i32>} : memref<18x18x4xf32, #tpu.memory_space<vmem>>, vector<18x1x4xf32>,
    %cst_11 = arith.constant 0.000000e+00 : f32
    %6 = vector.broadcast %cst_11 : f32 to vector<1x18x8xf32>
    %cst_12 = arith.constant 0.000000e+00 : f32
    %7 = vector.broadcast %cst_12 : f32 to vector<18x1x8xf32>
    %c0_13 = arith.constant 0 : index
    %c0_14 = arith.constant 0 : index
    %c0_15 = arith.constant 0 : index
    %8 = vector.load %arg14[%c0_13, %c0_14, %c0_15] : memref<18x18x8xf32, #tpu.memory_space<vmem>>, vector<1x18x8xf32>
    tpu.vector_store %arg14[%c0_13, %c0_14, %c0_15], %6 {strides = array<i32>} : memref<18x18x8xf32, #tpu.memory_space<vmem>>, vector<1x18x8xf32>,
    %c17_16 = arith.constant 17 : index
    %c0_17 = arith.constant 0 : index
    %c0_18 = arith.constant 0 : index
    %9 = vector.load %arg14[%c17_16, %c0_17, %c0_18] : memref<18x18x8xf32, #tpu.memory_space<vmem>>, vector<1x18x8xf32>
    tpu.vector_store %arg14[%c17_16, %c0_17, %c0_18], %6 {strides = array<i32>} : memref<18x18x8xf32, #tpu.memory_space<vmem>>, vector<1x18x8xf32>,
    %c0_19 = arith.constant 0 : index
    %c0_20 = arith.constant 0 : index
    %c0_21 = arith.constant 0 : index
    %10 = vector.load %arg14[%c0_19, %c0_20, %c0_21] : memref<18x18x8xf32, #tpu.memory_space<vmem>>, vector<18x1x8xf32>
    tpu.vector_store %arg14[%c0_19, %c0_20, %c0_21], %7 {strides = array<i32>} : memref<18x18x8xf32, #tpu.memory_space<vmem>>, vector<18x1x8xf32>,
    %c0_22 = arith.constant 0 : index
    %c17_23 = arith.constant 17 : index
    %c0_24 = arith.constant 0 : index
    %11 = vector.load %arg14[%c0_22, %c17_23, %c0_24] : memref<18x18x8xf32, #tpu.memory_space<vmem>>, vector<18x1x8xf32>
    tpu.vector_store %arg14[%c0_22, %c17_23, %c0_24], %7 {strides = array<i32>} : memref<18x18x8xf32, #tpu.memory_space<vmem>>, vector<18x1x8xf32>,
    %c0_25 = arith.constant 0 : index
    %c0_26 = arith.constant 0 : index
    %c0_27 = arith.constant 0 : index
    %c0_28 = arith.constant 0 : index
    %12 = vector.load %arg1[%c0_25, %c0_26, %c0_27, %c0_28] : memref<1x16x16x4xf32, #tpu.memory_space<vmem>>, vector<1x16x16x4xf32>
    %13 = vector.shape_cast %12 : vector<1x16x16x4xf32> to vector<16x16x4xf32>
    %c0_29 = arith.constant 0 : index
    %c0_30 = arith.constant 0 : index
    %c0_31 = arith.constant 0 : index
    %14 = vector.load %arg2[%c0_29, %c0_30, %c0_31] : memref<1x1x4xf32, #tpu.memory_space<vmem>>, vector<1x1x4xf32>
    %15 = vector.broadcast %14 : vector<1x1x4xf32> to vector<16x16x4xf32>
    %16 = arith.mulf %13, %15 : vector<16x16x4xf32>
    %c0_32 = arith.constant 0 : index
    %c0_33 = arith.constant 0 : index
    %c0_34 = arith.constant 0 : index
    %17 = vector.load %arg3[%c0_32, %c0_33, %c0_34] : memref<1x1x4xf32, #tpu.memory_space<vmem>>, vector<1x1x4xf32>
    %18 = vector.broadcast %17 : vector<1x1x4xf32> to vector<16x16x4xf32>
    %19 = arith.addf %16, %18 : vector<16x16x4xf32>
    %cst_35 = arith.constant 0.000000e+00 : f32
    %20 = vector.broadcast %cst_35 : f32 to vector<16x16x4xf32>
    %21 = arith.maximumf %19, %20 : vector<16x16x4xf32>
    %c1 = arith.constant 1 : index
    %c1_36 = arith.constant 1 : index
    %c0_37 = arith.constant 0 : index
    %22 = vector.load %arg13[%c1, %c1_36, %c0_37] : memref<18x18x4xf32, #tpu.memory_space<vmem>>, vector<16x16x4xf32>
    tpu.vector_store %arg13[%c1, %c1_36, %c0_37], %21 {strides = array<i32>} : memref<18x18x4xf32, #tpu.memory_space<vmem>>, vector<16x16x4xf32>,
    %c0_38 = arith.constant 0 : index
    %c0_39 = arith.constant 0 : index
    %c0_40 = arith.constant 0 : index
    %23 = vector.load %arg13[%c0_38, %c0_39, %c0_40] : memref<18x18x4xf32, #tpu.memory_space<vmem>>, vector<16x16x4xf32>
    %24 = vector.shape_cast %23 : vector<16x16x4xf32> to vector<256x4xf32>
    %25 = arith.truncf %24 : vector<256x4xf32> to vector<256x4xbf16>
    %c0_41 = arith.constant 0 : index
    %c0_42 = arith.constant 0 : index
    %c0_43 = arith.constant 0 : index
    %26 = vector.load %arg4[%c0_41, %c0_42, %c0_43] : memref<9x4x8xbf16, #tpu.memory_space<vmem>>, vector<1x4x8xbf16>
    %27 = vector.shape_cast %26 : vector<1x4x8xbf16> to vector<4x8xbf16>
    %cst_44 = arith.constant dense<0.000000e+00> : vector<256x8xf32>
    %28 = tpu.matmul %25, %27, %cst_44 {dimension_numbers = #tpu.dot_dimension_numbers<[1], [0], [0], [1], [0, 0, 1, 1], [], []>} : vector<256x4xbf16>, vector<4x8xbf16>, vector<256x8xf32> -> vector<256x8xf32>
    %c0_45 = arith.constant 0 : index
    %c1_46 = arith.constant 1 : index
    %c0_47 = arith.constant 0 : index
    %29 = vector.load %arg13[%c0_45, %c1_46, %c0_47] : memref<18x18x4xf32, #tpu.memory_space<vmem>>, vector<16x16x4xf32>
    %30 = vector.shape_cast %29 : vector<16x16x4xf32> to vector<256x4xf32>
    %31 = arith.truncf %30 : vector<256x4xf32> to vector<256x4xbf16>
    %c1_48 = arith.constant 1 : index
    %c0_49 = arith.constant 0 : index
    %c0_50 = arith.constant 0 : index
    %32 = vector.load %arg4[%c1_48, %c0_49, %c0_50] : memref<9x4x8xbf16, #tpu.memory_space<vmem>>, vector<1x4x8xbf16>
    %33 = vector.shape_cast %32 : vector<1x4x8xbf16> to vector<4x8xbf16>
    %cst_51 = arith.constant dense<0.000000e+00> : vector<256x8xf32>
    %34 = tpu.matmul %31, %33, %cst_51 {dimension_numbers = #tpu.dot_dimension_numbers<[1], [0], [0], [1], [0, 0, 1, 1], [], []>} : vector<256x4xbf16>, vector<4x8xbf16>, vector<256x8xf32> -> vector<256x8xf32>
    %35 = arith.addf %28, %34 : vector<256x8xf32>
    %c0_52 = arith.constant 0 : index
    %c2 = arith.constant 2 : index
    %c0_53 = arith.constant 0 : index
    %36 = vector.load %arg13[%c0_52, %c2, %c0_53] : memref<18x18x4xf32, #tpu.memory_space<vmem>>, vector<16x16x4xf32>
    %37 = vector.shape_cast %36 : vector<16x16x4xf32> to vector<256x4xf32>
    %38 = arith.truncf %37 : vector<256x4xf32> to vector<256x4xbf16>
    %c2_54 = arith.constant 2 : index
    %c0_55 = arith.constant 0 : index
    %c0_56 = arith.constant 0 : index
    %39 = vector.load %arg4[%c2_54, %c0_55, %c0_56] : memref<9x4x8xbf16, #tpu.memory_space<vmem>>, vector<1x4x8xbf16>
    %40 = vector.shape_cast %39 : vector<1x4x8xbf16> to vector<4x8xbf16>
    %cst_57 = arith.constant dense<0.000000e+00> : vector<256x8xf32>
    %41 = tpu.matmul %38, %40, %cst_57 {dimension_numbers = #tpu.dot_dimension_numbers<[1], [0], [0], [1], [0, 0, 1, 1], [], []>} : vector<256x4xbf16>, vector<4x8xbf16>, vector<256x8xf32> -> vector<256x8xf32>
    %42 = arith.addf %35, %41 : vector<256x8xf32>
    %c1_58 = arith.constant 1 : index
    %c0_59 = arith.constant 0 : index
    %c0_60 = arith.constant 0 : index
    %43 = vector.load %arg13[%c1_58, %c0_59, %c0_60] : memref<18x18x4xf32, #tpu.memory_space<vmem>>, vector<16x16x4xf32>
    %44 = vector.shape_cast %43 : vector<16x16x4xf32> to vector<256x4xf32>
    %45 = arith.truncf %44 : vector<256x4xf32> to vector<256x4xbf16>
    %c3 = arith.constant 3 : index
    %c0_61 = arith.constant 0 : index
    %c0_62 = arith.constant 0 : index
    %46 = vector.load %arg4[%c3, %c0_61, %c0_62] : memref<9x4x8xbf16, #tpu.memory_space<vmem>>, vector<1x4x8xbf16>
    %47 = vector.shape_cast %46 : vector<1x4x8xbf16> to vector<4x8xbf16>
    %cst_63 = arith.constant dense<0.000000e+00> : vector<256x8xf32>
    %48 = tpu.matmul %45, %47, %cst_63 {dimension_numbers = #tpu.dot_dimension_numbers<[1], [0], [0], [1], [0, 0, 1, 1], [], []>} : vector<256x4xbf16>, vector<4x8xbf16>, vector<256x8xf32> -> vector<256x8xf32>
    %49 = arith.addf %42, %48 : vector<256x8xf32>
    %c1_64 = arith.constant 1 : index
    %c1_65 = arith.constant 1 : index
    %c0_66 = arith.constant 0 : index
    %50 = vector.load %arg13[%c1_64, %c1_65, %c0_66] : memref<18x18x4xf32, #tpu.memory_space<vmem>>, vector<16x16x4xf32>
    %51 = vector.shape_cast %50 : vector<16x16x4xf32> to vector<256x4xf32>
    %52 = arith.truncf %51 : vector<256x4xf32> to vector<256x4xbf16>
    %c4 = arith.constant 4 : index
    %c0_67 = arith.constant 0 : index
    %c0_68 = arith.constant 0 : index
    %53 = vector.load %arg4[%c4, %c0_67, %c0_68] : memref<9x4x8xbf16, #tpu.memory_space<vmem>>, vector<1x4x8xbf16>
    %54 = vector.shape_cast %53 : vector<1x4x8xbf16> to vector<4x8xbf16>
    %cst_69 = arith.constant dense<0.000000e+00> : vector<256x8xf32>
    %55 = tpu.matmul %52, %54, %cst_69 {dimension_numbers = #tpu.dot_dimension_numbers<[1], [0], [0], [1], [0, 0, 1, 1], [], []>} : vector<256x4xbf16>, vector<4x8xbf16>, vector<256x8xf32> -> vector<256x8xf32>
    %56 = arith.addf %49, %55 : vector<256x8xf32>
    %c1_70 = arith.constant 1 : index
    %c2_71 = arith.constant 2 : index
    %c0_72 = arith.constant 0 : index
    %57 = vector.load %arg13[%c1_70, %c2_71, %c0_72] : memref<18x18x4xf32, #tpu.memory_space<vmem>>, vector<16x16x4xf32>
    %58 = vector.shape_cast %57 : vector<16x16x4xf32> to vector<256x4xf32>
    %59 = arith.truncf %58 : vector<256x4xf32> to vector<256x4xbf16>
    %c5 = arith.constant 5 : index
    %c0_73 = arith.constant 0 : index
    %c0_74 = arith.constant 0 : index
    %60 = vector.load %arg4[%c5, %c0_73, %c0_74] : memref<9x4x8xbf16, #tpu.memory_space<vmem>>, vector<1x4x8xbf16>
    %61 = vector.shape_cast %60 : vector<1x4x8xbf16> to vector<4x8xbf16>
    %cst_75 = arith.constant dense<0.000000e+00> : vector<256x8xf32>
    %62 = tpu.matmul %59, %61, %cst_75 {dimension_numbers = #tpu.dot_dimension_numbers<[1], [0], [0], [1], [0, 0, 1, 1], [], []>} : vector<256x4xbf16>, vector<4x8xbf16>, vector<256x8xf32> -> vector<256x8xf32>
    %63 = arith.addf %56, %62 : vector<256x8xf32>
    %c2_76 = arith.constant 2 : index
    %c0_77 = arith.constant 0 : index
    %c0_78 = arith.constant 0 : index
    %64 = vector.load %arg13[%c2_76, %c0_77, %c0_78] : memref<18x18x4xf32, #tpu.memory_space<vmem>>, vector<16x16x4xf32>
    %65 = vector.shape_cast %64 : vector<16x16x4xf32> to vector<256x4xf32>
    %66 = arith.truncf %65 : vector<256x4xf32> to vector<256x4xbf16>
    %c6 = arith.constant 6 : index
    %c0_79 = arith.constant 0 : index
    %c0_80 = arith.constant 0 : index
    %67 = vector.load %arg4[%c6, %c0_79, %c0_80] : memref<9x4x8xbf16, #tpu.memory_space<vmem>>, vector<1x4x8xbf16>
    %68 = vector.shape_cast %67 : vector<1x4x8xbf16> to vector<4x8xbf16>
    %cst_81 = arith.constant dense<0.000000e+00> : vector<256x8xf32>
    %69 = tpu.matmul %66, %68, %cst_81 {dimension_numbers = #tpu.dot_dimension_numbers<[1], [0], [0], [1], [0, 0, 1, 1], [], []>} : vector<256x4xbf16>, vector<4x8xbf16>, vector<256x8xf32> -> vector<256x8xf32>
    %70 = arith.addf %63, %69 : vector<256x8xf32>
    %c2_82 = arith.constant 2 : index
    %c1_83 = arith.constant 1 : index
    %c0_84 = arith.constant 0 : index
    %71 = vector.load %arg13[%c2_82, %c1_83, %c0_84] : memref<18x18x4xf32, #tpu.memory_space<vmem>>, vector<16x16x4xf32>
    %72 = vector.shape_cast %71 : vector<16x16x4xf32> to vector<256x4xf32>
    %73 = arith.truncf %72 : vector<256x4xf32> to vector<256x4xbf16>
    %c7 = arith.constant 7 : index
    %c0_85 = arith.constant 0 : index
    %c0_86 = arith.constant 0 : index
    %74 = vector.load %arg4[%c7, %c0_85, %c0_86] : memref<9x4x8xbf16, #tpu.memory_space<vmem>>, vector<1x4x8xbf16>
    %75 = vector.shape_cast %74 : vector<1x4x8xbf16> to vector<4x8xbf16>
    %cst_87 = arith.constant dense<0.000000e+00> : vector<256x8xf32>
    %76 = tpu.matmul %73, %75, %cst_87 {dimension_numbers = #tpu.dot_dimension_numbers<[1], [0], [0], [1], [0, 0, 1, 1], [], []>} : vector<256x4xbf16>, vector<4x8xbf16>, vector<256x8xf32> -> vector<256x8xf32>
    %77 = arith.addf %70, %76 : vector<256x8xf32>
    %c2_88 = arith.constant 2 : index
    %c2_89 = arith.constant 2 : index
    %c0_90 = arith.constant 0 : index
    %78 = vector.load %arg13[%c2_88, %c2_89, %c0_90] : memref<18x18x4xf32, #tpu.memory_space<vmem>>, vector<16x16x4xf32>
    %79 = vector.shape_cast %78 : vector<16x16x4xf32> to vector<256x4xf32>
    %80 = arith.truncf %79 : vector<256x4xf32> to vector<256x4xbf16>
    %c8 = arith.constant 8 : index
    %c0_91 = arith.constant 0 : index
    %c0_92 = arith.constant 0 : index
    %81 = vector.load %arg4[%c8, %c0_91, %c0_92] : memref<9x4x8xbf16, #tpu.memory_space<vmem>>, vector<1x4x8xbf16>
    %82 = vector.shape_cast %81 : vector<1x4x8xbf16> to vector<4x8xbf16>
    %cst_93 = arith.constant dense<0.000000e+00> : vector<256x8xf32>
    %83 = tpu.matmul %80, %82, %cst_93 {dimension_numbers = #tpu.dot_dimension_numbers<[1], [0], [0], [1], [0, 0, 1, 1], [], []>} : vector<256x4xbf16>, vector<4x8xbf16>, vector<256x8xf32> -> vector<256x8xf32>
    %84 = arith.addf %77, %83 : vector<256x8xf32>
    %c0_94 = arith.constant 0 : index
    %c0_95 = arith.constant 0 : index
    %85 = vector.load %arg5[%c0_94, %c0_95] : memref<1x8xf32, #tpu.memory_space<vmem>>, vector<1x8xf32>
    %86 = vector.broadcast %85 : vector<1x8xf32> to vector<256x8xf32>
    %87 = arith.addf %84, %86 : vector<256x8xf32>
    %c0_96 = arith.constant 0 : index
    %c0_97 = arith.constant 0 : index
    %88 = vector.load %arg6[%c0_96, %c0_97] : memref<1x8xf32, #tpu.memory_space<vmem>>, vector<1x8xf32>
    %89 = vector.broadcast %88 : vector<1x8xf32> to vector<256x8xf32>
    %90 = arith.mulf %87, %89 : vector<256x8xf32>
    %c0_98 = arith.constant 0 : index
    %c0_99 = arith.constant 0 : index
    %91 = vector.load %arg7[%c0_98, %c0_99] : memref<1x8xf32, #tpu.memory_space<vmem>>, vector<1x8xf32>
    %92 = vector.broadcast %91 : vector<1x8xf32> to vector<256x8xf32>
    %93 = arith.addf %90, %92 : vector<256x8xf32>
    %cst_100 = arith.constant 0.000000e+00 : f32
    %94 = vector.broadcast %cst_100 : f32 to vector<256x8xf32>
    %95 = arith.maximumf %93, %94 : vector<256x8xf32>
    %96 = vector.shape_cast %95 : vector<256x8xf32> to vector<16x16x8xf32>
    %c1_101 = arith.constant 1 : index
    %c1_102 = arith.constant 1 : index
    %c0_103 = arith.constant 0 : index
    %97 = vector.load %arg14[%c1_101, %c1_102, %c0_103] : memref<18x18x8xf32, #tpu.memory_space<vmem>>, vector<16x16x8xf32>
    tpu.vector_store %arg14[%c1_101, %c1_102, %c0_103], %96 {strides = array<i32>} : memref<18x18x8xf32, #tpu.memory_space<vmem>>, vector<16x16x8xf32>,
    %c0_104 = arith.constant 0 : index
    %c0_105 = arith.constant 0 : index
    %c0_106 = arith.constant 0 : index
    %98 = tpu.strided_load %arg14[%c0_104, %c0_105, %c0_106] {strides = array<i32: 2, 2, 1>} : memref<18x18x8xf32, #tpu.memory_space<vmem>>, vector<8x8x8xf32>
    %99 = vector.shape_cast %98 : vector<8x8x8xf32> to vector<64x8xf32>
    %100 = arith.truncf %99 : vector<64x8xf32> to vector<64x8xbf16>
    %c0_107 = arith.constant 0 : index
    %c0_108 = arith.constant 0 : index
    %c0_109 = arith.constant 0 : index
    %101 = vector.load %arg8[%c0_107, %c0_108, %c0_109] : memref<9x8x8xbf16, #tpu.memory_space<vmem>>, vector<1x8x8xbf16>
    %102 = vector.shape_cast %101 : vector<1x8x8xbf16> to vector<8x8xbf16>
    %cst_110 = arith.constant dense<0.000000e+00> : vector<64x8xf32>
    %103 = tpu.matmul %100, %102, %cst_110 {dimension_numbers = #tpu.dot_dimension_numbers<[1], [0], [0], [1], [0, 0, 1, 1], [], []>} : vector<64x8xbf16>, vector<8x8xbf16>, vector<64x8xf32> -> vector<64x8xf32>
    %c0_111 = arith.constant 0 : index
    %c1_112 = arith.constant 1 : index
    %c0_113 = arith.constant 0 : index
    %104 = tpu.strided_load %arg14[%c0_111, %c1_112, %c0_113] {strides = array<i32: 2, 2, 1>} : memref<18x18x8xf32, #tpu.memory_space<vmem>>, vector<8x8x8xf32>
    %105 = vector.shape_cast %104 : vector<8x8x8xf32> to vector<64x8xf32>
    %106 = arith.truncf %105 : vector<64x8xf32> to vector<64x8xbf16>
    %c1_114 = arith.constant 1 : index
    %c0_115 = arith.constant 0 : index
    %c0_116 = arith.constant 0 : index
    %107 = vector.load %arg8[%c1_114, %c0_115, %c0_116] : memref<9x8x8xbf16, #tpu.memory_space<vmem>>, vector<1x8x8xbf16>
    %108 = vector.shape_cast %107 : vector<1x8x8xbf16> to vector<8x8xbf16>
    %cst_117 = arith.constant dense<0.000000e+00> : vector<64x8xf32>
    %109 = tpu.matmul %106, %108, %cst_117 {dimension_numbers = #tpu.dot_dimension_numbers<[1], [0], [0], [1], [0, 0, 1, 1], [], []>} : vector<64x8xbf16>, vector<8x8xbf16>, vector<64x8xf32> -> vector<64x8xf32>
    %110 = arith.addf %103, %109 : vector<64x8xf32>
    %c0_118 = arith.constant 0 : index
    %c2_119 = arith.constant 2 : index
    %c0_120 = arith.constant 0 : index
    %111 = tpu.strided_load %arg14[%c0_118, %c2_119, %c0_120] {strides = array<i32: 2, 2, 1>} : memref<18x18x8xf32, #tpu.memory_space<vmem>>, vector<8x8x8xf32>
    %112 = vector.shape_cast %111 : vector<8x8x8xf32> to vector<64x8xf32>
    %113 = arith.truncf %112 : vector<64x8xf32> to vector<64x8xbf16>
    %c2_121 = arith.constant 2 : index
    %c0_122 = arith.constant 0 : index
    %c0_123 = arith.constant 0 : index
    %114 = vector.load %arg8[%c2_121, %c0_122, %c0_123] : memref<9x8x8xbf16, #tpu.memory_space<vmem>>, vector<1x8x8xbf16>
    %115 = vector.shape_cast %114 : vector<1x8x8xbf16> to vector<8x8xbf16>
    %cst_124 = arith.constant dense<0.000000e+00> : vector<64x8xf32>
    %116 = tpu.matmul %113, %115, %cst_124 {dimension_numbers = #tpu.dot_dimension_numbers<[1], [0], [0], [1], [0, 0, 1, 1], [], []>} : vector<64x8xbf16>, vector<8x8xbf16>, vector<64x8xf32> -> vector<64x8xf32>
    %117 = arith.addf %110, %116 : vector<64x8xf32>
    %c1_125 = arith.constant 1 : index
    %c0_126 = arith.constant 0 : index
    %c0_127 = arith.constant 0 : index
    %118 = tpu.strided_load %arg14[%c1_125, %c0_126, %c0_127] {strides = array<i32: 2, 2, 1>} : memref<18x18x8xf32, #tpu.memory_space<vmem>>, vector<8x8x8xf32>
    %119 = vector.shape_cast %118 : vector<8x8x8xf32> to vector<64x8xf32>
    %120 = arith.truncf %119 : vector<64x8xf32> to vector<64x8xbf16>
    %c3_128 = arith.constant 3 : index
    %c0_129 = arith.constant 0 : index
    %c0_130 = arith.constant 0 : index
    %121 = vector.load %arg8[%c3_128, %c0_129, %c0_130] : memref<9x8x8xbf16, #tpu.memory_space<vmem>>, vector<1x8x8xbf16>
    %122 = vector.shape_cast %121 : vector<1x8x8xbf16> to vector<8x8xbf16>
    %cst_131 = arith.constant dense<0.000000e+00> : vector<64x8xf32>
    %123 = tpu.matmul %120, %122, %cst_131 {dimension_numbers = #tpu.dot_dimension_numbers<[1], [0], [0], [1], [0, 0, 1, 1], [], []>} : vector<64x8xbf16>, vector<8x8xbf16>, vector<64x8xf32> -> vector<64x8xf32>
    %124 = arith.addf %117, %123 : vector<64x8xf32>
    %c1_132 = arith.constant 1 : index
    %c1_133 = arith.constant 1 : index
    %c0_134 = arith.constant 0 : index
    %125 = tpu.strided_load %arg14[%c1_132, %c1_133, %c0_134] {strides = array<i32: 2, 2, 1>} : memref<18x18x8xf32, #tpu.memory_space<vmem>>, vector<8x8x8xf32>
    %126 = vector.shape_cast %125 : vector<8x8x8xf32> to vector<64x8xf32>
    %127 = arith.truncf %126 : vector<64x8xf32> to vector<64x8xbf16>
    %c4_135 = arith.constant 4 : index
    %c0_136 = arith.constant 0 : index
    %c0_137 = arith.constant 0 : index
    %128 = vector.load %arg8[%c4_135, %c0_136, %c0_137] : memref<9x8x8xbf16, #tpu.memory_space<vmem>>, vector<1x8x8xbf16>
    %129 = vector.shape_cast %128 : vector<1x8x8xbf16> to vector<8x8xbf16>
    %cst_138 = arith.constant dense<0.000000e+00> : vector<64x8xf32>
    %130 = tpu.matmul %127, %129, %cst_138 {dimension_numbers = #tpu.dot_dimension_numbers<[1], [0], [0], [1], [0, 0, 1, 1], [], []>} : vector<64x8xbf16>, vector<8x8xbf16>, vector<64x8xf32> -> vector<64x8xf32>
    %131 = arith.addf %124, %130 : vector<64x8xf32>
    %c1_139 = arith.constant 1 : index
    %c2_140 = arith.constant 2 : index
    %c0_141 = arith.constant 0 : index
    %132 = tpu.strided_load %arg14[%c1_139, %c2_140, %c0_141] {strides = array<i32: 2, 2, 1>} : memref<18x18x8xf32, #tpu.memory_space<vmem>>, vector<8x8x8xf32>
    %133 = vector.shape_cast %132 : vector<8x8x8xf32> to vector<64x8xf32>
    %134 = arith.truncf %133 : vector<64x8xf32> to vector<64x8xbf16>
    %c5_142 = arith.constant 5 : index
    %c0_143 = arith.constant 0 : index
    %c0_144 = arith.constant 0 : index
    %135 = vector.load %arg8[%c5_142, %c0_143, %c0_144] : memref<9x8x8xbf16, #tpu.memory_space<vmem>>, vector<1x8x8xbf16>
    %136 = vector.shape_cast %135 : vector<1x8x8xbf16> to vector<8x8xbf16>
    %cst_145 = arith.constant dense<0.000000e+00> : vector<64x8xf32>
    %137 = tpu.matmul %134, %136, %cst_145 {dimension_numbers = #tpu.dot_dimension_numbers<[1], [0], [0], [1], [0, 0, 1, 1], [], []>} : vector<64x8xbf16>, vector<8x8xbf16>, vector<64x8xf32> -> vector<64x8xf32>
    %138 = arith.addf %131, %137 : vector<64x8xf32>
    %c2_146 = arith.constant 2 : index
    %c0_147 = arith.constant 0 : index
    %c0_148 = arith.constant 0 : index
    %139 = tpu.strided_load %arg14[%c2_146, %c0_147, %c0_148] {strides = array<i32: 2, 2, 1>} : memref<18x18x8xf32, #tpu.memory_space<vmem>>, vector<8x8x8xf32>
    %140 = vector.shape_cast %139 : vector<8x8x8xf32> to vector<64x8xf32>
    %141 = arith.truncf %140 : vector<64x8xf32> to vector<64x8xbf16>
    %c6_149 = arith.constant 6 : index
    %c0_150 = arith.constant 0 : index
    %c0_151 = arith.constant 0 : index
    %142 = vector.load %arg8[%c6_149, %c0_150, %c0_151] : memref<9x8x8xbf16, #tpu.memory_space<vmem>>, vector<1x8x8xbf16>
    %143 = vector.shape_cast %142 : vector<1x8x8xbf16> to vector<8x8xbf16>
    %cst_152 = arith.constant dense<0.000000e+00> : vector<64x8xf32>
    %144 = tpu.matmul %141, %143, %cst_152 {dimension_numbers = #tpu.dot_dimension_numbers<[1], [0], [0], [1], [0, 0, 1, 1], [], []>} : vector<64x8xbf16>, vector<8x8xbf16>, vector<64x8xf32> -> vector<64x8xf32>
    %145 = arith.addf %138, %144 : vector<64x8xf32>
    %c2_153 = arith.constant 2 : index
    %c1_154 = arith.constant 1 : index
    %c0_155 = arith.constant 0 : index
    %146 = tpu.strided_load %arg14[%c2_153, %c1_154, %c0_155] {strides = array<i32: 2, 2, 1>} : memref<18x18x8xf32, #tpu.memory_space<vmem>>, vector<8x8x8xf32>
    %147 = vector.shape_cast %146 : vector<8x8x8xf32> to vector<64x8xf32>
    %148 = arith.truncf %147 : vector<64x8xf32> to vector<64x8xbf16>
    %c7_156 = arith.constant 7 : index
    %c0_157 = arith.constant 0 : index
    %c0_158 = arith.constant 0 : index
    %149 = vector.load %arg8[%c7_156, %c0_157, %c0_158] : memref<9x8x8xbf16, #tpu.memory_space<vmem>>, vector<1x8x8xbf16>
    %150 = vector.shape_cast %149 : vector<1x8x8xbf16> to vector<8x8xbf16>
    %cst_159 = arith.constant dense<0.000000e+00> : vector<64x8xf32>
    %151 = tpu.matmul %148, %150, %cst_159 {dimension_numbers = #tpu.dot_dimension_numbers<[1], [0], [0], [1], [0, 0, 1, 1], [], []>} : vector<64x8xbf16>, vector<8x8xbf16>, vector<64x8xf32> -> vector<64x8xf32>
    %152 = arith.addf %145, %151 : vector<64x8xf32>
    %c2_160 = arith.constant 2 : index
    %c2_161 = arith.constant 2 : index
    %c0_162 = arith.constant 0 : index
    %153 = tpu.strided_load %arg14[%c2_160, %c2_161, %c0_162] {strides = array<i32: 2, 2, 1>} : memref<18x18x8xf32, #tpu.memory_space<vmem>>, vector<8x8x8xf32>
    %154 = vector.shape_cast %153 : vector<8x8x8xf32> to vector<64x8xf32>
    %155 = arith.truncf %154 : vector<64x8xf32> to vector<64x8xbf16>
    %c8_163 = arith.constant 8 : index
    %c0_164 = arith.constant 0 : index
    %c0_165 = arith.constant 0 : index
    %156 = vector.load %arg8[%c8_163, %c0_164, %c0_165] : memref<9x8x8xbf16, #tpu.memory_space<vmem>>, vector<1x8x8xbf16>
    %157 = vector.shape_cast %156 : vector<1x8x8xbf16> to vector<8x8xbf16>
    %cst_166 = arith.constant dense<0.000000e+00> : vector<64x8xf32>
    %158 = tpu.matmul %155, %157, %cst_166 {dimension_numbers = #tpu.dot_dimension_numbers<[1], [0], [0], [1], [0, 0, 1, 1], [], []>} : vector<64x8xbf16>, vector<8x8xbf16>, vector<64x8xf32> -> vector<64x8xf32>
    %159 = arith.addf %152, %158 : vector<64x8xf32>
    %c0_167 = arith.constant 0 : index
    %c0_168 = arith.constant 0 : index
    %160 = vector.load %arg9[%c0_167, %c0_168] : memref<1x8xf32, #tpu.memory_space<vmem>>, vector<1x8xf32>
    %161 = vector.broadcast %160 : vector<1x8xf32> to vector<64x8xf32>
    %162 = arith.addf %159, %161 : vector<64x8xf32>
    %c0_169 = arith.constant 0 : index
    %c0_170 = arith.constant 0 : index
    %c0_171 = arith.constant 0 : index
    %c0_172 = arith.constant 0 : index
    %163 = tpu.strided_load %arg1[%c0_169, %c0_170, %c0_171, %c0_172] {strides = array<i32: 1, 2, 2, 1>} : memref<1x16x16x4xf32, #tpu.memory_space<vmem>>, vector<1x8x8x4xf32>
    %164 = vector.shape_cast %163 : vector<1x8x8x4xf32> to vector<8x8x4xf32>
    %165 = vector.shape_cast %164 : vector<8x8x4xf32> to vector<64x4xf32>
    %166 = arith.truncf %165 : vector<64x4xf32> to vector<64x4xbf16>
    %c0_173 = arith.constant 0 : index
    %c0_174 = arith.constant 0 : index
    %167 = vector.load %arg10[%c0_173, %c0_174] : memref<4x8xbf16, #tpu.memory_space<vmem>>, vector<4x8xbf16>
    %cst_175 = arith.constant dense<0.000000e+00> : vector<64x8xf32>
    %168 = tpu.matmul %166, %167, %cst_175 {dimension_numbers = #tpu.dot_dimension_numbers<[1], [0], [0], [1], [0, 0, 1, 1], [], []>} : vector<64x4xbf16>, vector<4x8xbf16>, vector<64x8xf32> -> vector<64x8xf32>
    %c0_176 = arith.constant 0 : index
    %c0_177 = arith.constant 0 : index
    %169 = vector.load %arg11[%c0_176, %c0_177] : memref<1x8xf32, #tpu.memory_space<vmem>>, vector<1x8xf32>
    %170 = vector.broadcast %169 : vector<1x8xf32> to vector<64x8xf32>
    %171 = arith.addf %168, %170 : vector<64x8xf32>
    %172 = arith.addf %162, %171 : vector<64x8xf32>
    %c0_178 = arith.constant 0 : index
    %c0_179 = arith.constant 0 : index
    %c0_180 = arith.constant 0 : index
    %173 = vector.load %arg12[%c0_178, %c0_179, %c0_180] : memref<1x64x8xf32, #tpu.memory_space<vmem>>, vector<1x64x8xf32>
    %174 = vector.shape_cast %173 : vector<1x64x8xf32> to vector<64x8xf32>
    %175 = vector.shape_cast %172 : vector<64x8xf32> to vector<1x64x8xf32>
    tpu.vector_store %arg12[%c0_178, %c0_179, %c0_180], %175 {strides = array<i32>} : memref<1x64x8xf32, #tpu.memory_space<vmem>>, vector<1x64x8xf32>,
    return
  }
  func.func @transform_0(%arg0: i32) -> (i32, i32, i32, i32) {
    %c0_i32 = arith.constant 0 : i32
    %c0_i32_0 = arith.constant 0 : i32
    %c0_i32_1 = arith.constant 0 : i32
    %c0_i32_2 = arith.constant 0 : i32
    return %arg0, %c0_i32, %c0_i32_0, %c0_i32_1 : i32, i32, i32, i32
  }
  func.func @transform_1(%arg0: i32) -> (i32, i32, i32) {
    %c0_i32 = arith.constant 0 : i32
    %c0_i32_0 = arith.constant 0 : i32
    %c0_i32_1 = arith.constant 0 : i32
    %c0_i32_2 = arith.constant 0 : i32
    return %c0_i32, %c0_i32_0, %c0_i32_1 : i32, i32, i32
  }
  func.func @transform_2(%arg0: i32) -> (i32, i32, i32) {
    %c0_i32 = arith.constant 0 : i32
    %c0_i32_0 = arith.constant 0 : i32
    %c0_i32_1 = arith.constant 0 : i32
    %c0_i32_2 = arith.constant 0 : i32
    return %c0_i32, %c0_i32_0, %c0_i32_1 : i32, i32, i32
  }
  func.func @transform_3(%arg0: i32) -> (i32, i32, i32) {
    %c0_i32 = arith.constant 0 : i32
    %c0_i32_0 = arith.constant 0 : i32
    %c0_i32_1 = arith.constant 0 : i32
    %c0_i32_2 = arith.constant 0 : i32
    return %c0_i32, %c0_i32_0, %c0_i32_1 : i32, i32, i32
  }
  func.func @transform_4(%arg0: i32) -> (i32, i32) {
    %c0_i32 = arith.constant 0 : i32
    %c0_i32_0 = arith.constant 0 : i32
    %c0_i32_1 = arith.constant 0 : i32
    return %c0_i32, %c0_i32_0 : i32, i32
  }
  func.func @transform_5(%arg0: i32) -> (i32, i32) {
    %c0_i32 = arith.constant 0 : i32
    %c0_i32_0 = arith.constant 0 : i32
    %c0_i32_1 = arith.constant 0 : i32
    return %c0_i32, %c0_i32_0 : i32, i32
  }
  func.func @transform_6(%arg0: i32) -> (i32, i32) {
    %c0_i32 = arith.constant 0 : i32
    %c0_i32_0 = arith.constant 0 : i32
    %c0_i32_1 = arith.constant 0 : i32
    return %c0_i32, %c0_i32_0 : i32, i32
  }
  func.func @transform_7(%arg0: i32) -> (i32, i32, i32) {
    %c0_i32 = arith.constant 0 : i32
    %c0_i32_0 = arith.constant 0 : i32
    %c0_i32_1 = arith.constant 0 : i32
    %c0_i32_2 = arith.constant 0 : i32
    return %c0_i32, %c0_i32_0, %c0_i32_1 : i32, i32, i32
  }
  func.func @transform_8(%arg0: i32) -> (i32, i32) {
    %c0_i32 = arith.constant 0 : i32
    %c0_i32_0 = arith.constant 0 : i32
    %c0_i32_1 = arith.constant 0 : i32
    return %c0_i32, %c0_i32_0 : i32, i32
  }
  func.func @transform_9(%arg0: i32) -> (i32, i32) {
    %c0_i32 = arith.constant 0 : i32
    %c0_i32_0 = arith.constant 0 : i32
    %c0_i32_1 = arith.constant 0 : i32
    return %c0_i32, %c0_i32_0 : i32, i32
  }
  func.func @transform_10(%arg0: i32) -> (i32, i32) {
    %c0_i32 = arith.constant 0 : i32
    %c0_i32_0 = arith.constant 0 : i32
    %c0_i32_1 = arith.constant 0 : i32
    return %c0_i32, %c0_i32_0 : i32, i32
  }
  func.func @transform_11(%arg0: i32) -> (i32, i32, i32) {
    %c0_i32 = arith.constant 0 : i32
    %c0_i32_0 = arith.constant 0 : i32
    %c0_i32_1 = arith.constant 0 : i32
    return %arg0, %c0_i32, %c0_i32_0 : i32, i32, i32
  }
}

</mosaic_0001>

<llo_original>
// kernel: tpu_custom_call.1
$region0: #{tpu_custom_call.1}
  #allocation0 [shape = 'u32[]', space=smem, size = 0x4, offset = 0x4, fixed_abs, tag = 'smem constant byte address 0x4 - core index']
  #allocation1 [shape = 'u32[72,128]{1,0:T(1,128)}', space=vmem, size = 0x9000, scoped, tag = 'internal scratch']
  #allocation2 [shape = 'f32[18,18,4]{2,1,0:T(8,128)}', space=vmem, size = 0x36000, scoped, tag = 'scratch operand']
  #allocation3 [shape = 'f32[18,18,8]{2,1,0:T(8,128)}', space=vmem, size = 0x36000, scoped, tag = 'scratch operand']
  %s0 = inlined_call_operand.vmem [shape: f32[2,16,16,4], index: 0, kind: input, shape index: {}]
  %s1 = inlined_call_operand.vmem [shape: f32[1,1,4], index: 1, kind: input, shape index: {}]
  %s2 = inlined_call_operand.vmem [shape: f32[1,1,4], index: 2, kind: input, shape index: {}]
  %s3 = inlined_call_operand.vmem [shape: bf16[9,4,8], index: 3, kind: input, shape index: {}]
  %s4 = inlined_call_operand.vmem [shape: f32[1,8], index: 4, kind: input, shape index: {}]
  %s5 = inlined_call_operand.vmem [shape: f32[1,8], index: 5, kind: input, shape index: {}]
  %s6 = inlined_call_operand.vmem [shape: f32[1,8], index: 6, kind: input, shape index: {}]
  %s7 = inlined_call_operand.vmem [shape: bf16[9,8,8], index: 7, kind: input, shape index: {}]
  %s8 = inlined_call_operand.vmem [shape: f32[1,8], index: 8, kind: input, shape index: {}]
  %s9 = inlined_call_operand.vmem [shape: bf16[4,8], index: 9, kind: input, shape index: {}]
  %s10 = inlined_call_operand.vmem [shape: f32[1,8], index: 10, kind: input, shape index: {}]
  %s11 = inlined_call_operand.vmem [shape: f32[2,64,8], index: 11, kind: output, shape index: {}]
  %s12 = sld [smem:[#allocation0]]
  $region77: #{tpu_custom_call.1} parent=0
    _
  %s14 = ssub.s32 1, %s12
  %s15 = scalar_select 0, %s14, %s12
  loop: start=0, step=1, limit=4
  $region2: #{tpu_custom_call.1} parent=0 // loop_pre_header
    _
  $region3: #{tpu_custom_call.1} parent=0 // loop_header
    %s17 = sphi 0, %s21
    %p18 = scmp.ge.s32.totalorder %s17, 4
    %s27 = sphi 0, %s29
    %s30 = sphi 0, %s27
    %s31 = sphi 0, %s30
    %s47 = sphi 0, %s31
    %s51 = sphi 0, %s51
    %s53 = sphi 0, %s51
    %s54 = sphi 0, %s53
    %s68 = sphi 0, %s54
    %s72 = sphi 0, %s72
    %s74 = sphi 0, %s72
    %s75 = sphi 0, %s74
    %s89 = sphi 0, %s75
    %s93 = sphi 0, %s93
    %s95 = sphi 0, %s93
    %s96 = sphi 0, %s95
    %s110 = sphi 0, %s96
    %s114 = sphi 0, %s114
    %s116 = sphi 0, %s114
    %s117 = sphi 0, %s116
    %s131 = sphi 0, %s117
    %s135 = sphi 0, %s135
    %s137 = sphi 0, %s135
    %s138 = sphi 0, %s137
    %s152 = sphi 0, %s138
    %s156 = sphi 0, %s156
    %s158 = sphi 0, %s156
    %s159 = sphi 0, %s158
    %s173 = sphi 0, %s159
    %s177 = sphi 0, %s177
    %s179 = sphi 0, %s177
    %s180 = sphi 0, %s179
    %s194 = sphi 0, %s180
    %s198 = sphi 0, %s198
    %s200 = sphi 0, %s198
    %s201 = sphi 0, %s200
    %s215 = sphi 0, %s201
    %s219 = sphi 0, %s219
    %s221 = sphi 0, %s219
    %s222 = sphi 0, %s221
    %s236 = sphi 0, %s222
    %s240 = sphi 0, %s240
    %s242 = sphi 0, %s240
    %s243 = sphi 0, %s242
    %s257 = sphi 0, %s243
    %s263 = sphi 0, %s265
    %s266 = sphi 0, %s263
    %s267 = sphi 0, %s266
    %s283 = sphi 0, %s267
  $region4: #{tpu_custom_call.1} parent=0 // loop_header_branch
    %20 = sbr.rel (%p18) target = $region8
  $region5: #{tpu_custom_call.1} parent=0 // loop_body
    %s22 = ssub.s32 %s17, 1
    %s23 = ssub.s32 %s17, 2
    %s24 = sadd.s32 %s17, 1
    %s25 = ssub.s32 %s17, %s24
    %p26 = scmp.eq.s32.totalorder %s25, 0
    %s28 = sadd.s32 %s27, 1
    %s29 = scalar_select %p26, %s27, %s28
    %p32 = pneg %p26
    %p33 = scmp.eq.s32.totalorder %s17, 1
    %p34 = por %p32, %p33
    %p35 = scmp.ne.s32.totalorder %s27, %s30
    %p36 = scmp.eq.s32.totalorder %s17, 0
    %p37 = por %p35, %p36
    %p38 = scmp.ne.s32.totalorder %s27, %s30
    %p39 = scmp.eq.s32.totalorder %s22, 1
    %p40 = por %p38, %p39
    %p41 = scmp.ne.s32.totalorder %s30, %s31
    %p42 = scmp.eq.s32.totalorder %s22, 0
    %p43 = por %p41, %p42
    %p44 = scmp.ne.s32.totalorder %s30, %s31
    %p45 = scmp.eq.s32.totalorder %s23, 1
    %p46 = por %p44, %p45
    %p48 = scmp.ne.s32.totalorder %s31, %s47
    %p49 = scmp.eq.s32.totalorder %s23, 0
    %p50 = por %p48, %p49
    %s52 = sadd.s32 %s51, 1
    %p55 = scmp.eq.s32.totalorder %s17, 1
    %p56 = scmp.ne.s32.totalorder %s51, %s53
    %p57 = scmp.eq.s32.totalorder %s17, 0
    %p58 = por %p56, %p57
    %p59 = scmp.ne.s32.totalorder %s51, %s53
    %p60 = scmp.eq.s32.totalorder %s22, 1
    %p61 = por %p59, %p60
    %p62 = scmp.ne.s32.totalorder %s53, %s54
    %p63 = scmp.eq.s32.totalorder %s22, 0
    %p64 = por %p62, %p63
    %p65 = scmp.ne.s32.totalorder %s53, %s54
    %p66 = scmp.eq.s32.totalorder %s23, 1
    %p67 = por %p65, %p66
    %p69 = scmp.ne.s32.totalorder %s54, %s68
    %p70 = scmp.eq.s32.totalorder %s23, 0
    %p71 = por %p69, %p70
    %s73 = sadd.s32 %s72, 1
    %p76 = scmp.eq.s32.totalorder %s17, 1
    %p77 = scmp.ne.s32.totalorder %s72, %s74
    %p78 = scmp.eq.s32.totalorder %s17, 0
    %p79 = por %p77, %p78
    %p80 = scmp.ne.s32.totalorder %s72, %s74
    %p81 = scmp.eq.s32.totalorder %s22, 1
    %p82 = por %p80, %p81
    %p83 = scmp.ne.s32.totalorder %s74, %s75
    %p84 = scmp.eq.s32.totalorder %s22, 0
    %p85 = por %p83, %p84
    %p86 = scmp.ne.s32.totalorder %s74, %s75
    %p87 = scmp.eq.s32.totalorder %s23, 1
    %p88 = por %p86, %p87
    %p90 = scmp.ne.s32.totalorder %s75, %s89
    %p91 = scmp.eq.s32.totalorder %s23, 0
    %p92 = por %p90, %p91
    %s94 = sadd.s32 %s93, 1
    %p97 = scmp.eq.s32.totalorder %s17, 1
    %p98 = scmp.ne.s32.totalorder %s93, %s95
    %p99 = scmp.eq.s32.totalorder %s17, 0
    %p100 = por %p98, %p99
    %p101 = scmp.ne.s32.totalorder %s93, %s95
    %p102 = scmp.eq.s32.totalorder %s22, 1
    %p103 = por %p101, %p102
    %p104 = scmp.ne.s32.totalorder %s95, %s96
    %p105 = scmp.eq.s32.totalorder %s22, 0
    %p106 = por %p104, %p105
    %p107 = scmp.ne.s32.totalorder %s95, %s96
    %p108 = scmp.eq.s32.totalorder %s23, 1
    %p109 = por %p107, %p108
    %p111 = scmp.ne.s32.totalorder %s96, %s110
    %p112 = scmp.eq.s32.totalorder %s23, 0
    %p113 = por %p111, %p112
    %s115 = sadd.s32 %s114, 1
    %p118 = scmp.eq.s32.totalorder %s17, 1
    %p119 = scmp.ne.s32.totalorder %s114, %s116
    %p120 = scmp.eq.s32.totalorder %s17, 0
    %p121 = por %p119, %p120
    %p122 = scmp.ne.s32.totalorder %s114, %s116
    %p123 = scmp.eq.s32.totalorder %s22, 1
    %p124 = por %p122, %p123
    %p125 = scmp.ne.s32.totalorder %s116, %s117
    %p126 = scmp.eq.s32.totalorder %s22, 0
    %p127 = por %p125, %p126
    %p128 = scmp.ne.s32.totalorder %s116, %s117
    %p129 = scmp.eq.s32.totalorder %s23, 1
    %p130 = por %p128, %p129
    %p132 = scmp.ne.s32.totalorder %s117, %s131
    %p133 = scmp.eq.s32.totalorder %s23, 0
    %p134 = por %p132, %p133
    %s136 = sadd.s32 %s135, 1
    %p139 = scmp.eq.s32.totalorder %s17, 1
    %p140 = scmp.ne.s32.totalorder %s135, %s137
    %p141 = scmp.eq.s32.totalorder %s17, 0
    %p142 = por %p140, %p141
    %p143 = scmp.ne.s32.totalorder %s135, %s137
    %p144 = scmp.eq.s32.totalorder %s22, 1
    %p145 = por %p143, %p144
    %p146 = scmp.ne.s32.totalorder %s137, %s138
    %p147 = scmp.eq.s32.totalorder %s22, 0
    %p148 = por %p146, %p147
    %p149 = scmp.ne.s32.totalorder %s137, %s138
    %p150 = scmp.eq.s32.totalorder %s23, 1
    %p151 = por %p149, %p150
    %p153 = scmp.ne.s32.totalorder %s138, %s152
    %p154 = scmp.eq.s32.totalorder %s23, 0
    %p155 = por %p153, %p154
    %s157 = sadd.s32 %s156, 1
    %p160 = scmp.eq.s32.totalorder %s17, 1
    %p161 = scmp.ne.s32.totalorder %s156, %s158
    %p162 = scmp.eq.s32.totalorder %s17, 0
    %p163 = por %p161, %p162
    %p164 = scmp.ne.s32.totalorder %s156, %s158
    %p165 = scmp.eq.s32.totalorder %s22, 1
    %p166 = por %p164, %p165
    %p167 = scmp.ne.s32.totalorder %s158, %s159
    %p168 = scmp.eq.s32.totalorder %s22, 0
    %p169 = por %p167, %p168
    %p170 = scmp.ne.s32.totalorder %s158, %s159
    %p171 = scmp.eq.s32.totalorder %s23, 1
    %p172 = por %p170, %p171
    %p174 = scmp.ne.s32.totalorder %s159, %s173
    %p175 = scmp.eq.s32.totalorder %s23, 0
    %p176 = por %p174, %p175
    %s178 = sadd.s32 %s177, 1
    %p181 = scmp.eq.s32.totalorder %s17, 1
    %p182 = scmp.ne.s32.totalorder %s177, %s179
    %p183 = scmp.eq.s32.totalorder %s17, 0
    %p184 = por %p182, %p183
    %p185 = scmp.ne.s32.totalorder %s177, %s179
    %p186 = scmp.eq.s32.totalorder %s22, 1
    %p187 = por %p185, %p186
    %p188 = scmp.ne.s32.totalorder %s179, %s180
    %p189 = scmp.eq.s32.totalorder %s22, 0
    %p190 = por %p188, %p189
    %p191 = scmp.ne.s32.totalorder %s179, %s180
    %p192 = scmp.eq.s32.totalorder %s23, 1
    %p193 = por %p191, %p192
    %p195 = scmp.ne.s32.totalorder %s180, %s194
    %p196 = scmp.eq.s32.totalorder %s23, 0
    %p197 = por %p195, %p196
    %s199 = sadd.s32 %s198, 1
    %p202 = scmp.eq.s32.totalorder %s17, 1
    %p203 = scmp.ne.s32.totalorder %s198, %s200
    %p204 = scmp.eq.s32.totalorder %s17, 0
    %p205 = por %p203, %p204
    %p206 = scmp.ne.s32.totalorder %s198, %s200
    %p207 = scmp.eq.s32.totalorder %s22, 1
    %p208 = por %p206, %p207
    %p209 = scmp.ne.s32.totalorder %s200, %s201
    %p210 = scmp.eq.s32.totalorder %s22, 0
    %p211 = por %p209, %p210
    %p212 = scmp.ne.s32.totalorder %s200, %s201
    %p213 = scmp.eq.s32.totalorder %s23, 1
    %p214 = por %p212, %p213
    %p216 = scmp.ne.s32.totalorder %s201, %s215
    %p217 = scmp.eq.s32.totalorder %s23, 0
    %p218 = por %p216, %p217
    %s220 = sadd.s32 %s219, 1
    %p223 = scmp.eq.s32.totalorder %s17, 1
    %p224 = scmp.ne.s32.totalorder %s219, %s221
    %p225 = scmp.eq.s32.totalorder %s17, 0
    %p226 = por %p224, %p225
    %p227 = scmp.ne.s32.totalorder %s219, %s221
    %p228 = scmp.eq.s32.totalorder %s22, 1
    %p229 = por %p227, %p228
    %p230 = scmp.ne.s32.totalorder %s221, %s222
    %p231 = scmp.eq.s32.totalorder %s22, 0
    %p232 = por %p230, %p231
    %p233 = scmp.ne.s32.totalorder %s221, %s222
    %p234 = scmp.eq.s32.totalorder %s23, 1
    %p235 = por %p233, %p234
    %p237 = scmp.ne.s32.totalorder %s222, %s236
    %p238 = scmp.eq.s32.totalorder %s23, 0
    %p239 = por %p237, %p238
    %s241 = sadd.s32 %s240, 1
    %p244 = scmp.eq.s32.totalorder %s17, 1
    %p245 = scmp.ne.s32.totalorder %s240, %s242
    %p246 = scmp.eq.s32.totalorder %s17, 0
    %p247 = por %p245, %p246
    %p248 = scmp.ne.s32.totalorder %s240, %s242
    %p249 = scmp.eq.s32.totalorder %s22, 1
    %p250 = por %p248, %p249
    %p251 = scmp.ne.s32.totalorder %s242, %s243
    %p252 = scmp.eq.s32.totalorder %s22, 0
    %p253 = por %p251, %p252
    %p254 = scmp.ne.s32.totalorder %s242, %s243
    %p255 = scmp.eq.s32.totalorder %s23, 1
    %p256 = por %p254, %p255
    %p258 = scmp.ne.s32.totalorder %s243, %s257
    %p259 = scmp.eq.s32.totalorder %s23, 0
    %p260 = por %p258, %p259
    %s261 = ssub.s32 %s17, %s24
    %p262 = scmp.eq.s32.totalorder %s261, 0
    %s264 = sadd.s32 %s263, 1
    %s265 = scalar_select %p262, %s263, %s264
    %p268 = pneg %p262
    %p269 = scmp.eq.s32.totalorder %s17, 1
    %p270 = por %p268, %p269
    %p271 = scmp.ne.s32.totalorder %s263, %s266
    %p272 = scmp.eq.s32.totalorder %s17, 0
    %p273 = por %p271, %p272
    %p274 = scmp.ne.s32.totalorder %s263, %s266
    %p275 = scmp.eq.s32.totalorder %s22, 1
    %p276 = por %p274, %p275
    %p277 = scmp.ne.s32.totalorder %s266, %s267
    %p278 = scmp.eq.s32.totalorder %s22, 0
    %p279 = por %p277, %p278
    %p280 = scmp.ne.s32.totalorder %s266, %s267
    %p281 = scmp.eq.s32.totalorder %s23, 1
    %p282 = por %p280, %p281
    %p284 = scmp.ne.s32.totalorder %s267, %s283
    %p285 = scmp.eq.s32.totalorder %s23, 0
    %p286 = por %p284, %p285
    %p287 = scmp.le.s32.totalorder 1, %s17
    %p288 = scmp.lt.s32.totalorder %s17, 3
    %p289 = pnand %p287, %p288
    %p290 = pneg %p289
    // Predicated region
    $region9: #{tpu_custom_call.1} parent=5 // pred_check
      _
    $region10: #{tpu_custom_call.1} parent=5 // pred_check_branch
      %292 = sbr.rel (%p289) target = $region12
    $region11: #{tpu_custom_call.1} parent=5 // pred_region
      %s293 = ssub.s32 %s17, 1
      // Predicated region
      $region13: #{tpu_custom_call.1} parent=11 // pred_check
        %p294 = pneg %p64
      $region14: #{tpu_custom_call.1} parent=11 // pred_check_branch
        %296 = sbr.rel (%p294) target = $region16
      $region15: #{tpu_custom_call.1} parent=11 // pred_region
        _
      $region16: #{tpu_custom_call.1} parent=11 // pred_fallthru
        _
      // Predicated region
      $region17: #{tpu_custom_call.1} parent=11 // pred_check
        %p297 = pneg %p85
      $region18: #{tpu_custom_call.1} parent=11 // pred_check_branch
        %299 = sbr.rel (%p297) target = $region20
      $region19: #{tpu_custom_call.1} parent=11 // pred_region
        _
      $region20: #{tpu_custom_call.1} parent=11 // pred_fallthru
        _
      // Predicated region
      $region21: #{tpu_custom_call.1} parent=11 // pred_check
        %p300 = pneg %p106
      $region22: #{tpu_custom_call.1} parent=11 // pred_check_branch
        %302 = sbr.rel (%p300) target = $region24
      $region23: #{tpu_custom_call.1} parent=11 // pred_region
        _
      $region24: #{tpu_custom_call.1} parent=11 // pred_fallthru
        _
      // Predicated region
      $region25: #{tpu_custom_call.1} parent=11 // pred_check
        %p303 = pneg %p127
      $region26: #{tpu_custom_call.1} parent=11 // pred_check_branch
        %305 = sbr.rel (%p303) target = $region28
      $region27: #{tpu_custom_call.1} parent=11 // pred_region
        _
      $region28: #{tpu_custom_call.1} parent=11 // pred_fallthru
        _
      // Predicated region
      $region29: #{tpu_custom_call.1} parent=11 // pred_check
        %p306 = pneg %p148
      $region30: #{tpu_custom_call.1} parent=11 // pred_check_branch
        %308 = sbr.rel (%p306) target = $region32
      $region31: #{tpu_custom_call.1} parent=11 // pred_region
        _
      $region32: #{tpu_custom_call.1} parent=11 // pred_fallthru
        _
      // Predicated region
      $region33: #{tpu_custom_call.1} parent=11 // pred_check
        %p309 = pneg %p169
      $region34: #{tpu_custom_call.1} parent=11 // pred_check_branch
        %311 = sbr.rel (%p309) target = $region36
      $region35: #{tpu_custom_call.1} parent=11 // pred_region
        _
      $region36: #{tpu_custom_call.1} parent=11 // pred_fallthru
        _
      // Predicated region
      $region37: #{tpu_custom_call.1} parent=11 // pred_check
        %p312 = pneg %p190
      $region38: #{tpu_custom_call.1} parent=11 // pred_check_branch
        %314 = sbr.rel (%p312) target = $region40
      $region39: #{tpu_custom_call.1} parent=11 // pred_region
        _
      $region40: #{tpu_custom_call.1} parent=11 // pred_fallthru
        _
      // Predicated region
      $region41: #{tpu_custom_call.1} parent=11 // pred_check
        %p315 = pneg %p211
      $region42: #{tpu_custom_call.1} parent=11 // pred_check_branch
        %317 = sbr.rel (%p315) target = $region44
      $region43: #{tpu_custom_call.1} parent=11 // pred_region
        _
      $region44: #{tpu_custom_call.1} parent=11 // pred_fallthru
        _
      // Predicated region
      $region45: #{tpu_custom_call.1} parent=11 // pred_check
        %p318 = pneg %p232
      $region46: #{tpu_custom_call.1} parent=11 // pred_check_branch
        %320 = sbr.rel (%p318) target = $region48
      $region47: #{tpu_custom_call.1} parent=11 // pred_region
        _
      $region48: #{tpu_custom_call.1} parent=11 // pred_fallthru
        _
      // Predicated region
      $region49: #{tpu_custom_call.1} parent=11 // pred_check
        %p321 = pneg %p253
      $region50: #{tpu_custom_call.1} parent=11 // pred_check_branch
        %323 = sbr.rel (%p321) target = $region52
      $region51: #{tpu_custom_call.1} parent=11 // pred_region
        _
      $region52: #{tpu_custom_call.1} parent=11 // pred_fallthru
        _
    $region12: #{tpu_custom_call.1} parent=5 // pred_fallthru
      _
    %p324 = scmp.lt.s32.totalorder %s17, 2
    // Predicated region
    $region53: #{tpu_custom_call.1} parent=5 // pred_check
      %p325 = pneg %p324
    $region54: #{tpu_custom_call.1} parent=5 // pred_check_branch
      %327 = sbr.rel (%p325) target = $region56
    $region55: #{tpu_custom_call.1} parent=5 // pred_region
      // Predicated region
      $region57: #{tpu_custom_call.1} parent=55 // pred_check
        %p328 = pneg %p37
      $region58: #{tpu_custom_call.1} parent=55 // pred_check_branch
        %330 = sbr.rel (%p328) target = $region60
      $region59: #{tpu_custom_call.1} parent=55 // pred_region
        %p331 = scmp.lt.s32.totalorder %s17, 1
        %s332 = scalar_select %p331, %s17, 1
        %s333 = smul.addr %s332, 32
        %s334 = smul.addr %s333, 8
        %s335 = scalar_lea.vmem %s0, %s334
      $region60: #{tpu_custom_call.1} parent=55 // pred_fallthru
        _
    $region56: #{tpu_custom_call.1} parent=5 // pred_fallthru
      _
    %p336 = scmp.le.s32.totalorder 1, %s17
    %p337 = scmp.lt.s32.totalorder %s17, 3
    %p338 = pnand %p336, %p337
    %p339 = pneg %p338
    // Predicated region
    $region61: #{tpu_custom_call.1} parent=5 // pred_check
      _
    $region62: #{tpu_custom_call.1} parent=5 // pred_check_branch
      %341 = sbr.rel (%p338) target = $region64
    $region63: #{tpu_custom_call.1} parent=5 // pred_region
      %s342 = ssub.s32 %s17, 1
      %p343 = scmp.lt.s32.totalorder %s22, 1
      %s344 = scalar_select %p343, %s22, 1
      %s345 = smul.addr %s344, 32
      %s346 = smul.addr %s345, 8
      %s347 = scalar_lea.vmem %s0, %s346
      %p348 = pneg %p43
      %p349 = pneg %p40
      %p350 = pneg %p64
      %p351 = pneg %p61
      %p352 = pneg %p85
      %p353 = pneg %p82
      %p354 = pneg %p106
      %p355 = pneg %p103
      %p356 = pneg %p127
      %p357 = pneg %p124
      %p358 = pneg %p148
      %p359 = pneg %p145
      %p360 = pneg %p169
      %p361 = pneg %p166
      %p362 = pneg %p190
      %p363 = pneg %p187
      %p364 = pneg %p211
      %p365 = pneg %p208
      %p366 = pneg %p232
      %p367 = pneg %p229
      %p368 = pneg %p253
      %p369 = pneg %p250
      %p370 = pneg %p279
      %p371 = pneg %p276
      %p372 = scmp.lt.s32.totalorder %s22, 1
      %s373 = scalar_select %p372, %s22, 1
      %s374 = smul.addr %s373, 8
      %s375 = smul.addr %s374, 8
      %s376 = scalar_lea.vmem %s11, %s375
      %p377 = scmp.lt.s32.totalorder %s22, 1
      %s378 = scalar_select %p377, %s22, 1
      %s379 = smul.addr %s378, 32
      %s380 = smul.addr %s379, 8
      %s381 = scalar_lea.vmem %s0, %s380
      %p382 = scmp.lt.s32.totalorder %s22, 1
      %s383 = scalar_select %p382, %s22, 1
      %s384 = smul.addr %s383, 8
      %s385 = smul.addr %s384, 8
      %s386 = scalar_lea.vmem %s11, %s385
      %vm388 = vcmask 31744
      %389 = vst.msk [vmem:[#allocation2] sm:$0xff] %vm388, 0.0
      %390 = vst.msk [vmem:[#allocation2 + $0x8] sm:$0xff] %vm388, 0.0
      %vm391 = vcmask 25600
      %392 = vst.msk [vmem:[#allocation2 + $0x10] sm:$0x3] %vm391, 0.0
      %s393 = scalar_lea.vmem [#allocation2], 408
      %394 = vst.msk [vmem:[%s393] sm:$0xff] %vm388, 0.0
      %395 = vst.msk [vmem:[%s393 + $0x8] sm:$0xff] %vm388, 0.0
      %396 = vst.msk [vmem:[%s393 + $0x10] sm:$0x3] %vm391, 0.0
      %vm397 = vcmask 24576
      %398 = vst.msk [vmem:[#allocation2] sm:$0x1] %vm397, 0.0
      %399 = vst.msk [vmem:[#allocation2 + $0x18] sm:$0x1] %vm397, 0.0
      %400 = vst.msk [vmem:[#allocation2 + $0x30] sm:$0x1] %vm397, 0.0
      %401 = vst.msk [vmem:[#allocation2 + $0x48] sm:$0x1] %vm397, 0.0
      %402 = vst.msk [vmem:[#allocation2 + $0x60] sm:$0x1] %vm397, 0.0
      %403 = vst.msk [vmem:[#allocation2 + $0x78] sm:$0x1] %vm397, 0.0
      %404 = vst.msk [vmem:[#allocation2 + $0x90] sm:$0x1] %vm397, 0.0
      %405 = vst.msk [vmem:[#allocation2 + $0xa8] sm:$0x1] %vm397, 0.0
      %406 = vst.msk [vmem:[#allocation2 + $0xc0] sm:$0x1] %vm397, 0.0
      %407 = vst.msk [vmem:[#allocation2 + $0xd8] sm:$0x1] %vm397, 0.0
      %408 = vst.msk [vmem:[#allocation2 + $0xf0] sm:$0x1] %vm397, 0.0
      %409 = vst.msk [vmem:[#allocation2 + $0x108] sm:$0x1] %vm397, 0.0
      %410 = vst.msk [vmem:[#allocation2 + $0x120] sm:$0x1] %vm397, 0.0
      %411 = vst.msk [vmem:[#allocation2 + $0x138] sm:$0x1] %vm397, 0.0
      %412 = vst.msk [vmem:[#allocation2 + $0x150] sm:$0x1] %vm397, 0.0
      %413 = vst.msk [vmem:[#allocation2 + $0x168] sm:$0x1] %vm397, 0.0
      %414 = vst.msk [vmem:[#allocation2 + $0x180] sm:$0x1] %vm397, 0.0
      %415 = vst.msk [vmem:[#allocation2 + $0x198] sm:$0x1] %vm397, 0.0
      %416 = vst.msk [vmem:[#allocation2 + $0x11] sm:$0x1] %vm397, 0.0
      %417 = vst.msk [vmem:[#allocation2 + $0x29] sm:$0x1] %vm397, 0.0
      %418 = vst.msk [vmem:[#allocation2 + $0x41] sm:$0x1] %vm397, 0.0
      %419 = vst.msk [vmem:[#allocation2 + $0x59] sm:$0x1] %vm397, 0.0
      %420 = vst.msk [vmem:[#allocation2 + $0x71] sm:$0x1] %vm397, 0.0
      %421 = vst.msk [vmem:[#allocation2 + $0x89] sm:$0x1] %vm397, 0.0
      %422 = vst.msk [vmem:[#allocation2 + $0xa1] sm:$0x1] %vm397, 0.0
      %423 = vst.msk [vmem:[#allocation2 + $0xb9] sm:$0x1] %vm397, 0.0
      %424 = vst.msk [vmem:[#allocation2 + $0xd1] sm:$0x1] %vm397, 0.0
      %425 = vst.msk [vmem:[#allocation2 + $0xe9] sm:$0x1] %vm397, 0.0
      %426 = vst.msk [vmem:[#allocation2 + $0x101] sm:$0x1] %vm397, 0.0
      %427 = vst.msk [vmem:[#allocation2 + $0x119] sm:$0x1] %vm397, 0.0
      %428 = vst.msk [vmem:[#allocation2 + $0x131] sm:$0x1] %vm397, 0.0
      %429 = vst.msk [vmem:[#allocation2 + $0x149] sm:$0x1] %vm397, 0.0
      %430 = vst.msk [vmem:[#allocation2 + $0x161] sm:$0x1] %vm397, 0.0
      %431 = vst.msk [vmem:[#allocation2 + $0x179] sm:$0x1] %vm397, 0.0
      %432 = vst.msk [vmem:[#allocation2 + $0x191] sm:$0x1] %vm397, 0.0
      %433 = vst.msk [vmem:[#allocation2 + $0x1a9] sm:$0x1] %vm397, 0.0
      %vm434 = vcmask 64512
      %435 = vst.msk [vmem:[#allocation3] sm:$0xff] %vm434, 0.0
      %436 = vst.msk [vmem:[#allocation3 + $0x8] sm:$0xff] %vm434, 0.0
      %vm437 = vcmask 58368
      %438 = vst.msk [vmem:[#allocation3 + $0x10] sm:$0x3] %vm437, 0.0
      %s439 = scalar_lea.vmem [#allocation3], 408
      %440 = vst.msk [vmem:[%s439] sm:$0xff] %vm434, 0.0
      %441 = vst.msk [vmem:[%s439 + $0x8] sm:$0xff] %vm434, 0.0
      %442 = vst.msk [vmem:[%s439 + $0x10] sm:$0x3] %vm437, 0.0
      %vm443 = vcmask 57344
      %444 = vst.msk [vmem:[#allocation3] sm:$0x1] %vm443, 0.0
      %445 = vst.msk [vmem:[#allocation3 + $0x18] sm:$0x1] %vm443, 0.0
      %446 = vst.msk [vmem:[#allocation3 + $0x30] sm:$0x1] %vm443, 0.0
      %447 = vst.msk [vmem:[#allocation3 + $0x48] sm:$0x1] %vm443, 0.0
      %448 = vst.msk [vmem:[#allocation3 + $0x60] sm:$0x1] %vm443, 0.0
      %449 = vst.msk [vmem:[#allocation3 + $0x78] sm:$0x1] %vm443, 0.0
      %450 = vst.msk [vmem:[#allocation3 + $0x90] sm:$0x1] %vm443, 0.0
      %451 = vst.msk [vmem:[#allocation3 + $0xa8] sm:$0x1] %vm443, 0.0
      %452 = vst.msk [vmem:[#allocation3 + $0xc0] sm:$0x1] %vm443, 0.0
      %453 = vst.msk [vmem:[#allocation3 + $0xd8] sm:$0x1] %vm443, 0.0
      %454 = vst.msk [vmem:[#allocation3 + $0xf0] sm:$0x1] %vm443, 0.0
      %455 = vst.msk [vmem:[#allocation3 + $0x108] sm:$0x1] %vm443, 0.0
      %456 = vst.msk [vmem:[#allocation3 + $0x120] sm:$0x1] %vm443, 0.0
      %457 = vst.msk [vmem:[#allocation3 + $0x138] sm:$0x1] %vm443, 0.0
      %458 = vst.msk [vmem:[#allocation3 + $0x150] sm:$0x1] %vm443, 0.0
      %459 = vst.msk [vmem:[#allocation3 + $0x168] sm:$0x1] %vm443, 0.0
      %460 = vst.msk [vmem:[#allocation3 + $0x180] sm:$0x1] %vm443, 0.0
      %461 = vst.msk [vmem:[#allocation3 + $0x198] sm:$0x1] %vm443, 0.0
      %462 = vst.msk [vmem:[#allocation3 + $0x11] sm:$0x1] %vm443, 0.0
      %463 = vst.msk [vmem:[#allocation3 + $0x29] sm:$0x1] %vm443, 0.0
      %464 = vst.msk [vmem:[#allocation3 + $0x41] sm:$0x1] %vm443, 0.0
      %465 = vst.msk [vmem:[#allocation3 + $0x59] sm:$0x1] %vm443, 0.0
      %466 = vst.msk [vmem:[#allocation3 + $0x71] sm:$0x1] %vm443, 0.0
      %467 = vst.msk [vmem:[#allocation3 + $0x89] sm:$0x1] %vm443, 0.0
      %468 = vst.msk [vmem:[#allocation3 + $0xa1] sm:$0x1] %vm443, 0.0
      %469 = vst.msk [vmem:[#allocation3 + $0xb9] sm:$0x1] %vm443, 0.0
      %470 = vst.msk [vmem:[#allocation3 + $0xd1] sm:$0x1] %vm443, 0.0
      %471 = vst.msk [vmem:[#allocation3 + $0xe9] sm:$0x1] %vm443, 0.0
      %472 = vst.msk [vmem:[#allocation3 + $0x101] sm:$0x1] %vm443, 0.0
      %473 = vst.msk [vmem:[#allocation3 + $0x119] sm:$0x1] %vm443, 0.0
      %474 = vst.msk [vmem:[#allocation3 + $0x131] sm:$0x1] %vm443, 0.0
      %475 = vst.msk [vmem:[#allocation3 + $0x149] sm:$0x1] %vm443, 0.0
      %476 = vst.msk [vmem:[#allocation3 + $0x161] sm:$0x1] %vm443, 0.0
      %477 = vst.msk [vmem:[#allocation3 + $0x179] sm:$0x1] %vm443, 0.0
      %478 = vst.msk [vmem:[#allocation3 + $0x191] sm:$0x1] %vm443, 0.0
      %479 = vst.msk [vmem:[#allocation3 + $0x1a9] sm:$0x1] %vm443, 0.0
      %v480 = vld [vmem:[%s381] sm:$0xff]
      %v481 = vld [vmem:[%s381 + $0x8] sm:$0xff]
      %v482 = vld [vmem:[%s381 + $0x10] sm:$0xff]
      %v483 = vld [vmem:[%s381 + $0x18] sm:$0xff]
      %v484 = vld [vmem:[%s381 + $0x20] sm:$0xff]
      %v485 = vld [vmem:[%s381 + $0x28] sm:$0xff]
      %v486 = vld [vmem:[%s381 + $0x30] sm:$0xff]
      %v487 = vld [vmem:[%s381 + $0x38] sm:$0xff]
      %v488 = vld [vmem:[%s381 + $0x40] sm:$0xff]
      %v489 = vld [vmem:[%s381 + $0x48] sm:$0xff]
      %v490 = vld [vmem:[%s381 + $0x50] sm:$0xff]
      %v491 = vld [vmem:[%s381 + $0x58] sm:$0xff]
      %v492 = vld [vmem:[%s381 + $0x60] sm:$0xff]
      %v493 = vld [vmem:[%s381 + $0x68] sm:$0xff]
      %v494 = vld [vmem:[%s381 + $0x70] sm:$0xff]
      %v495 = vld [vmem:[%s381 + $0x78] sm:$0xff]
      %v496 = vld [vmem:[%s381 + $0x80] sm:$0xff]
      %v497 = vld [vmem:[%s381 + $0x88] sm:$0xff]
      %v498 = vld [vmem:[%s381 + $0x90] sm:$0xff]
      %v499 = vld [vmem:[%s381 + $0x98] sm:$0xff]
      %v500 = vld [vmem:[%s381 + $0xa0] sm:$0xff]
      %v501 = vld [vmem:[%s381 + $0xa8] sm:$0xff]
      %v502 = vld [vmem:[%s381 + $0xb0] sm:$0xff]
      %v503 = vld [vmem:[%s381 + $0xb8] sm:$0xff]
      %v504 = vld [vmem:[%s381 + $0xc0] sm:$0xff]
      %v505 = vld [vmem:[%s381 + $0xc8] sm:$0xff]
      %v506 = vld [vmem:[%s381 + $0xd0] sm:$0xff]
      %v507 = vld [vmem:[%s381 + $0xd8] sm:$0xff]
      %v508 = vld [vmem:[%s381 + $0xe0] sm:$0xff]
      %v509 = vld [vmem:[%s381 + $0xe8] sm:$0xff]
      %v510 = vld [vmem:[%s381 + $0xf0] sm:$0xff]
      %v511 = vld [vmem:[%s381 + $0xf8] sm:$0xff]
      %v512 = vld [vmem:[%s1] sm:$0x1]
      %v514 = vperm.slane %v512, 0
      %v516 = vmul.f32 %v480, %v514
      %v517 = vmul.f32 %v481, %v514
      %v518 = vmul.f32 %v482, %v514
      %v519 = vmul.f32 %v483, %v514
      %v520 = vmul.f32 %v484, %v514
      %v521 = vmul.f32 %v485, %v514
      %v522 = vmul.f32 %v486, %v514
      %v523 = vmul.f32 %v487, %v514
      %v524 = vmul.f32 %v488, %v514
      %v525 = vmul.f32 %v489, %v514
      %v526 = vmul.f32 %v490, %v514
      %v527 = vmul.f32 %v491, %v514
      %v528 = vmul.f32 %v492, %v514
      %v529 = vmul.f32 %v493, %v514
      %v530 = vmul.f32 %v494, %v514
      %v531 = vmul.f32 %v495, %v514
      %v532 = vmul.f32 %v496, %v514
      %v533 = vmul.f32 %v497, %v514
      %v534 = vmul.f32 %v498, %v514
      %v535 = vmul.f32 %v499, %v514
      %v536 = vmul.f32 %v500, %v514
      %v537 = vmul.f32 %v501, %v514
      %v538 = vmul.f32 %v502, %v514
      %v539 = vmul.f32 %v503, %v514
      %v540 = vmul.f32 %v504, %v514
      %v541 = vmul.f32 %v505, %v514
      %v542 = vmul.f32 %v506, %v514
      %v543 = vmul.f32 %v507, %v514
      %v544 = vmul.f32 %v508, %v514
      %v545 = vmul.f32 %v509, %v514
      %v546 = vmul.f32 %v510, %v514
      %v547 = vmul.f32 %v511, %v514
      %v548 = vld [vmem:[%s2] sm:$0x1]
      %v550 = vperm.slane %v548, 0
      %v552 = vadd.f32 %v516, %v550
      %v553 = vadd.f32 %v517, %v550
      %v554 = vadd.f32 %v518, %v550
      %v555 = vadd.f32 %v519, %v550
      %v556 = vadd.f32 %v520, %v550
      %v557 = vadd.f32 %v521, %v550
      %v558 = vadd.f32 %v522, %v550
      %v559 = vadd.f32 %v523, %v550
      %v560 = vadd.f32 %v524, %v550
      %v561 = vadd.f32 %v525, %v550
      %v562 = vadd.f32 %v526, %v550
      %v563 = vadd.f32 %v527, %v550
      %v564 = vadd.f32 %v528, %v550
      %v565 = vadd.f32 %v529, %v550
      %v566 = vadd.f32 %v530, %v550
      %v567 = vadd.f32 %v531, %v550
      %v568 = vadd.f32 %v532, %v550
      %v569 = vadd.f32 %v533, %v550
      %v570 = vadd.f32 %v534, %v550
      %v571 = vadd.f32 %v535, %v550
      %v572 = vadd.f32 %v536, %v550
      %v573 = vadd.f32 %v537, %v550
      %v574 = vadd.f32 %v538, %v550
      %v575 = vadd.f32 %v539, %v550
      %v576 = vadd.f32 %v540, %v550
      %v577 = vadd.f32 %v541, %v550
      %v578 = vadd.f32 %v542, %v550
      %v579 = vadd.f32 %v543, %v550
      %v580 = vadd.f32 %v544, %v550
      %v581 = vadd.f32 %v545, %v550
      %v582 = vadd.f32 %v546, %v550
      %v583 = vadd.f32 %v547, %v550
      %v584 = vmax.f32 %v552, 0.0
      %v585 = vmax.f32 %v553, 0.0
      %v586 = vmax.f32 %v554, 0.0
      %v587 = vmax.f32 %v555, 0.0
      %v588 = vmax.f32 %v556, 0.0
      %v589 = vmax.f32 %v557, 0.0
      %v590 = vmax.f32 %v558, 0.0
      %v591 = vmax.f32 %v559, 0.0
      %v592 = vmax.f32 %v560, 0.0
      %v593 = vmax.f32 %v561, 0.0
      %v594 = vmax.f32 %v562, 0.0
      %v595 = vmax.f32 %v563, 0.0
      %v596 = vmax.f32 %v564, 0.0
      %v597 = vmax.f32 %v565, 0.0
      %v598 = vmax.f32 %v566, 0.0
      %v599 = vmax.f32 %v567, 0.0
      %v600 = vmax.f32 %v568, 0.0
      %v601 = vmax.f32 %v569, 0.0
      %v602 = vmax.f32 %v570, 0.0
      %v603 = vmax.f32 %v571, 0.0
      %v604 = vmax.f32 %v572, 0.0
      %v605 = vmax.f32 %v573, 0.0
      %v606 = vmax.f32 %v574, 0.0
      %v607 = vmax.f32 %v575, 0.0
      %v608 = vmax.f32 %v576, 0.0
      %v609 = vmax.f32 %v577, 0.0
      %v610 = vmax.f32 %v578, 0.0
      %v611 = vmax.f32 %v579, 0.0
      %v612 = vmax.f32 %v580, 0.0
      %v613 = vmax.f32 %v581, 0.0
      %v614 = vmax.f32 %v582, 0.0
      %v615 = vmax.f32 %v583, 0.0
      %s616 = scalar_lea.vmem [#allocation2], 24
      %617 = vst.msk [vmem:[%s616 + $0x1] sm:$0xff] %vm388, %v584
      %618 = vst.msk [vmem:[%s616 + $0x9] sm:$0xff] %vm388, %v585
      %619 = vst.msk [vmem:[%s616 + $0x19] sm:$0xff] %vm388, %v586
      %620 = vst.msk [vmem:[%s616 + $0x21] sm:$0xff] %vm388, %v587
      %621 = vst.msk [vmem:[%s616 + $0x31] sm:$0xff] %vm388, %v588
      %622 = vst.msk [vmem:[%s616 + $0x39] sm:$0xff] %vm388, %v589
      %623 = vst.msk [vmem:[%s616 + $0x49] sm:$0xff] %vm388, %v590
      %624 = vst.msk [vmem:[%s616 + $0x51] sm:$0xff] %vm388, %v591
      %625 = vst.msk [vmem:[%s616 + $0x61] sm:$0xff] %vm388, %v592
      %626 = vst.msk [vmem:[%s616 + $0x69] sm:$0xff] %vm388, %v593
      %627 = vst.msk [vmem:[%s616 + $0x79] sm:$0xff] %vm388, %v594
      %628 = vst.msk [vmem:[%s616 + $0x81] sm:$0xff] %vm388, %v595
      %629 = vst.msk [vmem:[%s616 + $0x91] sm:$0xff] %vm388, %v596
      %630 = vst.msk [vmem:[%s616 + $0x99] sm:$0xff] %vm388, %v597
      %631 = vst.msk [vmem:[%s616 + $0xa9] sm:$0xff] %vm388, %v598
      %632 = vst.msk [vmem:[%s616 + $0xb1] sm:$0xff] %vm388, %v599
      %633 = vst.msk [vmem:[%s616 + $0xc1] sm:$0xff] %vm388, %v600
      %634 = vst.msk [vmem:[%s616 + $0xc9] sm:$0xff] %vm388, %v601
      %635 = vst.msk [vmem:[%s616 + $0xd9] sm:$0xff] %vm388, %v602
      %636 = vst.msk [vmem:[%s616 + $0xe1] sm:$0xff] %vm388, %v603
      %637 = vst.msk [vmem:[%s616 + $0xf1] sm:$0xff] %vm388, %v604
      %638 = vst.msk [vmem:[%s616 + $0xf9] sm:$0xff] %vm388, %v605
      %639 = vst.msk [vmem:[%s616 + $0x109] sm:$0xff] %vm388, %v606
      %640 = vst.msk [vmem:[%s616 + $0x111] sm:$0xff] %vm388, %v607
      %641 = vst.msk [vmem:[%s616 + $0x121] sm:$0xff] %vm388, %v608
      %642 = vst.msk [vmem:[%s616 + $0x129] sm:$0xff] %vm388, %v609
      %643 = vst.msk [vmem:[%s616 + $0x139] sm:$0xff] %vm388, %v610
      %644 = vst.msk [vmem:[%s616 + $0x141] sm:$0xff] %vm388, %v611
      %645 = vst.msk [vmem:[%s616 + $0x151] sm:$0xff] %vm388, %v612
      %646 = vst.msk [vmem:[%s616 + $0x159] sm:$0xff] %vm388, %v613
      %647 = vst.msk [vmem:[%s616 + $0x169] sm:$0xff] %vm388, %v614
      %648 = vst.msk [vmem:[%s616 + $0x171] sm:$0xff] %vm388, %v615
      %v649 = vld [vmem:[#allocation2] sm:$0xff]
      %v650 = vld [vmem:[#allocation2 + $0x8] sm:$0xff]
      %v651 = vld [vmem:[#allocation2 + $0x18] sm:$0xff]
      %v652 = vld [vmem:[#allocation2 + $0x20] sm:$0xff]
      %v653 = vld [vmem:[#allocation2 + $0x30] sm:$0xff]
      %v654 = vld [vmem:[#allocation2 + $0x38] sm:$0xff]
      %v655 = vld [vmem:[#allocation2 + $0x48] sm:$0xff]
      %v656 = vld [vmem:[#allocation2 + $0x50] sm:$0xff]
      %v657 = vld [vmem:[#allocation2 + $0x60] sm:$0xff]
      %v658 = vld [vmem:[#allocation2 + $0x68] sm:$0xff]
      %v659 = vld [vmem:[#allocation2 + $0x78] sm:$0xff]
      %v660 = vld [vmem:[#allocation2 + $0x80] sm:$0xff]
      %v661 = vld [vmem:[#allocation2 + $0x90] sm:$0xff]
      %v662 = vld [vmem:[#allocation2 + $0x98] sm:$0xff]
      %v663 = vld [vmem:[#allocation2 + $0xa8] sm:$0xff]
      %v664 = vld [vmem:[#allocation2 + $0xb0] sm:$0xff]
      %v665 = vld [vmem:[#allocation2 + $0xc0] sm:$0xff]
      %v666 = vld [vmem:[#allocation2 + $0xc8] sm:$0xff]
      %v667 = vld [vmem:[#allocation2 + $0xd8] sm:$0xff]
      %v668 = vld [vmem:[#allocation2 + $0xe0] sm:$0xff]
      %v669 = vld [vmem:[#allocation2 + $0xf0] sm:$0xff]
      %v670 = vld [vmem:[#allocation2 + $0xf8] sm:$0xff]
      %v671 = vld [vmem:[#allocation2 + $0x108] sm:$0xff]
      %v672 = vld [vmem:[#allocation2 + $0x110] sm:$0xff]
      %v673 = vld [vmem:[#allocation2 + $0x120] sm:$0xff]
      %v674 = vld [vmem:[#allocation2 + $0x128] sm:$0xff]
      %v675 = vld [vmem:[#allocation2 + $0x138] sm:$0xff]
      %v676 = vld [vmem:[#allocation2 + $0x140] sm:$0xff]
      %v677 = vld [vmem:[#allocation2 + $0x150] sm:$0xff]
      %v678 = vld [vmem:[#allocation2 + $0x158] sm:$0xff]
      %v679 = vld [vmem:[#allocation2 + $0x168] sm:$0xff]
      %v680 = vld [vmem:[#allocation2 + $0x170] sm:$0xff]
      %v681 = vpack.c.bf16 %v650, %v649
      %v682 = vpack.c.bf16 %v652, %v651
      %v683 = vpack.c.bf16 %v654, %v653
      %v684 = vpack.c.bf16 %v656, %v655
      %v685 = vpack.c.bf16 %v658, %v657
      %v686 = vpack.c.bf16 %v660, %v659
      %v687 = vpack.c.bf16 %v662, %v661
      %v688 = vpack.c.bf16 %v664, %v663
      %v689 = vpack.c.bf16 %v666, %v665
      %v690 = vpack.c.bf16 %v668, %v667
      %v691 = vpack.c.bf16 %v670, %v669
      %v692 = vpack.c.bf16 %v672, %v671
      %v693 = vpack.c.bf16 %v674, %v673
      %v694 = vpack.c.bf16 %v676, %v675
      %v695 = vpack.c.bf16 %v678, %v677
      %v696 = vpack.c.bf16 %v680, %v679
      %v697 = vld [vmem:[%s3] sm:$0x3]
      %v698 = vld [vmem:[#allocation2 + $0x1] sm:$0xff]
      %v699 = vld [vmem:[#allocation2 + $0x9] sm:$0xff]
      %v700 = vld [vmem:[#allocation2 + $0x19] sm:$0xff]
      %v701 = vld [vmem:[#allocation2 + $0x21] sm:$0xff]
      %v702 = vld [vmem:[#allocation2 + $0x31] sm:$0xff]
      %v703 = vld [vmem:[#allocation2 + $0x39] sm:$0xff]
      %v704 = vld [vmem:[#allocation2 + $0x49] sm:$0xff]
      %v705 = vld [vmem:[#allocation2 + $0x51] sm:$0xff]
      %v706 = vld [vmem:[#allocation2 + $0x61] sm:$0xff]
      %v707 = vld [vmem:[#allocation2 + $0x69] sm:$0xff]
      %v708 = vld [vmem:[#allocation2 + $0x79] sm:$0xff]
      %v709 = vld [vmem:[#allocation2 + $0x81] sm:$0xff]
      %v710 = vld [vmem:[#allocation2 + $0x91] sm:$0xff]
      %v711 = vld [vmem:[#allocation2 + $0x99] sm:$0xff]
      %v712 = vld [vmem:[#allocation2 + $0xa9] sm:$0xff]
      %v713 = vld [vmem:[#allocation2 + $0xb1] sm:$0xff]
      %v714 = vld [vmem:[#allocation2 + $0xc1] sm:$0xff]
      %v715 = vld [vmem:[#allocation2 + $0xc9] sm:$0xff]
      %v716 = vld [vmem:[#allocation2 + $0xd9] sm:$0xff]
      %v717 = vld [vmem:[#allocation2 + $0xe1] sm:$0xff]
      %v718 = vld [vmem:[#allocation2 + $0xf1] sm:$0xff]
      %v719 = vld [vmem:[#allocation2 + $0xf9] sm:$0xff]
      %v720 = vld [vmem:[#allocation2 + $0x109] sm:$0xff]
      %v721 = vld [vmem:[#allocation2 + $0x111] sm:$0xff]
      %v722 = vld [vmem:[#allocation2 + $0x121] sm:$0xff]
      %v723 = vld [vmem:[#allocation2 + $0x129] sm:$0xff]
      %v724 = vld [vmem:[#allocation2 + $0x139] sm:$0xff]
      %v725 = vld [vmem:[#allocation2 + $0x141] sm:$0xff]
      %v726 = vld [vmem:[#allocation2 + $0x151] sm:$0xff]
      %v727 = vld [vmem:[#allocation2 + $0x159] sm:$0xff]
      %v728 = vld [vmem:[#allocation2 + $0x169] sm:$0xff]
      %v729 = vld [vmem:[#allocation2 + $0x171] sm:$0xff]
      %v730 = vpack.c.bf16 %v699, %v698
      %v731 = vpack.c.bf16 %v701, %v700
      %v732 = vpack.c.bf16 %v703, %v702
      %v733 = vpack.c.bf16 %v705, %v704
      %v734 = vpack.c.bf16 %v707, %v706
      %v735 = vpack.c.bf16 %v709, %v708
      %v736 = vpack.c.bf16 %v711, %v710
      %v737 = vpack.c.bf16 %v713, %v712
      %v738 = vpack.c.bf16 %v715, %v714
      %v739 = vpack.c.bf16 %v717, %v716
      %v740 = vpack.c.bf16 %v719, %v718
      %v741 = vpack.c.bf16 %v721, %v720
      %v742 = vpack.c.bf16 %v723, %v722
      %v743 = vpack.c.bf16 %v725, %v724
      %v744 = vpack.c.bf16 %v727, %v726
      %v745 = vpack.c.bf16 %v729, %v728
      %s746 = scalar_lea.vmem %s3, 2
      %v747 = vld [vmem:[%s746] sm:$0x3]
      %v749 = vsel %vm388, %v730, 0
      %v752 = vsel %vm388, %v731, 0
      %v755 = vsel %vm388, %v732, 0
      %v758 = vsel %vm388, %v733, 0
      %v761 = vsel %vm388, %v734, 0
      %v764 = vsel %vm388, %v735, 0
      %v767 = vsel %vm388, %v736, 0
      %v770 = vsel %vm388, %v737, 0
      %v773 = vsel %vm388, %v738, 0
      %v776 = vsel %vm388, %v739, 0
      %v779 = vsel %vm388, %v740, 0
      %v782 = vsel %vm388, %v741, 0
      %v785 = vsel %vm388, %v742, 0
      %v788 = vsel %vm388, %v743, 0
      %v791 = vsel %vm388, %v744, 0
      %v794 = vsel %vm388, %v745, 0
      %vm796 = vcmask 1041408
      %v798 = vsel %vm796, %v747, 0
      %800 = vmatpush.bf16.msra.mxu0 0
      %801 = vmatpush.bf16.msra.mxu0 0
      %802 = vmatpush.bf16.msra.mxu0 0
      %803 = vmatpush.bf16.msra.mxu0 0
      %804 = vmatpush.bf16.msra.mxu0 0
      %805 = vmatpush.bf16.msra.mxu0 0
      %806 = vmatpush.bf16.msra.mxu0 0
      %807 = vmatpush.bf16.msra.mxu0 %v798
      %808 = vmatmul.bf16.gmra.mxu0 %v749
      %v809 = vpop.f32.mrf.mxu0
      %v810 = vadd.f32 0.0, %v809
      %v811 = vpop.f32.mrf.mxu0
      %v812 = vadd.f32 0.0, %v811
      %813 = vmatmul.bf16.gmra.mxu0 %v752
      %v814 = vpop.f32.mrf.mxu0
      %v815 = vadd.f32 0.0, %v814
      %v816 = vpop.f32.mrf.mxu0
      %v817 = vadd.f32 0.0, %v816
      %818 = vmatmul.bf16.gmra.mxu0 %v755
      %v819 = vpop.f32.mrf.mxu0
      %v820 = vadd.f32 0.0, %v819
      %v821 = vpop.f32.mrf.mxu0
      %v822 = vadd.f32 0.0, %v821
      %823 = vmatmul.bf16.gmra.mxu0 %v758
      %v824 = vpop.f32.mrf.mxu0
      %v825 = vadd.f32 0.0, %v824
      %v826 = vpop.f32.mrf.mxu0
      %v827 = vadd.f32 0.0, %v826
      %828 = vmatmul.bf16.gmra.mxu0 %v761
      %v829 = vpop.f32.mrf.mxu0
      %v830 = vadd.f32 0.0, %v829
      %v831 = vpop.f32.mrf.mxu0
      %v832 = vadd.f32 0.0, %v831
      %833 = vmatmul.bf16.gmra.mxu0 %v764
      %v834 = vpop.f32.mrf.mxu0
      %v835 = vadd.f32 0.0, %v834
      %v836 = vpop.f32.mrf.mxu0
      %v837 = vadd.f32 0.0, %v836
      %838 = vmatmul.bf16.gmra.mxu0 %v767
      %v839 = vpop.f32.mrf.mxu0
      %v840 = vadd.f32 0.0, %v839
      %v841 = vpop.f32.mrf.mxu0
      %v842 = vadd.f32 0.0, %v841
      %843 = vmatmul.bf16.gmra.mxu0 %v770
      %v844 = vpop.f32.mrf.mxu0
      %v845 = vadd.f32 0.0, %v844
      %v846 = vpop.f32.mrf.mxu0
      %v847 = vadd.f32 0.0, %v846
      %848 = vmatmul.bf16.gmra.mxu0 %v773
      %v849 = vpop.f32.mrf.mxu0
      %v850 = vadd.f32 0.0, %v849
      %v851 = vpop.f32.mrf.mxu0
      %v852 = vadd.f32 0.0, %v851
      %853 = vmatmul.bf16.gmra.mxu0 %v776
      %v854 = vpop.f32.mrf.mxu0
      %v855 = vadd.f32 0.0, %v854
      %v856 = vpop.f32.mrf.mxu0
      %v857 = vadd.f32 0.0, %v856
      %858 = vmatmul.bf16.gmra.mxu0 %v779
      %v859 = vpop.f32.mrf.mxu0
      %v860 = vadd.f32 0.0, %v859
      %v861 = vpop.f32.mrf.mxu0
      %v862 = vadd.f32 0.0, %v861
      %863 = vmatmul.bf16.gmra.mxu0 %v782
      %v864 = vpop.f32.mrf.mxu0
      %v865 = vadd.f32 0.0, %v864
      %v866 = vpop.f32.mrf.mxu0
      %v867 = vadd.f32 0.0, %v866
      %868 = vmatmul.bf16.gmra.mxu0 %v785
      %v869 = vpop.f32.mrf.mxu0
      %v870 = vadd.f32 0.0, %v869
      %v871 = vpop.f32.mrf.mxu0
      %v872 = vadd.f32 0.0, %v871
      %873 = vmatmul.bf16.gmra.mxu0 %v788
      %v874 = vpop.f32.mrf.mxu0
      %v875 = vadd.f32 0.0, %v874
      %v876 = vpop.f32.mrf.mxu0
      %v877 = vadd.f32 0.0, %v876
      %878 = vmatmul.bf16.gmra.mxu0 %v791
      %v879 = vpop.f32.mrf.mxu0
      %v880 = vadd.f32 0.0, %v879
      %v881 = vpop.f32.mrf.mxu0
      %v882 = vadd.f32 0.0, %v881
      %883 = vmatmul.bf16.gmra.mxu0 %v794
      %v884 = vpop.f32.mrf.mxu0
      %v885 = vadd.f32 0.0, %v884
      %v886 = vpop.f32.mrf.mxu0
      %v887 = vadd.f32 0.0, %v886
      %888 = vdwg.mxu0
      %v890 = vsel %vm388, %v681, 0
      %v893 = vsel %vm388, %v682, 0
      %v896 = vsel %vm388, %v683, 0
      %v899 = vsel %vm388, %v684, 0
      %v902 = vsel %vm388, %v685, 0
      %v905 = vsel %vm388, %v686, 0
      %v908 = vsel %vm388, %v687, 0
      %v911 = vsel %vm388, %v688, 0
      %v914 = vsel %vm388, %v689, 0
      %v917 = vsel %vm388, %v690, 0
      %v920 = vsel %vm388, %v691, 0
      %v923 = vsel %vm388, %v692, 0
      %v926 = vsel %vm388, %v693, 0
      %v929 = vsel %vm388, %v694, 0
      %v932 = vsel %vm388, %v695, 0
      %v935 = vsel %vm388, %v696, 0
      %v938 = vsel %vm796, %v697, 0
      %940 = vmatpush.bf16.msra.mxu0 0
      %941 = vmatpush.bf16.msra.mxu0 0
      %942 = vmatpush.bf16.msra.mxu0 0
      %943 = vmatpush.bf16.msra.mxu0 0
      %944 = vmatpush.bf16.msra.mxu0 0
      %945 = vmatpush.bf16.msra.mxu0 0
      %946 = vmatpush.bf16.msra.mxu0 0
      %947 = vmatpush.bf16.msra.mxu0 %v938
      %948 = vmatmul.bf16.gmra.mxu0 %v890
      %v949 = vpop.f32.mrf.mxu0
      %v950 = vadd.f32 %v810, %v949
      %v951 = vpop.f32.mrf.mxu0
      %v952 = vadd.f32 %v812, %v951
      %953 = vmatmul.bf16.gmra.mxu0 %v893
      %v954 = vpop.f32.mrf.mxu0
      %v955 = vadd.f32 %v815, %v954
      %v956 = vpop.f32.mrf.mxu0
      %v957 = vadd.f32 %v817, %v956
      %958 = vmatmul.bf16.gmra.mxu0 %v896
      %v959 = vpop.f32.mrf.mxu0
      %v960 = vadd.f32 %v820, %v959
      %v961 = vpop.f32.mrf.mxu0
      %v962 = vadd.f32 %v822, %v961
      %963 = vmatmul.bf16.gmra.mxu0 %v899
      %v964 = vpop.f32.mrf.mxu0
      %v965 = vadd.f32 %v825, %v964
      %v966 = vpop.f32.mrf.mxu0
      %v967 = vadd.f32 %v827, %v966
      %968 = vmatmul.bf16.gmra.mxu0 %v902
      %v969 = vpop.f32.mrf.mxu0
      %v970 = vadd.f32 %v830, %v969
      %v971 = vpop.f32.mrf.mxu0
      %v972 = vadd.f32 %v832, %v971
      %973 = vmatmul.bf16.gmra.mxu0 %v905
      %v974 = vpop.f32.mrf.mxu0
      %v975 = vadd.f32 %v835, %v974
      %v976 = vpop.f32.mrf.mxu0
      %v977 = vadd.f32 %v837, %v976
      %978 = vmatmul.bf16.gmra.mxu0 %v908
      %v979 = vpop.f32.mrf.mxu0
      %v980 = vadd.f32 %v840, %v979
      %v981 = vpop.f32.mrf.mxu0
      %v982 = vadd.f32 %v842, %v981
      %983 = vmatmul.bf16.gmra.mxu0 %v911
      %v984 = vpop.f32.mrf.mxu0
      %v985 = vadd.f32 %v845, %v984
      %v986 = vpop.f32.mrf.mxu0
      %v987 = vadd.f32 %v847, %v986
      %988 = vmatmul.bf16.gmra.mxu0 %v914
      %v989 = vpop.f32.mrf.mxu0
      %v990 = vadd.f32 %v850, %v989
      %v991 = vpop.f32.mrf.mxu0
      %v992 = vadd.f32 %v852, %v991
      %993 = vmatmul.bf16.gmra.mxu0 %v917
      %v994 = vpop.f32.mrf.mxu0
      %v995 = vadd.f32 %v855, %v994
      %v996 = vpop.f32.mrf.mxu0
      %v997 = vadd.f32 %v857, %v996
      %998 = vmatmul.bf16.gmra.mxu0 %v920
      %v999 = vpop.f32.mrf.mxu0
      %v1000 = vadd.f32 %v860, %v999
      %v1001 = vpop.f32.mrf.mxu0
      %v1002 = vadd.f32 %v862, %v1001
      %1003 = vmatmul.bf16.gmra.mxu0 %v923
      %v1004 = vpop.f32.mrf.mxu0
      %v1005 = vadd.f32 %v865, %v1004
      %v1006 = vpop.f32.mrf.mxu0
      %v1007 = vadd.f32 %v867, %v1006
      %1008 = vmatmul.bf16.gmra.mxu0 %v926
      %v1009 = vpop.f32.mrf.mxu0
      %v1010 = vadd.f32 %v870, %v1009
      %v1011 = vpop.f32.mrf.mxu0
      %v1012 = vadd.f32 %v872, %v1011
      %1013 = vmatmul.bf16.gmra.mxu0 %v929
      %v1014 = vpop.f32.mrf.mxu0
      %v1015 = vadd.f32 %v875, %v1014
      %v1016 = vpop.f32.mrf.mxu0
      %v1017 = vadd.f32 %v877, %v1016
      %1018 = vmatmul.bf16.gmra.mxu0 %v932
      %v1019 = vpop.f32.mrf.mxu0
      %v1020 = vadd.f32 %v880, %v1019
      %v1021 = vpop.f32.mrf.mxu0
      %v1022 = vadd.f32 %v882, %v1021
      %1023 = vmatmul.bf16.gmra.mxu0 %v935
      %v1024 = vpop.f32.mrf.mxu0
      %v1025 = vadd.f32 %v885, %v1024
      %v1026 = vpop.f32.mrf.mxu0
      %v1027 = vadd.f32 %v887, %v1026
      %1028 = vdwg.mxu0
      %v1029 = vld [vmem:[#allocation2 + $0x2] sm:$0xff]
      %v1030 = vld [vmem:[#allocation2 + $0xa] sm:$0xff]
      %v1031 = vld [vmem:[#allocation2 + $0x1a] sm:$0xff]
      %v1032 = vld [vmem:[#allocation2 + $0x22] sm:$0xff]
      %v1033 = vld [vmem:[#allocation2 + $0x32] sm:$0xff]
      %v1034 = vld [vmem:[#allocation2 + $0x3a] sm:$0xff]
      %v1035 = vld [vmem:[#allocation2 + $0x4a] sm:$0xff]
      %v1036 = vld [vmem:[#allocation2 + $0x52] sm:$0xff]
      %v1037 = vld [vmem:[#allocation2 + $0x62] sm:$0xff]
      %v1038 = vld [vmem:[#allocation2 + $0x6a] sm:$0xff]
      %v1039 = vld [vmem:[#allocation2 + $0x7a] sm:$0xff]
      %v1040 = vld [vmem:[#allocation2 + $0x82] sm:$0xff]
      %v1041 = vld [vmem:[#allocation2 + $0x92] sm:$0xff]
      %v1042 = vld [vmem:[#allocation2 + $0x9a] sm:$0xff]
      %v1043 = vld [vmem:[#allocation2 + $0xaa] sm:$0xff]
      %v1044 = vld [vmem:[#allocation2 + $0xb2] sm:$0xff]
      %v1045 = vld [vmem:[#allocation2 + $0xc2] sm:$0xff]
      %v1046 = vld [vmem:[#allocation2 + $0xca] sm:$0xff]
      %v1047 = vld [vmem:[#allocation2 + $0xda] sm:$0xff]
      %v1048 = vld [vmem:[#allocation2 + $0xe2] sm:$0xff]
      %v1049 = vld [vmem:[#allocation2 + $0xf2] sm:$0xff]
      %v1050 = vld [vmem:[#allocation2 + $0xfa] sm:$0xff]
      %v1051 = vld [vmem:[#allocation2 + $0x10a] sm:$0xff]
      %v1052 = vld [vmem:[#allocation2 + $0x112] sm:$0xff]
      %v1053 = vld [vmem:[#allocation2 + $0x122] sm:$0xff]
      %v1054 = vld [vmem:[#allocation2 + $0x12a] sm:$0xff]
      %v1055 = vld [vmem:[#allocation2 + $0x13a] sm:$0xff]
      %v1056 = vld [vmem:[#allocation2 + $0x142] sm:$0xff]
      %v1057 = vld [vmem:[#allocation2 + $0x152] sm:$0xff]
      %v1058 = vld [vmem:[#allocation2 + $0x15a] sm:$0xff]
      %v1059 = vld [vmem:[#allocation2 + $0x16a] sm:$0xff]
      %v1060 = vld [vmem:[#allocation2 + $0x172] sm:$0xff]
      %v1061 = vpack.c.bf16 %v1030, %v1029
      %v1062 = vpack.c.bf16 %v1032, %v1031
      %v1063 = vpack.c.bf16 %v1034, %v1033
      %v1064 = vpack.c.bf16 %v1036, %v1035
      %v1065 = vpack.c.bf16 %v1038, %v1037
      %v1066 = vpack.c.bf16 %v1040, %v1039
      %v1067 = vpack.c.bf16 %v1042, %v1041
      %v1068 = vpack.c.bf16 %v1044, %v1043
      %v1069 = vpack.c.bf16 %v1046, %v1045
      %v1070 = vpack.c.bf16 %v1048, %v1047
      %v1071 = vpack.c.bf16 %v1050, %v1049
      %v1072 = vpack.c.bf16 %v1052, %v1051
      %v1073 = vpack.c.bf16 %v1054, %v1053
      %v1074 = vpack.c.bf16 %v1056, %v1055
      %v1075 = vpack.c.bf16 %v1058, %v1057
      %v1076 = vpack.c.bf16 %v1060, %v1059
      %s1077 = scalar_lea.vmem %s3, 4
      %v1078 = vld [vmem:[%s1077] sm:$0x3]
      %v1080 = vsel %vm388, %v1061, 0
      %v1083 = vsel %vm388, %v1062, 0
      %v1086 = vsel %vm388, %v1063, 0
      %v1089 = vsel %vm388, %v1064, 0
      %v1092 = vsel %vm388, %v1065, 0
      %v1095 = vsel %vm388, %v1066, 0
      %v1098 = vsel %vm388, %v1067, 0
      %v1101 = vsel %vm388, %v1068, 0
      %v1104 = vsel %vm388, %v1069, 0
      %v1107 = vsel %vm388, %v1070, 0
      %v1110 = vsel %vm388, %v1071, 0
      %v1113 = vsel %vm388, %v1072, 0
      %v1116 = vsel %vm388, %v1073, 0
      %v1119 = vsel %vm388, %v1074, 0
      %v1122 = vsel %vm388, %v1075, 0
      %v1125 = vsel %vm388, %v1076, 0
      %v1128 = vsel %vm796, %v1078, 0
      %1130 = vmatpush.bf16.msra.mxu0 0
      %1131 = vmatpush.bf16.msra.mxu0 0
      %1132 = vmatpush.bf16.msra.mxu0 0
      %1133 = vmatpush.bf16.msra.mxu0 0
      %1134 = vmatpush.bf16.msra.mxu0 0
      %1135 = vmatpush.bf16.msra.mxu0 0
      %1136 = vmatpush.bf16.msra.mxu0 0
      %1137 = vmatpush.bf16.msra.mxu0 %v1128
      %1138 = vmatmul.bf16.gmra.mxu0 %v1080
      %v1139 = vpop.f32.mrf.mxu0
      %v1140 = vadd.f32 0.0, %v1139
      %v1141 = vpop.f32.mrf.mxu0
      %v1142 = vadd.f32 0.0, %v1141
      %1143 = vmatmul.bf16.gmra.mxu0 %v1083
      %v1144 = vpop.f32.mrf.mxu0
      %v1145 = vadd.f32 0.0, %v1144
      %v1146 = vpop.f32.mrf.mxu0
      %v1147 = vadd.f32 0.0, %v1146
      %1148 = vmatmul.bf16.gmra.mxu0 %v1086
      %v1149 = vpop.f32.mrf.mxu0
      %v1150 = vadd.f32 0.0, %v1149
      %v1151 = vpop.f32.mrf.mxu0
      %v1152 = vadd.f32 0.0, %v1151
      %1153 = vmatmul.bf16.gmra.mxu0 %v1089
      %v1154 = vpop.f32.mrf.mxu0
      %v1155 = vadd.f32 0.0, %v1154
      %v1156 = vpop.f32.mrf.mxu0
      %v1157 = vadd.f32 0.0, %v1156
      %1158 = vmatmul.bf16.gmra.mxu0 %v1092
      %v1159 = vpop.f32.mrf.mxu0
      %v1160 = vadd.f32 0.0, %v1159
      %v1161 = vpop.f32.mrf.mxu0
      %v1162 = vadd.f32 0.0, %v1161
      %1163 = vmatmul.bf16.gmra.mxu0 %v1095
      %v1164 = vpop.f32.mrf.mxu0
      %v1165 = vadd.f32 0.0, %v1164
      %v1166 = vpop.f32.mrf.mxu0
      %v1167 = vadd.f32 0.0, %v1166
      %1168 = vmatmul.bf16.gmra.mxu0 %v1098
      %v1169 = vpop.f32.mrf.mxu0
      %v1170 = vadd.f32 0.0, %v1169
      %v1171 = vpop.f32.mrf.mxu0
      %v1172 = vadd.f32 0.0, %v1171
      %1173 = vmatmul.bf16.gmra.mxu0 %v1101
      %v1174 = vpop.f32.mrf.mxu0
      %v1175 = vadd.f32 0.0, %v1174
      %v1176 = vpop.f32.mrf.mxu0
      %v1177 = vadd.f32 0.0, %v1176
      %1178 = vmatmul.bf16.gmra.mxu0 %v1104
      %v1179 = vpop.f32.mrf.mxu0
      %v1180 = vadd.f32 0.0, %v1179
      %v1181 = vpop.f32.mrf.mxu0
      %v1182 = vadd.f32 0.0, %v1181
      %1183 = vmatmul.bf16.gmra.mxu0 %v1107
      %v1184 = vpop.f32.mrf.mxu0
      %v1185 = vadd.f32 0.0, %v1184
      %v1186 = vpop.f32.mrf.mxu0
      %v1187 = vadd.f32 0.0, %v1186
      %1188 = vmatmul.bf16.gmra.mxu0 %v1110
      %v1189 = vpop.f32.mrf.mxu0
      %v1190 = vadd.f32 0.0, %v1189
      %v1191 = vpop.f32.mrf.mxu0
      %v1192 = vadd.f32 0.0, %v1191
      %1193 = vmatmul.bf16.gmra.mxu0 %v1113
      %v1194 = vpop.f32.mrf.mxu0
      %v1195 = vadd.f32 0.0, %v1194
      %v1196 = vpop.f32.mrf.mxu0
      %v1197 = vadd.f32 0.0, %v1196
      %1198 = vmatmul.bf16.gmra.mxu0 %v1116
      %v1199 = vpop.f32.mrf.mxu0
      %v1200 = vadd.f32 0.0, %v1199
      %v1201 = vpop.f32.mrf.mxu0
      %v1202 = vadd.f32 0.0, %v1201
      %1203 = vmatmul.bf16.gmra.mxu0 %v1119
      %v1204 = vpop.f32.mrf.mxu0
      %v1205 = vadd.f32 0.0, %v1204
      %v1206 = vpop.f32.mrf.mxu0
      %v1207 = vadd.f32 0.0, %v1206
      %1208 = vmatmul.bf16.gmra.mxu0 %v1122
      %v1209 = vpop.f32.mrf.mxu0
      %v1210 = vadd.f32 0.0, %v1209
      %v1211 = vpop.f32.mrf.mxu0
      %v1212 = vadd.f32 0.0, %v1211
      %1213 = vmatmul.bf16.gmra.mxu0 %v1125
      %v1214 = vpop.f32.mrf.mxu0
      %v1215 = vadd.f32 0.0, %v1214
      %v1216 = vpop.f32.mrf.mxu0
      %v1217 = vadd.f32 0.0, %v1216
      %1218 = vdwg.mxu0
      %v1219 = vadd.f32 %v950, %v1140
      %v1220 = vadd.f32 %v952, %v1142
      %v1221 = vadd.f32 %v955, %v1145
      %v1222 = vadd.f32 %v957, %v1147
      %v1223 = vadd.f32 %v960, %v1150
      %v1224 = vadd.f32 %v962, %v1152
      %v1225 = vadd.f32 %v965, %v1155
      %v1226 = vadd.f32 %v967, %v1157
      %v1227 = vadd.f32 %v970, %v1160
      %v1228 = vadd.f32 %v972, %v1162
      %v1229 = vadd.f32 %v975, %v1165
      %v1230 = vadd.f32 %v977, %v1167
      %v1231 = vadd.f32 %v980, %v1170
      %v1232 = vadd.f32 %v982, %v1172
      %v1233 = vadd.f32 %v985, %v1175
      %v1234 = vadd.f32 %v987, %v1177
      %v1235 = vadd.f32 %v990, %v1180
      %v1236 = vadd.f32 %v992, %v1182
      %v1237 = vadd.f32 %v995, %v1185
      %v1238 = vadd.f32 %v997, %v1187
      %v1239 = vadd.f32 %v1000, %v1190
      %v1240 = vadd.f32 %v1002, %v1192
      %v1241 = vadd.f32 %v1005, %v1195
      %v1242 = vadd.f32 %v1007, %v1197
      %v1243 = vadd.f32 %v1010, %v1200
      %v1244 = vadd.f32 %v1012, %v1202
      %v1245 = vadd.f32 %v1015, %v1205
      %v1246 = vadd.f32 %v1017, %v1207
      %v1247 = vadd.f32 %v1020, %v1210
      %v1248 = vadd.f32 %v1022, %v1212
      %v1249 = vadd.f32 %v1025, %v1215
      %v1250 = vadd.f32 %v1027, %v1217
      %v1251 = vld [vmem:[%s616] sm:$0xff]
      %v1252 = vld [vmem:[%s616 + $0x8] sm:$0xff]
      %v1253 = vld [vmem:[%s616 + $0x18] sm:$0xff]
      %v1254 = vld [vmem:[%s616 + $0x20] sm:$0xff]
      %v1255 = vld [vmem:[%s616 + $0x30] sm:$0xff]
      %v1256 = vld [vmem:[%s616 + $0x38] sm:$0xff]
      %v1257 = vld [vmem:[%s616 + $0x48] sm:$0xff]
      %v1258 = vld [vmem:[%s616 + $0x50] sm:$0xff]
      %v1259 = vld [vmem:[%s616 + $0x60] sm:$0xff]
      %v1260 = vld [vmem:[%s616 + $0x68] sm:$0xff]
      %v1261 = vld [vmem:[%s616 + $0x78] sm:$0xff]
      %v1262 = vld [vmem:[%s616 + $0x80] sm:$0xff]
      %v1263 = vld [vmem:[%s616 + $0x90] sm:$0xff]
      %v1264 = vld [vmem:[%s616 + $0x98] sm:$0xff]
      %v1265 = vld [vmem:[%s616 + $0xa8] sm:$0xff]
      %v1266 = vld [vmem:[%s616 + $0xb0] sm:$0xff]
      %v1267 = vld [vmem:[%s616 + $0xc0] sm:$0xff]
      %v1268 = vld [vmem:[%s616 + $0xc8] sm:$0xff]
      %v1269 = vld [vmem:[%s616 + $0xd8] sm:$0xff]
      %v1270 = vld [vmem:[%s616 + $0xe0] sm:$0xff]
      %v1271 = vld [vmem:[%s616 + $0xf0] sm:$0xff]
      %v1272 = vld [vmem:[%s616 + $0xf8] sm:$0xff]
      %v1273 = vld [vmem:[%s616 + $0x108] sm:$0xff]
      %v1274 = vld [vmem:[%s616 + $0x110] sm:$0xff]
      %v1275 = vld [vmem:[%s616 + $0x120] sm:$0xff]
      %v1276 = vld [vmem:[%s616 + $0x128] sm:$0xff]
      %v1277 = vld [vmem:[%s616 + $0x138] sm:$0xff]
      %v1278 = vld [vmem:[%s616 + $0x140] sm:$0xff]
      %v1279 = vld [vmem:[%s616 + $0x150] sm:$0xff]
      %v1280 = vld [vmem:[%s616 + $0x158] sm:$0xff]
      %v1281 = vld [vmem:[%s616 + $0x168] sm:$0xff]
      %v1282 = vld [vmem:[%s616 + $0x170] sm:$0xff]
      %v1283 = vpack.c.bf16 %v1252, %v1251
      %v1284 = vpack.c.bf16 %v1254, %v1253
      %v1285 = vpack.c.bf16 %v1256, %v1255
      %v1286 = vpack.c.bf16 %v1258, %v1257
      %v1287 = vpack.c.bf16 %v1260, %v1259
      %v1288 = vpack.c.bf16 %v1262, %v1261
      %v1289 = vpack.c.bf16 %v1264, %v1263
      %v1290 = vpack.c.bf16 %v1266, %v1265
      %v1291 = vpack.c.bf16 %v1268, %v1267
      %v1292 = vpack.c.bf16 %v1270, %v1269
      %v1293 = vpack.c.bf16 %v1272, %v1271
      %v1294 = vpack.c.bf16 %v1274, %v1273
      %v1295 = vpack.c.bf16 %v1276, %v1275
      %v1296 = vpack.c.bf16 %v1278, %v1277
      %v1297 = vpack.c.bf16 %v1280, %v1279
      %v1298 = vpack.c.bf16 %v1282, %v1281
      %s1299 = scalar_lea.vmem %s3, 6
      %v1300 = vld [vmem:[%s1299] sm:$0x3]
      %v1302 = vsel %vm388, %v1283, 0
      %v1305 = vsel %vm388, %v1284, 0
      %v1308 = vsel %vm388, %v1285, 0
      %v1311 = vsel %vm388, %v1286, 0
      %v1314 = vsel %vm388, %v1287, 0
      %v1317 = vsel %vm388, %v1288, 0
      %v1320 = vsel %vm388, %v1289, 0
      %v1323 = vsel %vm388, %v1290, 0
      %v1326 = vsel %vm388, %v1291, 0
      %v1329 = vsel %vm388, %v1292, 0
      %v1332 = vsel %vm388, %v1293, 0
      %v1335 = vsel %vm388, %v1294, 0
      %v1338 = vsel %vm388, %v1295, 0
      %v1341 = vsel %vm388, %v1296, 0
      %v1344 = vsel %vm388, %v1297, 0
      %v1347 = vsel %vm388, %v1298, 0
      %v1350 = vsel %vm796, %v1300, 0
      %1352 = vmatpush.bf16.msra.mxu0 0
      %1353 = vmatpush.bf16.msra.mxu0 0
      %1354 = vmatpush.bf16.msra.mxu0 0
      %1355 = vmatpush.bf16.msra.mxu0 0
      %1356 = vmatpush.bf16.msra.mxu0 0
      %1357 = vmatpush.bf16.msra.mxu0 0
      %1358 = vmatpush.bf16.msra.mxu0 0
      %1359 = vmatpush.bf16.msra.mxu0 %v1350
      %1360 = vmatmul.bf16.gmra.mxu0 %v1302
      %v1361 = vpop.f32.mrf.mxu0
      %v1362 = vadd.f32 0.0, %v1361
      %v1363 = vpop.f32.mrf.mxu0
      %v1364 = vadd.f32 0.0, %v1363
      %1365 = vmatmul.bf16.gmra.mxu0 %v1305
      %v1366 = vpop.f32.mrf.mxu0
      %v1367 = vadd.f32 0.0, %v1366
      %v1368 = vpop.f32.mrf.mxu0
      %v1369 = vadd.f32 0.0, %v1368
      %1370 = vmatmul.bf16.gmra.mxu0 %v1308
      %v1371 = vpop.f32.mrf.mxu0
      %v1372 = vadd.f32 0.0, %v1371
      %v1373 = vpop.f32.mrf.mxu0
      %v1374 = vadd.f32 0.0, %v1373
      %1375 = vmatmul.bf16.gmra.mxu0 %v1311
      %v1376 = vpop.f32.mrf.mxu0
      %v1377 = vadd.f32 0.0, %v1376
      %v1378 = vpop.f32.mrf.mxu0
      %v1379 = vadd.f32 0.0, %v1378
      %1380 = vmatmul.bf16.gmra.mxu0 %v1314
      %v1381 = vpop.f32.mrf.mxu0
      %v1382 = vadd.f32 0.0, %v1381
      %v1383 = vpop.f32.mrf.mxu0
      %v1384 = vadd.f32 0.0, %v1383
      %1385 = vmatmul.bf16.gmra.mxu0 %v1317
      %v1386 = vpop.f32.mrf.mxu0
      %v1387 = vadd.f32 0.0, %v1386
      %v1388 = vpop.f32.mrf.mxu0
      %v1389 = vadd.f32 0.0, %v1388
      %1390 = vmatmul.bf16.gmra.mxu0 %v1320
      %v1391 = vpop.f32.mrf.mxu0
      %v1392 = vadd.f32 0.0, %v1391
      %v1393 = vpop.f32.mrf.mxu0
      %v1394 = vadd.f32 0.0, %v1393
      %1395 = vmatmul.bf16.gmra.mxu0 %v1323
      %v1396 = vpop.f32.mrf.mxu0
      %v1397 = vadd.f32 0.0, %v1396
      %v1398 = vpop.f32.mrf.mxu0
      %v1399 = vadd.f32 0.0, %v1398
      %1400 = vmatmul.bf16.gmra.mxu0 %v1326
      %v1401 = vpop.f32.mrf.mxu0
      %v1402 = vadd.f32 0.0, %v1401
      %v1403 = vpop.f32.mrf.mxu0
      %v1404 = vadd.f32 0.0, %v1403
      %1405 = vmatmul.bf16.gmra.mxu0 %v1329
      %v1406 = vpop.f32.mrf.mxu0
      %v1407 = vadd.f32 0.0, %v1406
      %v1408 = vpop.f32.mrf.mxu0
      %v1409 = vadd.f32 0.0, %v1408
      %1410 = vmatmul.bf16.gmra.mxu0 %v1332
      %v1411 = vpop.f32.mrf.mxu0
      %v1412 = vadd.f32 0.0, %v1411
      %v1413 = vpop.f32.mrf.mxu0
      %v1414 = vadd.f32 0.0, %v1413
      %1415 = vmatmul.bf16.gmra.mxu0 %v1335
      %v1416 = vpop.f32.mrf.mxu0
      %v1417 = vadd.f32 0.0, %v1416
      %v1418 = vpop.f32.mrf.mxu0
      %v1419 = vadd.f32 0.0, %v1418
      %1420 = vmatmul.bf16.gmra.mxu0 %v1338
      %v1421 = vpop.f32.mrf.mxu0
      %v1422 = vadd.f32 0.0, %v1421
      %v1423 = vpop.f32.mrf.mxu0
      %v1424 = vadd.f32 0.0, %v1423
      %1425 = vmatmul.bf16.gmra.mxu0 %v1341
      %v1426 = vpop.f32.mrf.mxu0
      %v1427 = vadd.f32 0.0, %v1426
      %v1428 = vpop.f32.mrf.mxu0
      %v1429 = vadd.f32 0.0, %v1428
      %1430 = vmatmul.bf16.gmra.mxu0 %v1344
      %v1431 = vpop.f32.mrf.mxu0
      %v1432 = vadd.f32 0.0, %v1431
      %v1433 = vpop.f32.mrf.mxu0
      %v1434 = vadd.f32 0.0, %v1433
      %1435 = vmatmul.bf16.gmra.mxu0 %v1347
      %v1436 = vpop.f32.mrf.mxu0
      %v1437 = vadd.f32 0.0, %v1436
      %v1438 = vpop.f32.mrf.mxu0
      %v1439 = vadd.f32 0.0, %v1438
      %1440 = vdwg.mxu0
      %v1441 = vadd.f32 %v1219, %v1362
      %v1442 = vadd.f32 %v1220, %v1364
      %v1443 = vadd.f32 %v1221, %v1367
      %v1444 = vadd.f32 %v1222, %v1369
      %v1445 = vadd.f32 %v1223, %v1372
      %v1446 = vadd.f32 %v1224, %v1374
      %v1447 = vadd.f32 %v1225, %v1377
      %v1448 = vadd.f32 %v1226, %v1379
      %v1449 = vadd.f32 %v1227, %v1382
      %v1450 = vadd.f32 %v1228, %v1384
      %v1451 = vadd.f32 %v1229, %v1387
      %v1452 = vadd.f32 %v1230, %v1389
      %v1453 = vadd.f32 %v1231, %v1392
      %v1454 = vadd.f32 %v1232, %v1394
      %v1455 = vadd.f32 %v1233, %v1397
      %v1456 = vadd.f32 %v1234, %v1399
      %v1457 = vadd.f32 %v1235, %v1402
      %v1458 = vadd.f32 %v1236, %v1404
      %v1459 = vadd.f32 %v1237, %v1407
      %v1460 = vadd.f32 %v1238, %v1409
      %v1461 = vadd.f32 %v1239, %v1412
      %v1462 = vadd.f32 %v1240, %v1414
      %v1463 = vadd.f32 %v1241, %v1417
      %v1464 = vadd.f32 %v1242, %v1419
      %v1465 = vadd.f32 %v1243, %v1422
      %v1466 = vadd.f32 %v1244, %v1424
      %v1467 = vadd.f32 %v1245, %v1427
      %v1468 = vadd.f32 %v1246, %v1429
      %v1469 = vadd.f32 %v1247, %v1432
      %v1470 = vadd.f32 %v1248, %v1434
      %v1471 = vadd.f32 %v1249, %v1437
      %v1472 = vadd.f32 %v1250, %v1439
      %v1473 = vld [vmem:[%s616 + $0x1] sm:$0xff]
      %v1474 = vld [vmem:[%s616 + $0x9] sm:$0xff]
      %v1475 = vld [vmem:[%s616 + $0x19] sm:$0xff]
      %v1476 = vld [vmem:[%s616 + $0x21] sm:$0xff]
      %v1477 = vld [vmem:[%s616 + $0x31] sm:$0xff]
      %v1478 = vld [vmem:[%s616 + $0x39] sm:$0xff]
      %v1479 = vld [vmem:[%s616 + $0x49] sm:$0xff]
      %v1480 = vld [vmem:[%s616 + $0x51] sm:$0xff]
      %v1481 = vld [vmem:[%s616 + $0x61] sm:$0xff]
      %v1482 = vld [vmem:[%s616 + $0x69] sm:$0xff]
      %v1483 = vld [vmem:[%s616 + $0x79] sm:$0xff]
      %v1484 = vld [vmem:[%s616 + $0x81] sm:$0xff]
      %v1485 = vld [vmem:[%s616 + $0x91] sm:$0xff]
      %v1486 = vld [vmem:[%s616 + $0x99] sm:$0xff]
      %v1487 = vld [vmem:[%s616 + $0xa9] sm:$0xff]
      %v1488 = vld [vmem:[%s616 + $0xb1] sm:$0xff]
      %v1489 = vld [vmem:[%s616 + $0xc1] sm:$0xff]
      %v1490 = vld [vmem:[%s616 + $0xc9] sm:$0xff]
      %v1491 = vld [vmem:[%s616 + $0xd9] sm:$0xff]
      %v1492 = vld [vmem:[%s616 + $0xe1] sm:$0xff]
      %v1493 = vld [vmem:[%s616 + $0xf1] sm:$0xff]
      %v1494 = vld [vmem:[%s616 + $0xf9] sm:$0xff]
      %v1495 = vld [vmem:[%s616 + $0x109] sm:$0xff]
      %v1496 = vld [vmem:[%s616 + $0x111] sm:$0xff]
      %v1497 = vld [vmem:[%s616 + $0x121] sm:$0xff]
      %v1498 = vld [vmem:[%s616 + $0x129] sm:$0xff]
      %v1499 = vld [vmem:[%s616 + $0x139] sm:$0xff]
      %v1500 = vld [vmem:[%s616 + $0x141] sm:$0xff]
      %v1501 = vld [vmem:[%s616 + $0x151] sm:$0xff]
      %v1502 = vld [vmem:[%s616 + $0x159] sm:$0xff]
      %v1503 = vld [vmem:[%s616 + $0x169] sm:$0xff]
      %v1504 = vld [vmem:[%s616 + $0x171] sm:$0xff]
      %v1505 = vpack.c.bf16 %v1474, %v1473
      %v1506 = vpack.c.bf16 %v1476, %v1475
      %v1507 = vpack.c.bf16 %v1478, %v1477
      %v1508 = vpack.c.bf16 %v1480, %v1479
      %v1509 = vpack.c.bf16 %v1482, %v1481
      %v1510 = vpack.c.bf16 %v1484, %v1483
      %v1511 = vpack.c.bf16 %v1486, %v1485
      %v1512 = vpack.c.bf16 %v1488, %v1487
      %v1513 = vpack.c.bf16 %v1490, %v1489
      %v1514 = vpack.c.bf16 %v1492, %v1491
      %v1515 = vpack.c.bf16 %v1494, %v1493
      %v1516 = vpack.c.bf16 %v1496, %v1495
      %v1517 = vpack.c.bf16 %v1498, %v1497
      %v1518 = vpack.c.bf16 %v1500, %v1499
      %v1519 = vpack.c.bf16 %v1502, %v1501
      %v1520 = vpack.c.bf16 %v1504, %v1503
      %s1521 = scalar_lea.vmem %s3, 8
      %v1522 = vld [vmem:[%s1521] sm:$0x3]
      %v1524 = vsel %vm388, %v1505, 0
      %v1527 = vsel %vm388, %v1506, 0
      %v1530 = vsel %vm388, %v1507, 0
      %v1533 = vsel %vm388, %v1508, 0
      %v1536 = vsel %vm388, %v1509, 0
      %v1539 = vsel %vm388, %v1510, 0
      %v1542 = vsel %vm388, %v1511, 0
      %v1545 = vsel %vm388, %v1512, 0
      %v1548 = vsel %vm388, %v1513, 0
      %v1551 = vsel %vm388, %v1514, 0
      %v1554 = vsel %vm388, %v1515, 0
      %v1557 = vsel %vm388, %v1516, 0
      %v1560 = vsel %vm388, %v1517, 0
      %v1563 = vsel %vm388, %v1518, 0
      %v1566 = vsel %vm388, %v1519, 0
      %v1569 = vsel %vm388, %v1520, 0
      %v1572 = vsel %vm796, %v1522, 0
      %1574 = vmatpush.bf16.msra.mxu0 0
      %1575 = vmatpush.bf16.msra.mxu0 0
      %1576 = vmatpush.bf16.msra.mxu0 0
      %1577 = vmatpush.bf16.msra.mxu0 0
      %1578 = vmatpush.bf16.msra.mxu0 0
      %1579 = vmatpush.bf16.msra.mxu0 0
      %1580 = vmatpush.bf16.msra.mxu0 0
      %1581 = vmatpush.bf16.msra.mxu0 %v1572
      %1582 = vmatmul.bf16.gmra.mxu0 %v1524
      %v1583 = vpop.f32.mrf.mxu0
      %v1584 = vadd.f32 0.0, %v1583
      %v1585 = vpop.f32.mrf.mxu0
      %v1586 = vadd.f32 0.0, %v1585
      %1587 = vmatmul.bf16.gmra.mxu0 %v1527
      %v1588 = vpop.f32.mrf.mxu0
      %v1589 = vadd.f32 0.0, %v1588
      %v1590 = vpop.f32.mrf.mxu0
      %v1591 = vadd.f32 0.0, %v1590
      %1592 = vmatmul.bf16.gmra.mxu0 %v1530
      %v1593 = vpop.f32.mrf.mxu0
      %v1594 = vadd.f32 0.0, %v1593
      %v1595 = vpop.f32.mrf.mxu0
      %v1596 = vadd.f32 0.0, %v1595
      %1597 = vmatmul.bf16.gmra.mxu0 %v1533
      %v1598 = vpop.f32.mrf.mxu0
      %v1599 = vadd.f32 0.0, %v1598
      %v1600 = vpop.f32.mrf.mxu0
      %v1601 = vadd.f32 0.0, %v1600
      %1602 = vmatmul.bf16.gmra.mxu0 %v1536
      %v1603 = vpop.f32.mrf.mxu0
      %v1604 = vadd.f32 0.0, %v1603
      %v1605 = vpop.f32.mrf.mxu0
      %v1606 = vadd.f32 0.0, %v1605
      %1607 = vmatmul.bf16.gmra.mxu0 %v1539
      %v1608 = vpop.f32.mrf.mxu0
      %v1609 = vadd.f32 0.0, %v1608
      %v1610 = vpop.f32.mrf.mxu0
      %v1611 = vadd.f32 0.0, %v1610
      %1612 = vmatmul.bf16.gmra.mxu0 %v1542
      %v1613 = vpop.f32.mrf.mxu0
      %v1614 = vadd.f32 0.0, %v1613
      %v1615 = vpop.f32.mrf.mxu0
      %v1616 = vadd.f32 0.0, %v1615
      %1617 = vmatmul.bf16.gmra.mxu0 %v1545
      %v1618 = vpop.f32.mrf.mxu0
      %v1619 = vadd.f32 0.0, %v1618
      %v1620 = vpop.f32.mrf.mxu0
      %v1621 = vadd.f32 0.0, %v1620
      %1622 = vmatmul.bf16.gmra.mxu0 %v1548
      %v1623 = vpop.f32.mrf.mxu0
      %v1624 = vadd.f32 0.0, %v1623
      %v1625 = vpop.f32.mrf.mxu0
      %v1626 = vadd.f32 0.0, %v1625
      %1627 = vmatmul.bf16.gmra.mxu0 %v1551
      %v1628 = vpop.f32.mrf.mxu0
      %v1629 = vadd.f32 0.0, %v1628
      %v1630 = vpop.f32.mrf.mxu0
      %v1631 = vadd.f32 0.0, %v1630
      %1632 = vmatmul.bf16.gmra.mxu0 %v1554
      %v1633 = vpop.f32.mrf.mxu0
      %v1634 = vadd.f32 0.0, %v1633
      %v1635 = vpop.f32.mrf.mxu0
      %v1636 = vadd.f32 0.0, %v1635
      %1637 = vmatmul.bf16.gmra.mxu0 %v1557
      %v1638 = vpop.f32.mrf.mxu0
      %v1639 = vadd.f32 0.0, %v1638
      %v1640 = vpop.f32.mrf.mxu0
      %v1641 = vadd.f32 0.0, %v1640
      %1642 = vmatmul.bf16.gmra.mxu0 %v1560
      %v1643 = vpop.f32.mrf.mxu0
      %v1644 = vadd.f32 0.0, %v1643
      %v1645 = vpop.f32.mrf.mxu0
      %v1646 = vadd.f32 0.0, %v1645
      %1647 = vmatmul.bf16.gmra.mxu0 %v1563
      %v1648 = vpop.f32.mrf.mxu0
      %v1649 = vadd.f32 0.0, %v1648
      %v1650 = vpop.f32.mrf.mxu0
      %v1651 = vadd.f32 0.0, %v1650
      %1652 = vmatmul.bf16.gmra.mxu0 %v1566
      %v1653 = vpop.f32.mrf.mxu0
      %v1654 = vadd.f32 0.0, %v1653
      %v1655 = vpop.f32.mrf.mxu0
      %v1656 = vadd.f32 0.0, %v1655
      %1657 = vmatmul.bf16.gmra.mxu0 %v1569
      %v1658 = vpop.f32.mrf.mxu0
      %v1659 = vadd.f32 0.0, %v1658
      %v1660 = vpop.f32.mrf.mxu0
      %v1661 = vadd.f32 0.0, %v1660
      %1662 = vdwg.mxu0
      %v1663 = vadd.f32 %v1441, %v1584
      %v1664 = vadd.f32 %v1442, %v1586
      %v1665 = vadd.f32 %v1443, %v1589
      %v1666 = vadd.f32 %v1444, %v1591
      %v1667 = vadd.f32 %v1445, %v1594
      %v1668 = vadd.f32 %v1446, %v1596
      %v1669 = vadd.f32 %v1447, %v1599
      %v1670 = vadd.f32 %v1448, %v1601
      %v1671 = vadd.f32 %v1449, %v1604
      %v1672 = vadd.f32 %v1450, %v1606
      %v1673 = vadd.f32 %v1451, %v1609
      %v1674 = vadd.f32 %v1452, %v1611
      %v1675 = vadd.f32 %v1453, %v1614
      %v1676 = vadd.f32 %v1454, %v1616
      %v1677 = vadd.f32 %v1455, %v1619
      %v1678 = vadd.f32 %v1456, %v1621
      %v1679 = vadd.f32 %v1457, %v1624
      %v1680 = vadd.f32 %v1458, %v1626
      %v1681 = vadd.f32 %v1459, %v1629
      %v1682 = vadd.f32 %v1460, %v1631
      %v1683 = vadd.f32 %v1461, %v1634
      %v1684 = vadd.f32 %v1462, %v1636
      %v1685 = vadd.f32 %v1463, %v1639
      %v1686 = vadd.f32 %v1464, %v1641
      %v1687 = vadd.f32 %v1465, %v1644
      %v1688 = vadd.f32 %v1466, %v1646
      %v1689 = vadd.f32 %v1467, %v1649
      %v1690 = vadd.f32 %v1468, %v1651
      %v1691 = vadd.f32 %v1469, %v1654
      %v1692 = vadd.f32 %v1470, %v1656
      %v1693 = vadd.f32 %v1471, %v1659
      %v1694 = vadd.f32 %v1472, %v1661
      %v1695 = vld [vmem:[%s616 + $0x2] sm:$0xff]
      %v1696 = vld [vmem:[%s616 + $0xa] sm:$0xff]
      %v1697 = vld [vmem:[%s616 + $0x1a] sm:$0xff]
      %v1698 = vld [vmem:[%s616 + $0x22] sm:$0xff]
      %v1699 = vld [vmem:[%s616 + $0x32] sm:$0xff]
      %v1700 = vld [vmem:[%s616 + $0x3a] sm:$0xff]
      %v1701 = vld [vmem:[%s616 + $0x4a] sm:$0xff]
      %v1702 = vld [vmem:[%s616 + $0x52] sm:$0xff]
      %v1703 = vld [vmem:[%s616 + $0x62] sm:$0xff]
      %v1704 = vld [vmem:[%s616 + $0x6a] sm:$0xff]
      %v1705 = vld [vmem:[%s616 + $0x7a] sm:$0xff]
      %v1706 = vld [vmem:[%s616 + $0x82] sm:$0xff]
      %v1707 = vld [vmem:[%s616 + $0x92] sm:$0xff]
      %v1708 = vld [vmem:[%s616 + $0x9a] sm:$0xff]
      %v1709 = vld [vmem:[%s616 + $0xaa] sm:$0xff]
      %v1710 = vld [vmem:[%s616 + $0xb2] sm:$0xff]
      %v1711 = vld [vmem:[%s616 + $0xc2] sm:$0xff]
      %v1712 = vld [vmem:[%s616 + $0xca] sm:$0xff]
      %v1713 = vld [vmem:[%s616 + $0xda] sm:$0xff]
      %v1714 = vld [vmem:[%s616 + $0xe2] sm:$0xff]
      %v1715 = vld [vmem:[%s616 + $0xf2] sm:$0xff]
      %v1716 = vld [vmem:[%s616 + $0xfa] sm:$0xff]
      %v1717 = vld [vmem:[%s616 + $0x10a] sm:$0xff]
      %v1718 = vld [vmem:[%s616 + $0x112] sm:$0xff]
      %v1719 = vld [vmem:[%s616 + $0x122] sm:$0xff]
      %v1720 = vld [vmem:[%s616 + $0x12a] sm:$0xff]
      %v1721 = vld [vmem:[%s616 + $0x13a] sm:$0xff]
      %v1722 = vld [vmem:[%s616 + $0x142] sm:$0xff]
      %v1723 = vld [vmem:[%s616 + $0x152] sm:$0xff]
      %v1724 = vld [vmem:[%s616 + $0x15a] sm:$0xff]
      %v1725 = vld [vmem:[%s616 + $0x16a] sm:$0xff]
      %v1726 = vld [vmem:[%s616 + $0x172] sm:$0xff]
      %v1727 = vpack.c.bf16 %v1696, %v1695
      %v1728 = vpack.c.bf16 %v1698, %v1697
      %v1729 = vpack.c.bf16 %v1700, %v1699
      %v1730 = vpack.c.bf16 %v1702, %v1701
      %v1731 = vpack.c.bf16 %v1704, %v1703
      %v1732 = vpack.c.bf16 %v1706, %v1705
      %v1733 = vpack.c.bf16 %v1708, %v1707
      %v1734 = vpack.c.bf16 %v1710, %v1709
      %v1735 = vpack.c.bf16 %v1712, %v1711
      %v1736 = vpack.c.bf16 %v1714, %v1713
      %v1737 = vpack.c.bf16 %v1716, %v1715
      %v1738 = vpack.c.bf16 %v1718, %v1717
      %v1739 = vpack.c.bf16 %v1720, %v1719
      %v1740 = vpack.c.bf16 %v1722, %v1721
      %v1741 = vpack.c.bf16 %v1724, %v1723
      %v1742 = vpack.c.bf16 %v1726, %v1725
      %s1743 = scalar_lea.vmem %s3, 10
      %v1744 = vld [vmem:[%s1743] sm:$0x3]
      %v1746 = vsel %vm388, %v1727, 0
      %v1749 = vsel %vm388, %v1728, 0
      %v1752 = vsel %vm388, %v1729, 0
      %v1755 = vsel %vm388, %v1730, 0
      %v1758 = vsel %vm388, %v1731, 0
      %v1761 = vsel %vm388, %v1732, 0
      %v1764 = vsel %vm388, %v1733, 0
      %v1767 = vsel %vm388, %v1734, 0
      %v1770 = vsel %vm388, %v1735, 0
      %v1773 = vsel %vm388, %v1736, 0
      %v1776 = vsel %vm388, %v1737, 0
      %v1779 = vsel %vm388, %v1738, 0
      %v1782 = vsel %vm388, %v1739, 0
      %v1785 = vsel %vm388, %v1740, 0
      %v1788 = vsel %vm388, %v1741, 0
      %v1791 = vsel %vm388, %v1742, 0
      %v1794 = vsel %vm796, %v1744, 0
      %1796 = vmatpush.bf16.msra.mxu0 0
      %1797 = vmatpush.bf16.msra.mxu0 0
      %1798 = vmatpush.bf16.msra.mxu0 0
      %1799 = vmatpush.bf16.msra.mxu0 0
      %1800 = vmatpush.bf16.msra.mxu0 0
      %1801 = vmatpush.bf16.msra.mxu0 0
      %1802 = vmatpush.bf16.msra.mxu0 0
      %1803 = vmatpush.bf16.msra.mxu0 %v1794
      %1804 = vmatmul.bf16.gmra.mxu0 %v1746
      %v1805 = vpop.f32.mrf.mxu0
      %v1806 = vadd.f32 0.0, %v1805
      %v1807 = vpop.f32.mrf.mxu0
      %v1808 = vadd.f32 0.0, %v1807
      %1809 = vmatmul.bf16.gmra.mxu0 %v1749
      %v1810 = vpop.f32.mrf.mxu0
      %v1811 = vadd.f32 0.0, %v1810
      %v1812 = vpop.f32.mrf.mxu0
      %v1813 = vadd.f32 0.0, %v1812
      %1814 = vmatmul.bf16.gmra.mxu0 %v1752
      %v1815 = vpop.f32.mrf.mxu0
      %v1816 = vadd.f32 0.0, %v1815
      %v1817 = vpop.f32.mrf.mxu0
      %v1818 = vadd.f32 0.0, %v1817
      %1819 = vmatmul.bf16.gmra.mxu0 %v1755
      %v1820 = vpop.f32.mrf.mxu0
      %v1821 = vadd.f32 0.0, %v1820
      %v1822 = vpop.f32.mrf.mxu0
      %v1823 = vadd.f32 0.0, %v1822
      %1824 = vmatmul.bf16.gmra.mxu0 %v1758
      %v1825 = vpop.f32.mrf.mxu0
      %v1826 = vadd.f32 0.0, %v1825
      %v1827 = vpop.f32.mrf.mxu0
      %v1828 = vadd.f32 0.0, %v1827
      %1829 = vmatmul.bf16.gmra.mxu0 %v1761
      %v1830 = vpop.f32.mrf.mxu0
      %v1831 = vadd.f32 0.0, %v1830
      %v1832 = vpop.f32.mrf.mxu0
      %v1833 = vadd.f32 0.0, %v1832
      %1834 = vmatmul.bf16.gmra.mxu0 %v1764
      %v1835 = vpop.f32.mrf.mxu0
      %v1836 = vadd.f32 0.0, %v1835
      %v1837 = vpop.f32.mrf.mxu0
      %v1838 = vadd.f32 0.0, %v1837
      %1839 = vmatmul.bf16.gmra.mxu0 %v1767
      %v1840 = vpop.f32.mrf.mxu0
      %v1841 = vadd.f32 0.0, %v1840
      %v1842 = vpop.f32.mrf.mxu0
      %v1843 = vadd.f32 0.0, %v1842
      %1844 = vmatmul.bf16.gmra.mxu0 %v1770
      %v1845 = vpop.f32.mrf.mxu0
      %v1846 = vadd.f32 0.0, %v1845
      %v1847 = vpop.f32.mrf.mxu0
      %v1848 = vadd.f32 0.0, %v1847
      %1849 = vmatmul.bf16.gmra.mxu0 %v1773
      %v1850 = vpop.f32.mrf.mxu0
      %v1851 = vadd.f32 0.0, %v1850
      %v1852 = vpop.f32.mrf.mxu0
      %v1853 = vadd.f32 0.0, %v1852
      %1854 = vmatmul.bf16.gmra.mxu0 %v1776
      %v1855 = vpop.f32.mrf.mxu0
      %v1856 = vadd.f32 0.0, %v1855
      %v1857 = vpop.f32.mrf.mxu0
      %v1858 = vadd.f32 0.0, %v1857
      %1859 = vmatmul.bf16.gmra.mxu0 %v1779
      %v1860 = vpop.f32.mrf.mxu0
      %v1861 = vadd.f32 0.0, %v1860
      %v1862 = vpop.f32.mrf.mxu0
      %v1863 = vadd.f32 0.0, %v1862
      %1864 = vmatmul.bf16.gmra.mxu0 %v1782
      %v1865 = vpop.f32.mrf.mxu0
      %v1866 = vadd.f32 0.0, %v1865
      %v1867 = vpop.f32.mrf.mxu0
      %v1868 = vadd.f32 0.0, %v1867
      %1869 = vmatmul.bf16.gmra.mxu0 %v1785
      %v1870 = vpop.f32.mrf.mxu0
      %v1871 = vadd.f32 0.0, %v1870
      %v1872 = vpop.f32.mrf.mxu0
      %v1873 = vadd.f32 0.0, %v1872
      %1874 = vmatmul.bf16.gmra.mxu0 %v1788
      %v1875 = vpop.f32.mrf.mxu0
      %v1876 = vadd.f32 0.0, %v1875
      %v1877 = vpop.f32.mrf.mxu0
      %v1878 = vadd.f32 0.0, %v1877
      %1879 = vmatmul.bf16.gmra.mxu0 %v1791
      %v1880 = vpop.f32.mrf.mxu0
      %v1881 = vadd.f32 0.0, %v1880
      %v1882 = vpop.f32.mrf.mxu0
      %v1883 = vadd.f32 0.0, %v1882
      %1884 = vdwg.mxu0
      %v1885 = vadd.f32 %v1663, %v1806
      %v1886 = vadd.f32 %v1664, %v1808
      %v1887 = vadd.f32 %v1665, %v1811
      %v1888 = vadd.f32 %v1666, %v1813
      %v1889 = vadd.f32 %v1667, %v1816
      %v1890 = vadd.f32 %v1668, %v1818
      %v1891 = vadd.f32 %v1669, %v1821
      %v1892 = vadd.f32 %v1670, %v1823
      %v1893 = vadd.f32 %v1671, %v1826
      %v1894 = vadd.f32 %v1672, %v1828
      %v1895 = vadd.f32 %v1673, %v1831
      %v1896 = vadd.f32 %v1674, %v1833
      %v1897 = vadd.f32 %v1675, %v1836
      %v1898 = vadd.f32 %v1676, %v1838
      %v1899 = vadd.f32 %v1677, %v1841
      %v1900 = vadd.f32 %v1678, %v1843
      %v1901 = vadd.f32 %v1679, %v1846
      %v1902 = vadd.f32 %v1680, %v1848
      %v1903 = vadd.f32 %v1681, %v1851
      %v1904 = vadd.f32 %v1682, %v1853
      %v1905 = vadd.f32 %v1683, %v1856
      %v1906 = vadd.f32 %v1684, %v1858
      %v1907 = vadd.f32 %v1685, %v1861
      %v1908 = vadd.f32 %v1686, %v1863
      %v1909 = vadd.f32 %v1687, %v1866
      %v1910 = vadd.f32 %v1688, %v1868
      %v1911 = vadd.f32 %v1689, %v1871
      %v1912 = vadd.f32 %v1690, %v1873
      %v1913 = vadd.f32 %v1691, %v1876
      %v1914 = vadd.f32 %v1692, %v1878
      %v1915 = vadd.f32 %v1693, %v1881
      %v1916 = vadd.f32 %v1694, %v1883
      %s1917 = scalar_lea.vmem [#allocation2], 48
      %v1918 = vld [vmem:[%s1917] sm:$0xff]
      %v1919 = vld [vmem:[%s1917 + $0x8] sm:$0xff]
      %v1920 = vld [vmem:[%s1917 + $0x18] sm:$0xff]
      %v1921 = vld [vmem:[%s1917 + $0x20] sm:$0xff]
      %v1922 = vld [vmem:[%s1917 + $0x30] sm:$0xff]
      %v1923 = vld [vmem:[%s1917 + $0x38] sm:$0xff]
      %v1924 = vld [vmem:[%s1917 + $0x48] sm:$0xff]
      %v1925 = vld [vmem:[%s1917 + $0x50] sm:$0xff]
      %v1926 = vld [vmem:[%s1917 + $0x60] sm:$0xff]
      %v1927 = vld [vmem:[%s1917 + $0x68] sm:$0xff]
      %v1928 = vld [vmem:[%s1917 + $0x78] sm:$0xff]
      %v1929 = vld [vmem:[%s1917 + $0x80] sm:$0xff]
      %v1930 = vld [vmem:[%s1917 + $0x90] sm:$0xff]
      %v1931 = vld [vmem:[%s1917 + $0x98] sm:$0xff]
      %v1932 = vld [vmem:[%s1917 + $0xa8] sm:$0xff]
      %v1933 = vld [vmem:[%s1917 + $0xb0] sm:$0xff]
      %v1934 = vld [vmem:[%s1917 + $0xc0] sm:$0xff]
      %v1935 = vld [vmem:[%s1917 + $0xc8] sm:$0xff]
      %v1936 = vld [vmem:[%s1917 + $0xd8] sm:$0xff]
      %v1937 = vld [vmem:[%s1917 + $0xe0] sm:$0xff]
      %v1938 = vld [vmem:[%s1917 + $0xf0] sm:$0xff]
      %v1939 = vld [vmem:[%s1917 + $0xf8] sm:$0xff]
      %v1940 = vld [vmem:[%s1917 + $0x108] sm:$0xff]
      %v1941 = vld [vmem:[%s1917 + $0x110] sm:$0xff]
      %v1942 = vld [vmem:[%s1917 + $0x120] sm:$0xff]
      %v1943 = vld [vmem:[%s1917 + $0x128] sm:$0xff]
      %v1944 = vld [vmem:[%s1917 + $0x138] sm:$0xff]
      %v1945 = vld [vmem:[%s1917 + $0x140] sm:$0xff]
      %v1946 = vld [vmem:[%s1917 + $0x150] sm:$0xff]
      %v1947 = vld [vmem:[%s1917 + $0x158] sm:$0xff]
      %v1948 = vld [vmem:[%s1917 + $0x168] sm:$0xff]
      %v1949 = vld [vmem:[%s1917 + $0x170] sm:$0xff]
      %v1950 = vpack.c.bf16 %v1919, %v1918
      %v1951 = vpack.c.bf16 %v1921, %v1920
      %v1952 = vpack.c.bf16 %v1923, %v1922
      %v1953 = vpack.c.bf16 %v1925, %v1924
      %v1954 = vpack.c.bf16 %v1927, %v1926
      %v1955 = vpack.c.bf16 %v1929, %v1928
      %v1956 = vpack.c.bf16 %v1931, %v1930
      %v1957 = vpack.c.bf16 %v1933, %v1932
      %v1958 = vpack.c.bf16 %v1935, %v1934
      %v1959 = vpack.c.bf16 %v1937, %v1936
      %v1960 = vpack.c.bf16 %v1939, %v1938
      %v1961 = vpack.c.bf16 %v1941, %v1940
      %v1962 = vpack.c.bf16 %v1943, %v1942
      %v1963 = vpack.c.bf16 %v1945, %v1944
      %v1964 = vpack.c.bf16 %v1947, %v1946
      %v1965 = vpack.c.bf16 %v1949, %v1948
      %s1966 = scalar_lea.vmem %s3, 12
      %v1967 = vld [vmem:[%s1966] sm:$0x3]
      %v1969 = vsel %vm388, %v1950, 0
      %v1972 = vsel %vm388, %v1951, 0
      %v1975 = vsel %vm388, %v1952, 0
      %v1978 = vsel %vm388, %v1953, 0
      %v1981 = vsel %vm388, %v1954, 0
      %v1984 = vsel %vm388, %v1955, 0
      %v1987 = vsel %vm388, %v1956, 0
      %v1990 = vsel %vm388, %v1957, 0
      %v1993 = vsel %vm388, %v1958, 0
      %v1996 = vsel %vm388, %v1959, 0
      %v1999 = vsel %vm388, %v1960, 0
      %v2002 = vsel %vm388, %v1961, 0
      %v2005 = vsel %vm388, %v1962, 0
      %v2008 = vsel %vm388, %v1963, 0
      %v2011 = vsel %vm388, %v1964, 0
      %v2014 = vsel %vm388, %v1965, 0
      %v2017 = vsel %vm796, %v1967, 0
      %2019 = vmatpush.bf16.msra.mxu0 0
      %2020 = vmatpush.bf16.msra.mxu0 0
      %2021 = vmatpush.bf16.msra.mxu0 0
      %2022 = vmatpush.bf16.msra.mxu0 0
      %2023 = vmatpush.bf16.msra.mxu0 0
      %2024 = vmatpush.bf16.msra.mxu0 0
      %2025 = vmatpush.bf16.msra.mxu0 0
      %2026 = vmatpush.bf16.msra.mxu0 %v2017
      %2027 = vmatmul.bf16.gmra.mxu0 %v1969
      %v2028 = vpop.f32.mrf.mxu0
      %v2029 = vadd.f32 0.0, %v2028
      %v2030 = vpop.f32.mrf.mxu0
      %v2031 = vadd.f32 0.0, %v2030
      %2032 = vmatmul.bf16.gmra.mxu0 %v1972
      %v2033 = vpop.f32.mrf.mxu0
      %v2034 = vadd.f32 0.0, %v2033
      %v2035 = vpop.f32.mrf.mxu0
      %v2036 = vadd.f32 0.0, %v2035
      %2037 = vmatmul.bf16.gmra.mxu0 %v1975
      %v2038 = vpop.f32.mrf.mxu0
      %v2039 = vadd.f32 0.0, %v2038
      %v2040 = vpop.f32.mrf.mxu0
      %v2041 = vadd.f32 0.0, %v2040
      %2042 = vmatmul.bf16.gmra.mxu0 %v1978
      %v2043 = vpop.f32.mrf.mxu0
      %v2044 = vadd.f32 0.0, %v2043
      %v2045 = vpop.f32.mrf.mxu0
      %v2046 = vadd.f32 0.0, %v2045
      %2047 = vmatmul.bf16.gmra.mxu0 %v1981
      %v2048 = vpop.f32.mrf.mxu0
      %v2049 = vadd.f32 0.0, %v2048
      %v2050 = vpop.f32.mrf.mxu0
      %v2051 = vadd.f32 0.0, %v2050
      %2052 = vmatmul.bf16.gmra.mxu0 %v1984
      %v2053 = vpop.f32.mrf.mxu0
      %v2054 = vadd.f32 0.0, %v2053
      %v2055 = vpop.f32.mrf.mxu0
      %v2056 = vadd.f32 0.0, %v2055
      %2057 = vmatmul.bf16.gmra.mxu0 %v1987
      %v2058 = vpop.f32.mrf.mxu0
      %v2059 = vadd.f32 0.0, %v2058
      %v2060 = vpop.f32.mrf.mxu0
      %v2061 = vadd.f32 0.0, %v2060
      %2062 = vmatmul.bf16.gmra.mxu0 %v1990
      %v2063 = vpop.f32.mrf.mxu0
      %v2064 = vadd.f32 0.0, %v2063
      %v2065 = vpop.f32.mrf.mxu0
      %v2066 = vadd.f32 0.0, %v2065
      %2067 = vmatmul.bf16.gmra.mxu0 %v1993
      %v2068 = vpop.f32.mrf.mxu0
      %v2069 = vadd.f32 0.0, %v2068
      %v2070 = vpop.f32.mrf.mxu0
      %v2071 = vadd.f32 0.0, %v2070
      %2072 = vmatmul.bf16.gmra.mxu0 %v1996
      %v2073 = vpop.f32.mrf.mxu0
      %v2074 = vadd.f32 0.0, %v2073
      %v2075 = vpop.f32.mrf.mxu0
      %v2076 = vadd.f32 0.0, %v2075
      %2077 = vmatmul.bf16.gmra.mxu0 %v1999
      %v2078 = vpop.f32.mrf.mxu0
      %v2079 = vadd.f32 0.0, %v2078
      %v2080 = vpop.f32.mrf.mxu0
      %v2081 = vadd.f32 0.0, %v2080
      %2082 = vmatmul.bf16.gmra.mxu0 %v2002
      %v2083 = vpop.f32.mrf.mxu0
      %v2084 = vadd.f32 0.0, %v2083
      %v2085 = vpop.f32.mrf.mxu0
      %v2086 = vadd.f32 0.0, %v2085
      %2087 = vmatmul.bf16.gmra.mxu0 %v2005
      %v2088 = vpop.f32.mrf.mxu0
      %v2089 = vadd.f32 0.0, %v2088
      %v2090 = vpop.f32.mrf.mxu0
      %v2091 = vadd.f32 0.0, %v2090
      %2092 = vmatmul.bf16.gmra.mxu0 %v2008
      %v2093 = vpop.f32.mrf.mxu0
      %v2094 = vadd.f32 0.0, %v2093
      %v2095 = vpop.f32.mrf.mxu0
      %v2096 = vadd.f32 0.0, %v2095
      %2097 = vmatmul.bf16.gmra.mxu0 %v2011
      %v2098 = vpop.f32.mrf.mxu0
      %v2099 = vadd.f32 0.0, %v2098
      %v2100 = vpop.f32.mrf.mxu0
      %v2101 = vadd.f32 0.0, %v2100
      %2102 = vmatmul.bf16.gmra.mxu0 %v2014
      %v2103 = vpop.f32.mrf.mxu0
      %v2104 = vadd.f32 0.0, %v2103
      %v2105 = vpop.f32.mrf.mxu0
      %v2106 = vadd.f32 0.0, %v2105
      %2107 = vdwg.mxu0
      %v2108 = vadd.f32 %v1885, %v2029
      %v2109 = vadd.f32 %v1886, %v2031
      %v2110 = vadd.f32 %v1887, %v2034
      %v2111 = vadd.f32 %v1888, %v2036
      %v2112 = vadd.f32 %v1889, %v2039
      %v2113 = vadd.f32 %v1890, %v2041
      %v2114 = vadd.f32 %v1891, %v2044
      %v2115 = vadd.f32 %v1892, %v2046
      %v2116 = vadd.f32 %v1893, %v2049
      %v2117 = vadd.f32 %v1894, %v2051
      %v2118 = vadd.f32 %v1895, %v2054
      %v2119 = vadd.f32 %v1896, %v2056
      %v2120 = vadd.f32 %v1897, %v2059
      %v2121 = vadd.f32 %v1898, %v2061
      %v2122 = vadd.f32 %v1899, %v2064
      %v2123 = vadd.f32 %v1900, %v2066
      %v2124 = vadd.f32 %v1901, %v2069
      %v2125 = vadd.f32 %v1902, %v2071
      %v2126 = vadd.f32 %v1903, %v2074
      %v2127 = vadd.f32 %v1904, %v2076
      %v2128 = vadd.f32 %v1905, %v2079
      %v2129 = vadd.f32 %v1906, %v2081
      %v2130 = vadd.f32 %v1907, %v2084
      %v2131 = vadd.f32 %v1908, %v2086
      %v2132 = vadd.f32 %v1909, %v2089
      %v2133 = vadd.f32 %v1910, %v2091
      %v2134 = vadd.f32 %v1911, %v2094
      %v2135 = vadd.f32 %v1912, %v2096
      %v2136 = vadd.f32 %v1913, %v2099
      %v2137 = vadd.f32 %v1914, %v2101
      %v2138 = vadd.f32 %v1915, %v2104
      %v2139 = vadd.f32 %v1916, %v2106
      %v2140 = vld [vmem:[%s1917 + $0x1] sm:$0xff]
      %v2141 = vld [vmem:[%s1917 + $0x9] sm:$0xff]
      %v2142 = vld [vmem:[%s1917 + $0x19] sm:$0xff]
      %v2143 = vld [vmem:[%s1917 + $0x21] sm:$0xff]
      %v2144 = vld [vmem:[%s1917 + $0x31] sm:$0xff]
      %v2145 = vld [vmem:[%s1917 + $0x39] sm:$0xff]
      %v2146 = vld [vmem:[%s1917 + $0x49] sm:$0xff]
      %v2147 = vld [vmem:[%s1917 + $0x51] sm:$0xff]
      %v2148 = vld [vmem:[%s1917 + $0x61] sm:$0xff]
      %v2149 = vld [vmem:[%s1917 + $0x69] sm:$0xff]
      %v2150 = vld [vmem:[%s1917 + $0x79] sm:$0xff]
      %v2151 = vld [vmem:[%s1917 + $0x81] sm:$0xff]
      %v2152 = vld [vmem:[%s1917 + $0x91] sm:$0xff]
      %v2153 = vld [vmem:[%s1917 + $0x99] sm:$0xff]
      %v2154 = vld [vmem:[%s1917 + $0xa9] sm:$0xff]
      %v2155 = vld [vmem:[%s1917 + $0xb1] sm:$0xff]
      %v2156 = vld [vmem:[%s1917 + $0xc1] sm:$0xff]
      %v2157 = vld [vmem:[%s1917 + $0xc9] sm:$0xff]
      %v2158 = vld [vmem:[%s1917 + $0xd9] sm:$0xff]
      %v2159 = vld [vmem:[%s1917 + $0xe1] sm:$0xff]
      %v2160 = vld [vmem:[%s1917 + $0xf1] sm:$0xff]
      %v2161 = vld [vmem:[%s1917 + $0xf9] sm:$0xff]
      %v2162 = vld [vmem:[%s1917 + $0x109] sm:$0xff]
      %v2163 = vld [vmem:[%s1917 + $0x111] sm:$0xff]
      %v2164 = vld [vmem:[%s1917 + $0x121] sm:$0xff]
      %v2165 = vld [vmem:[%s1917 + $0x129] sm:$0xff]
      %v2166 = vld [vmem:[%s1917 + $0x139] sm:$0xff]
      %v2167 = vld [vmem:[%s1917 + $0x141] sm:$0xff]
      %v2168 = vld [vmem:[%s1917 + $0x151] sm:$0xff]
      %v2169 = vld [vmem:[%s1917 + $0x159] sm:$0xff]
      %v2170 = vld [vmem:[%s1917 + $0x169] sm:$0xff]
      %v2171 = vld [vmem:[%s1917 + $0x171] sm:$0xff]
      %v2172 = vpack.c.bf16 %v2141, %v2140
      %v2173 = vpack.c.bf16 %v2143, %v2142
      %v2174 = vpack.c.bf16 %v2145, %v2144
      %v2175 = vpack.c.bf16 %v2147, %v2146
      %v2176 = vpack.c.bf16 %v2149, %v2148
      %v2177 = vpack.c.bf16 %v2151, %v2150
      %v2178 = vpack.c.bf16 %v2153, %v2152
      %v2179 = vpack.c.bf16 %v2155, %v2154
      %v2180 = vpack.c.bf16 %v2157, %v2156
      %v2181 = vpack.c.bf16 %v2159, %v2158
      %v2182 = vpack.c.bf16 %v2161, %v2160
      %v2183 = vpack.c.bf16 %v2163, %v2162
      %v2184 = vpack.c.bf16 %v2165, %v2164
      %v2185 = vpack.c.bf16 %v2167, %v2166
      %v2186 = vpack.c.bf16 %v2169, %v2168
      %v2187 = vpack.c.bf16 %v2171, %v2170
      %s2188 = scalar_lea.vmem %s3, 14
      %v2189 = vld [vmem:[%s2188] sm:$0x3]
      %v2191 = vsel %vm388, %v2172, 0
      %v2194 = vsel %vm388, %v2173, 0
      %v2197 = vsel %vm388, %v2174, 0
      %v2200 = vsel %vm388, %v2175, 0
      %v2203 = vsel %vm388, %v2176, 0
      %v2206 = vsel %vm388, %v2177, 0
      %v2209 = vsel %vm388, %v2178, 0
      %v2212 = vsel %vm388, %v2179, 0
      %v2215 = vsel %vm388, %v2180, 0
      %v2218 = vsel %vm388, %v2181, 0
      %v2221 = vsel %vm388, %v2182, 0
      %v2224 = vsel %vm388, %v2183, 0
      %v2227 = vsel %vm388, %v2184, 0
      %v2230 = vsel %vm388, %v2185, 0
      %v2233 = vsel %vm388, %v2186, 0
      %v2236 = vsel %vm388, %v2187, 0
      %v2239 = vsel %vm796, %v2189, 0
      %2241 = vmatpush.bf16.msra.mxu0 0
      %2242 = vmatpush.bf16.msra.mxu0 0
      %2243 = vmatpush.bf16.msra.mxu0 0
      %2244 = vmatpush.bf16.msra.mxu0 0
      %2245 = vmatpush.bf16.msra.mxu0 0
      %2246 = vmatpush.bf16.msra.mxu0 0
      %2247 = vmatpush.bf16.msra.mxu0 0
      %2248 = vmatpush.bf16.msra.mxu0 %v2239
      %2249 = vmatmul.bf16.gmra.mxu0 %v2191
      %v2250 = vpop.f32.mrf.mxu0
      %v2251 = vadd.f32 0.0, %v2250
      %v2252 = vpop.f32.mrf.mxu0
      %v2253 = vadd.f32 0.0, %v2252
      %2254 = vmatmul.bf16.gmra.mxu0 %v2194
      %v2255 = vpop.f32.mrf.mxu0
      %v2256 = vadd.f32 0.0, %v2255
      %v2257 = vpop.f32.mrf.mxu0
      %v2258 = vadd.f32 0.0, %v2257
      %2259 = vmatmul.bf16.gmra.mxu0 %v2197
      %v2260 = vpop.f32.mrf.mxu0
      %v2261 = vadd.f32 0.0, %v2260
      %v2262 = vpop.f32.mrf.mxu0
      %v2263 = vadd.f32 0.0, %v2262
      %2264 = vmatmul.bf16.gmra.mxu0 %v2200
      %v2265 = vpop.f32.mrf.mxu0
      %v2266 = vadd.f32 0.0, %v2265
      %v2267 = vpop.f32.mrf.mxu0
      %v2268 = vadd.f32 0.0, %v2267
      %2269 = vmatmul.bf16.gmra.mxu0 %v2203
      %v2270 = vpop.f32.mrf.mxu0
      %v2271 = vadd.f32 0.0, %v2270
      %v2272 = vpop.f32.mrf.mxu0
      %v2273 = vadd.f32 0.0, %v2272
      %2274 = vmatmul.bf16.gmra.mxu0 %v2206
      %v2275 = vpop.f32.mrf.mxu0
      %v2276 = vadd.f32 0.0, %v2275
      %v2277 = vpop.f32.mrf.mxu0
      %v2278 = vadd.f32 0.0, %v2277
      %2279 = vmatmul.bf16.gmra.mxu0 %v2209
      %v2280 = vpop.f32.mrf.mxu0
      %v2281 = vadd.f32 0.0, %v2280
      %v2282 = vpop.f32.mrf.mxu0
      %v2283 = vadd.f32 0.0, %v2282
      %2284 = vmatmul.bf16.gmra.mxu0 %v2212
      %v2285 = vpop.f32.mrf.mxu0
      %v2286 = vadd.f32 0.0, %v2285
      %v2287 = vpop.f32.mrf.mxu0
      %v2288 = vadd.f32 0.0, %v2287
      %2289 = vmatmul.bf16.gmra.mxu0 %v2215
      %v2290 = vpop.f32.mrf.mxu0
      %v2291 = vadd.f32 0.0, %v2290
      %v2292 = vpop.f32.mrf.mxu0
      %v2293 = vadd.f32 0.0, %v2292
      %2294 = vmatmul.bf16.gmra.mxu0 %v2218
      %v2295 = vpop.f32.mrf.mxu0
      %v2296 = vadd.f32 0.0, %v2295
      %v2297 = vpop.f32.mrf.mxu0
      %v2298 = vadd.f32 0.0, %v2297
      %2299 = vmatmul.bf16.gmra.mxu0 %v2221
      %v2300 = vpop.f32.mrf.mxu0
      %v2301 = vadd.f32 0.0, %v2300
      %v2302 = vpop.f32.mrf.mxu0
      %v2303 = vadd.f32 0.0, %v2302
      %2304 = vmatmul.bf16.gmra.mxu0 %v2224
      %v2305 = vpop.f32.mrf.mxu0
      %v2306 = vadd.f32 0.0, %v2305
      %v2307 = vpop.f32.mrf.mxu0
      %v2308 = vadd.f32 0.0, %v2307
      %2309 = vmatmul.bf16.gmra.mxu0 %v2227
      %v2310 = vpop.f32.mrf.mxu0
      %v2311 = vadd.f32 0.0, %v2310
      %v2312 = vpop.f32.mrf.mxu0
      %v2313 = vadd.f32 0.0, %v2312
      %2314 = vmatmul.bf16.gmra.mxu0 %v2230
      %v2315 = vpop.f32.mrf.mxu0
      %v2316 = vadd.f32 0.0, %v2315
      %v2317 = vpop.f32.mrf.mxu0
      %v2318 = vadd.f32 0.0, %v2317
      %2319 = vmatmul.bf16.gmra.mxu0 %v2233
      %v2320 = vpop.f32.mrf.mxu0
      %v2321 = vadd.f32 0.0, %v2320
      %v2322 = vpop.f32.mrf.mxu0
      %v2323 = vadd.f32 0.0, %v2322
      %2324 = vmatmul.bf16.gmra.mxu0 %v2236
      %v2325 = vpop.f32.mrf.mxu0
      %v2326 = vadd.f32 0.0, %v2325
      %v2327 = vpop.f32.mrf.mxu0
      %v2328 = vadd.f32 0.0, %v2327
      %2329 = vdwg.mxu0
      %v2330 = vadd.f32 %v2108, %v2251
      %v2331 = vadd.f32 %v2109, %v2253
      %v2332 = vadd.f32 %v2110, %v2256
      %v2333 = vadd.f32 %v2111, %v2258
      %v2334 = vadd.f32 %v2112, %v2261
      %v2335 = vadd.f32 %v2113, %v2263
      %v2336 = vadd.f32 %v2114, %v2266
      %v2337 = vadd.f32 %v2115, %v2268
      %v2338 = vadd.f32 %v2116, %v2271
      %v2339 = vadd.f32 %v2117, %v2273
      %v2340 = vadd.f32 %v2118, %v2276
      %v2341 = vadd.f32 %v2119, %v2278
      %v2342 = vadd.f32 %v2120, %v2281
      %v2343 = vadd.f32 %v2121, %v2283
      %v2344 = vadd.f32 %v2122, %v2286
      %v2345 = vadd.f32 %v2123, %v2288
      %v2346 = vadd.f32 %v2124, %v2291
      %v2347 = vadd.f32 %v2125, %v2293
      %v2348 = vadd.f32 %v2126, %v2296
      %v2349 = vadd.f32 %v2127, %v2298
      %v2350 = vadd.f32 %v2128, %v2301
      %v2351 = vadd.f32 %v2129, %v2303
      %v2352 = vadd.f32 %v2130, %v2306
      %v2353 = vadd.f32 %v2131, %v2308
      %v2354 = vadd.f32 %v2132, %v2311
      %v2355 = vadd.f32 %v2133, %v2313
      %v2356 = vadd.f32 %v2134, %v2316
      %v2357 = vadd.f32 %v2135, %v2318
      %v2358 = vadd.f32 %v2136, %v2321
      %v2359 = vadd.f32 %v2137, %v2323
      %v2360 = vadd.f32 %v2138, %v2326
      %v2361 = vadd.f32 %v2139, %v2328
      %v2362 = vld [vmem:[%s1917 + $0x2] sm:$0xff]
      %v2363 = vld [vmem:[%s1917 + $0xa] sm:$0xff]
      %v2364 = vld [vmem:[%s1917 + $0x1a] sm:$0xff]
      %v2365 = vld [vmem:[%s1917 + $0x22] sm:$0xff]
      %v2366 = vld [vmem:[%s1917 + $0x32] sm:$0xff]
      %v2367 = vld [vmem:[%s1917 + $0x3a] sm:$0xff]
      %v2368 = vld [vmem:[%s1917 + $0x4a] sm:$0xff]
      %v2369 = vld [vmem:[%s1917 + $0x52] sm:$0xff]
      %v2370 = vld [vmem:[%s1917 + $0x62] sm:$0xff]
      %v2371 = vld [vmem:[%s1917 + $0x6a] sm:$0xff]
      %v2372 = vld [vmem:[%s1917 + $0x7a] sm:$0xff]
      %v2373 = vld [vmem:[%s1917 + $0x82] sm:$0xff]
      %v2374 = vld [vmem:[%s1917 + $0x92] sm:$0xff]
      %v2375 = vld [vmem:[%s1917 + $0x9a] sm:$0xff]
      %v2376 = vld [vmem:[%s1917 + $0xaa] sm:$0xff]
      %v2377 = vld [vmem:[%s1917 + $0xb2] sm:$0xff]
      %v2378 = vld [vmem:[%s1917 + $0xc2] sm:$0xff]
      %v2379 = vld [vmem:[%s1917 + $0xca] sm:$0xff]
      %v2380 = vld [vmem:[%s1917 + $0xda] sm:$0xff]
      %v2381 = vld [vmem:[%s1917 + $0xe2] sm:$0xff]
      %v2382 = vld [vmem:[%s1917 + $0xf2] sm:$0xff]
      %v2383 = vld [vmem:[%s1917 + $0xfa] sm:$0xff]
      %v2384 = vld [vmem:[%s1917 + $0x10a] sm:$0xff]
      %v2385 = vld [vmem:[%s1917 + $0x112] sm:$0xff]
      %v2386 = vld [vmem:[%s1917 + $0x122] sm:$0xff]
      %v2387 = vld [vmem:[%s1917 + $0x12a] sm:$0xff]
      %v2388 = vld [vmem:[%s1917 + $0x13a] sm:$0xff]
      %v2389 = vld [vmem:[%s1917 + $0x142] sm:$0xff]
      %v2390 = vld [vmem:[%s1917 + $0x152] sm:$0xff]
      %v2391 = vld [vmem:[%s1917 + $0x15a] sm:$0xff]
      %v2392 = vld [vmem:[%s1917 + $0x16a] sm:$0xff]
      %v2393 = vld [vmem:[%s1917 + $0x172] sm:$0xff]
      %v2394 = vpack.c.bf16 %v2363, %v2362
      %v2395 = vpack.c.bf16 %v2365, %v2364
      %v2396 = vpack.c.bf16 %v2367, %v2366
      %v2397 = vpack.c.bf16 %v2369, %v2368
      %v2398 = vpack.c.bf16 %v2371, %v2370
      %v2399 = vpack.c.bf16 %v2373, %v2372
      %v2400 = vpack.c.bf16 %v2375, %v2374
      %v2401 = vpack.c.bf16 %v2377, %v2376
      %v2402 = vpack.c.bf16 %v2379, %v2378
      %v2403 = vpack.c.bf16 %v2381, %v2380
      %v2404 = vpack.c.bf16 %v2383, %v2382
      %v2405 = vpack.c.bf16 %v2385, %v2384
      %v2406 = vpack.c.bf16 %v2387, %v2386
      %v2407 = vpack.c.bf16 %v2389, %v2388
      %v2408 = vpack.c.bf16 %v2391, %v2390
      %v2409 = vpack.c.bf16 %v2393, %v2392
      %s2410 = scalar_lea.vmem %s3, 16
      %v2411 = vld [vmem:[%s2410] sm:$0x3]
      %v2413 = vsel %vm388, %v2394, 0
      %v2416 = vsel %vm388, %v2395, 0
      %v2419 = vsel %vm388, %v2396, 0
      %v2422 = vsel %vm388, %v2397, 0
      %v2425 = vsel %vm388, %v2398, 0
      %v2428 = vsel %vm388, %v2399, 0
      %v2431 = vsel %vm388, %v2400, 0
      %v2434 = vsel %vm388, %v2401, 0
      %v2437 = vsel %vm388, %v2402, 0
      %v2440 = vsel %vm388, %v2403, 0
      %v2443 = vsel %vm388, %v2404, 0
      %v2446 = vsel %vm388, %v2405, 0
      %v2449 = vsel %vm388, %v2406, 0
      %v2452 = vsel %vm388, %v2407, 0
      %v2455 = vsel %vm388, %v2408, 0
      %v2458 = vsel %vm388, %v2409, 0
      %v2461 = vsel %vm796, %v2411, 0
      %2463 = vmatpush.bf16.msra.mxu0 0
      %2464 = vmatpush.bf16.msra.mxu0 0
      %2465 = vmatpush.bf16.msra.mxu0 0
      %2466 = vmatpush.bf16.msra.mxu0 0
      %2467 = vmatpush.bf16.msra.mxu0 0
      %2468 = vmatpush.bf16.msra.mxu0 0
      %2469 = vmatpush.bf16.msra.mxu0 0
      %2470 = vmatpush.bf16.msra.mxu0 %v2461
      %2471 = vmatmul.bf16.gmra.mxu0 %v2413
      %v2472 = vpop.f32.mrf.mxu0
      %v2473 = vadd.f32 0.0, %v2472
      %v2474 = vpop.f32.mrf.mxu0
      %v2475 = vadd.f32 0.0, %v2474
      %2476 = vmatmul.bf16.gmra.mxu0 %v2416
      %v2477 = vpop.f32.mrf.mxu0
      %v2478 = vadd.f32 0.0, %v2477
      %v2479 = vpop.f32.mrf.mxu0
      %v2480 = vadd.f32 0.0, %v2479
      %2481 = vmatmul.bf16.gmra.mxu0 %v2419
      %v2482 = vpop.f32.mrf.mxu0
      %v2483 = vadd.f32 0.0, %v2482
      %v2484 = vpop.f32.mrf.mxu0
      %v2485 = vadd.f32 0.0, %v2484
      %2486 = vmatmul.bf16.gmra.mxu0 %v2422
      %v2487 = vpop.f32.mrf.mxu0
      %v2488 = vadd.f32 0.0, %v2487
      %v2489 = vpop.f32.mrf.mxu0
      %v2490 = vadd.f32 0.0, %v2489
      %2491 = vmatmul.bf16.gmra.mxu0 %v2425
      %v2492 = vpop.f32.mrf.mxu0
      %v2493 = vadd.f32 0.0, %v2492
      %v2494 = vpop.f32.mrf.mxu0
      %v2495 = vadd.f32 0.0, %v2494
      %2496 = vmatmul.bf16.gmra.mxu0 %v2428
      %v2497 = vpop.f32.mrf.mxu0
      %v2498 = vadd.f32 0.0, %v2497
      %v2499 = vpop.f32.mrf.mxu0
      %v2500 = vadd.f32 0.0, %v2499
      %2501 = vmatmul.bf16.gmra.mxu0 %v2431
      %v2502 = vpop.f32.mrf.mxu0
      %v2503 = vadd.f32 0.0, %v2502
      %v2504 = vpop.f32.mrf.mxu0
      %v2505 = vadd.f32 0.0, %v2504
      %2506 = vmatmul.bf16.gmra.mxu0 %v2434
      %v2507 = vpop.f32.mrf.mxu0
      %v2508 = vadd.f32 0.0, %v2507
      %v2509 = vpop.f32.mrf.mxu0
      %v2510 = vadd.f32 0.0, %v2509
      %2511 = vmatmul.bf16.gmra.mxu0 %v2437
      %v2512 = vpop.f32.mrf.mxu0
      %v2513 = vadd.f32 0.0, %v2512
      %v2514 = vpop.f32.mrf.mxu0
      %v2515 = vadd.f32 0.0, %v2514
      %2516 = vmatmul.bf16.gmra.mxu0 %v2440
      %v2517 = vpop.f32.mrf.mxu0
      %v2518 = vadd.f32 0.0, %v2517
      %v2519 = vpop.f32.mrf.mxu0
      %v2520 = vadd.f32 0.0, %v2519
      %2521 = vmatmul.bf16.gmra.mxu0 %v2443
      %v2522 = vpop.f32.mrf.mxu0
      %v2523 = vadd.f32 0.0, %v2522
      %v2524 = vpop.f32.mrf.mxu0
      %v2525 = vadd.f32 0.0, %v2524
      %2526 = vmatmul.bf16.gmra.mxu0 %v2446
      %v2527 = vpop.f32.mrf.mxu0
      %v2528 = vadd.f32 0.0, %v2527
      %v2529 = vpop.f32.mrf.mxu0
      %v2530 = vadd.f32 0.0, %v2529
      %2531 = vmatmul.bf16.gmra.mxu0 %v2449
      %v2532 = vpop.f32.mrf.mxu0
      %v2533 = vadd.f32 0.0, %v2532
      %v2534 = vpop.f32.mrf.mxu0
      %v2535 = vadd.f32 0.0, %v2534
      %2536 = vmatmul.bf16.gmra.mxu0 %v2452
      %v2537 = vpop.f32.mrf.mxu0
      %v2538 = vadd.f32 0.0, %v2537
      %v2539 = vpop.f32.mrf.mxu0
      %v2540 = vadd.f32 0.0, %v2539
      %2541 = vmatmul.bf16.gmra.mxu0 %v2455
      %v2542 = vpop.f32.mrf.mxu0
      %v2543 = vadd.f32 0.0, %v2542
      %v2544 = vpop.f32.mrf.mxu0
      %v2545 = vadd.f32 0.0, %v2544
      %2546 = vmatmul.bf16.gmra.mxu0 %v2458
      %v2547 = vpop.f32.mrf.mxu0
      %v2548 = vadd.f32 0.0, %v2547
      %v2549 = vpop.f32.mrf.mxu0
      %v2550 = vadd.f32 0.0, %v2549
      %2551 = vdwg.mxu0
      %v2552 = vadd.f32 %v2330, %v2473
      %v2553 = vadd.f32 %v2331, %v2475
      %v2554 = vadd.f32 %v2332, %v2478
      %v2555 = vadd.f32 %v2333, %v2480
      %v2556 = vadd.f32 %v2334, %v2483
      %v2557 = vadd.f32 %v2335, %v2485
      %v2558 = vadd.f32 %v2336, %v2488
      %v2559 = vadd.f32 %v2337, %v2490
      %v2560 = vadd.f32 %v2338, %v2493
      %v2561 = vadd.f32 %v2339, %v2495
      %v2562 = vadd.f32 %v2340, %v2498
      %v2563 = vadd.f32 %v2341, %v2500
      %v2564 = vadd.f32 %v2342, %v2503
      %v2565 = vadd.f32 %v2343, %v2505
      %v2566 = vadd.f32 %v2344, %v2508
      %v2567 = vadd.f32 %v2345, %v2510
      %v2568 = vadd.f32 %v2346, %v2513
      %v2569 = vadd.f32 %v2347, %v2515
      %v2570 = vadd.f32 %v2348, %v2518
      %v2571 = vadd.f32 %v2349, %v2520
      %v2572 = vadd.f32 %v2350, %v2523
      %v2573 = vadd.f32 %v2351, %v2525
      %v2574 = vadd.f32 %v2352, %v2528
      %v2575 = vadd.f32 %v2353, %v2530
      %v2576 = vadd.f32 %v2354, %v2533
      %v2577 = vadd.f32 %v2355, %v2535
      %v2578 = vadd.f32 %v2356, %v2538
      %v2579 = vadd.f32 %v2357, %v2540
      %v2580 = vadd.f32 %v2358, %v2543
      %v2581 = vadd.f32 %v2359, %v2545
      %v2582 = vadd.f32 %v2360, %v2548
      %v2583 = vadd.f32 %v2361, %v2550
      %v2584 = vld [vmem:[%s4] sm:$0x1]
      %v2586 = vperm.slane %v2584, 0
      %v2588 = vadd.f32 %v2552, %v2586
      %v2589 = vadd.f32 %v2553, %v2586
      %v2590 = vadd.f32 %v2554, %v2586
      %v2591 = vadd.f32 %v2555, %v2586
      %v2592 = vadd.f32 %v2556, %v2586
      %v2593 = vadd.f32 %v2557, %v2586
      %v2594 = vadd.f32 %v2558, %v2586
      %v2595 = vadd.f32 %v2559, %v2586
      %v2596 = vadd.f32 %v2560, %v2586
      %v2597 = vadd.f32 %v2561, %v2586
      %v2598 = vadd.f32 %v2562, %v2586
      %v2599 = vadd.f32 %v2563, %v2586
      %v2600 = vadd.f32 %v2564, %v2586
      %v2601 = vadd.f32 %v2565, %v2586
      %v2602 = vadd.f32 %v2566, %v2586
      %v2603 = vadd.f32 %v2567, %v2586
      %v2604 = vadd.f32 %v2568, %v2586
      %v2605 = vadd.f32 %v2569, %v2586
      %v2606 = vadd.f32 %v2570, %v2586
      %v2607 = vadd.f32 %v2571, %v2586
      %v2608 = vadd.f32 %v2572, %v2586
      %v2609 = vadd.f32 %v2573, %v2586
      %v2610 = vadd.f32 %v2574, %v2586
      %v2611 = vadd.f32 %v2575, %v2586
      %v2612 = vadd.f32 %v2576, %v2586
      %v2613 = vadd.f32 %v2577, %v2586
      %v2614 = vadd.f32 %v2578, %v2586
      %v2615 = vadd.f32 %v2579, %v2586
      %v2616 = vadd.f32 %v2580, %v2586
      %v2617 = vadd.f32 %v2581, %v2586
      %v2618 = vadd.f32 %v2582, %v2586
      %v2619 = vadd.f32 %v2583, %v2586
      %v2620 = vld [vmem:[%s5] sm:$0x1]
      %v2622 = vperm.slane %v2620, 0
      %v2624 = vmul.f32 %v2588, %v2622
      %v2625 = vmul.f32 %v2589, %v2622
      %v2626 = vmul.f32 %v2590, %v2622
      %v2627 = vmul.f32 %v2591, %v2622
      %v2628 = vmul.f32 %v2592, %v2622
      %v2629 = vmul.f32 %v2593, %v2622
      %v2630 = vmul.f32 %v2594, %v2622
      %v2631 = vmul.f32 %v2595, %v2622
      %v2632 = vmul.f32 %v2596, %v2622
      %v2633 = vmul.f32 %v2597, %v2622
      %v2634 = vmul.f32 %v2598, %v2622
      %v2635 = vmul.f32 %v2599, %v2622
      %v2636 = vmul.f32 %v2600, %v2622
      %v2637 = vmul.f32 %v2601, %v2622
      %v2638 = vmul.f32 %v2602, %v2622
      %v2639 = vmul.f32 %v2603, %v2622
      %v2640 = vmul.f32 %v2604, %v2622
      %v2641 = vmul.f32 %v2605, %v2622
      %v2642 = vmul.f32 %v2606, %v2622
      %v2643 = vmul.f32 %v2607, %v2622
      %v2644 = vmul.f32 %v2608, %v2622
      %v2645 = vmul.f32 %v2609, %v2622
      %v2646 = vmul.f32 %v2610, %v2622
      %v2647 = vmul.f32 %v2611, %v2622
      %v2648 = vmul.f32 %v2612, %v2622
      %v2649 = vmul.f32 %v2613, %v2622
      %v2650 = vmul.f32 %v2614, %v2622
      %v2651 = vmul.f32 %v2615, %v2622
      %v2652 = vmul.f32 %v2616, %v2622
      %v2653 = vmul.f32 %v2617, %v2622
      %v2654 = vmul.f32 %v2618, %v2622
      %v2655 = vmul.f32 %v2619, %v2622
      %v2656 = vld [vmem:[%s6] sm:$0x1]
      %v2658 = vperm.slane %v2656, 0
      %v2660 = vadd.f32 %v2624, %v2658
      %v2661 = vadd.f32 %v2625, %v2658
      %v2662 = vadd.f32 %v2626, %v2658
      %v2663 = vadd.f32 %v2627, %v2658
      %v2664 = vadd.f32 %v2628, %v2658
      %v2665 = vadd.f32 %v2629, %v2658
      %v2666 = vadd.f32 %v2630, %v2658
      %v2667 = vadd.f32 %v2631, %v2658
      %v2668 = vadd.f32 %v2632, %v2658
      %v2669 = vadd.f32 %v2633, %v2658
      %v2670 = vadd.f32 %v2634, %v2658
      %v2671 = vadd.f32 %v2635, %v2658
      %v2672 = vadd.f32 %v2636, %v2658
      %v2673 = vadd.f32 %v2637, %v2658
      %v2674 = vadd.f32 %v2638, %v2658
      %v2675 = vadd.f32 %v2639, %v2658
      %v2676 = vadd.f32 %v2640, %v2658
      %v2677 = vadd.f32 %v2641, %v2658
      %v2678 = vadd.f32 %v2642, %v2658
      %v2679 = vadd.f32 %v2643, %v2658
      %v2680 = vadd.f32 %v2644, %v2658
      %v2681 = vadd.f32 %v2645, %v2658
      %v2682 = vadd.f32 %v2646, %v2658
      %v2683 = vadd.f32 %v2647, %v2658
      %v2684 = vadd.f32 %v2648, %v2658
      %v2685 = vadd.f32 %v2649, %v2658
      %v2686 = vadd.f32 %v2650, %v2658
      %v2687 = vadd.f32 %v2651, %v2658
      %v2688 = vadd.f32 %v2652, %v2658
      %v2689 = vadd.f32 %v2653, %v2658
      %v2690 = vadd.f32 %v2654, %v2658
      %v2691 = vadd.f32 %v2655, %v2658
      %v2692 = vmax.f32 %v2660, 0.0
      %v2693 = vmax.f32 %v2661, 0.0
      %v2694 = vmax.f32 %v2662, 0.0
      %v2695 = vmax.f32 %v2663, 0.0
      %v2696 = vmax.f32 %v2664, 0.0
      %v2697 = vmax.f32 %v2665, 0.0
      %v2698 = vmax.f32 %v2666, 0.0
      %v2699 = vmax.f32 %v2667, 0.0
      %v2700 = vmax.f32 %v2668, 0.0
      %v2701 = vmax.f32 %v2669, 0.0
      %v2702 = vmax.f32 %v2670, 0.0
      %v2703 = vmax.f32 %v2671, 0.0
      %v2704 = vmax.f32 %v2672, 0.0
      %v2705 = vmax.f32 %v2673, 0.0
      %v2706 = vmax.f32 %v2674, 0.0
      %v2707 = vmax.f32 %v2675, 0.0
      %v2708 = vmax.f32 %v2676, 0.0
      %v2709 = vmax.f32 %v2677, 0.0
      %v2710 = vmax.f32 %v2678, 0.0
      %v2711 = vmax.f32 %v2679, 0.0
      %v2712 = vmax.f32 %v2680, 0.0
      %v2713 = vmax.f32 %v2681, 0.0
      %v2714 = vmax.f32 %v2682, 0.0
      %v2715 = vmax.f32 %v2683, 0.0
      %v2716 = vmax.f32 %v2684, 0.0
      %v2717 = vmax.f32 %v2685, 0.0
      %v2718 = vmax.f32 %v2686, 0.0
      %v2719 = vmax.f32 %v2687, 0.0
      %v2720 = vmax.f32 %v2688, 0.0
      %v2721 = vmax.f32 %v2689, 0.0
      %v2722 = vmax.f32 %v2690, 0.0
      %v2723 = vmax.f32 %v2691, 0.0
      %s2724 = scalar_lea.vmem [#allocation3], 24
      %2725 = vst.msk [vmem:[%s2724 + $0x1] sm:$0xff] %vm434, %v2692
      %2726 = vst.msk [vmem:[%s2724 + $0x9] sm:$0xff] %vm434, %v2693
      %2727 = vst.msk [vmem:[%s2724 + $0x19] sm:$0xff] %vm434, %v2694
      %2728 = vst.msk [vmem:[%s2724 + $0x21] sm:$0xff] %vm434, %v2695
      %2729 = vst.msk [vmem:[%s2724 + $0x31] sm:$0xff] %vm434, %v2696
      %2730 = vst.msk [vmem:[%s2724 + $0x39] sm:$0xff] %vm434, %v2697
      %2731 = vst.msk [vmem:[%s2724 + $0x49] sm:$0xff] %vm434, %v2698
      %2732 = vst.msk [vmem:[%s2724 + $0x51] sm:$0xff] %vm434, %v2699
      %2733 = vst.msk [vmem:[%s2724 + $0x61] sm:$0xff] %vm434, %v2700
      %2734 = vst.msk [vmem:[%s2724 + $0x69] sm:$0xff] %vm434, %v2701
      %2735 = vst.msk [vmem:[%s2724 + $0x79] sm:$0xff] %vm434, %v2702
      %2736 = vst.msk [vmem:[%s2724 + $0x81] sm:$0xff] %vm434, %v2703
      %2737 = vst.msk [vmem:[%s2724 + $0x91] sm:$0xff] %vm434, %v2704
      %2738 = vst.msk [vmem:[%s2724 + $0x99] sm:$0xff] %vm434, %v2705
      %2739 = vst.msk [vmem:[%s2724 + $0xa9] sm:$0xff] %vm434, %v2706
      %2740 = vst.msk [vmem:[%s2724 + $0xb1] sm:$0xff] %vm434, %v2707
      %2741 = vst.msk [vmem:[%s2724 + $0xc1] sm:$0xff] %vm434, %v2708
      %2742 = vst.msk [vmem:[%s2724 + $0xc9] sm:$0xff] %vm434, %v2709
      %2743 = vst.msk [vmem:[%s2724 + $0xd9] sm:$0xff] %vm434, %v2710
      %2744 = vst.msk [vmem:[%s2724 + $0xe1] sm:$0xff] %vm434, %v2711
      %2745 = vst.msk [vmem:[%s2724 + $0xf1] sm:$0xff] %vm434, %v2712
      %2746 = vst.msk [vmem:[%s2724 + $0xf9] sm:$0xff] %vm434, %v2713
      %2747 = vst.msk [vmem:[%s2724 + $0x109] sm:$0xff] %vm434, %v2714
      %2748 = vst.msk [vmem:[%s2724 + $0x111] sm:$0xff] %vm434, %v2715
      %2749 = vst.msk [vmem:[%s2724 + $0x121] sm:$0xff] %vm434, %v2716
      %2750 = vst.msk [vmem:[%s2724 + $0x129] sm:$0xff] %vm434, %v2717
      %2751 = vst.msk [vmem:[%s2724 + $0x139] sm:$0xff] %vm434, %v2718
      %2752 = vst.msk [vmem:[%s2724 + $0x141] sm:$0xff] %vm434, %v2719
      %2753 = vst.msk [vmem:[%s2724 + $0x151] sm:$0xff] %vm434, %v2720
      %2754 = vst.msk [vmem:[%s2724 + $0x159] sm:$0xff] %vm434, %v2721
      %2755 = vst.msk [vmem:[%s2724 + $0x169] sm:$0xff] %vm434, %v2722
      %2756 = vst.msk [vmem:[%s2724 + $0x171] sm:$0xff] %vm434, %v2723
      %v2757 = vld [vmem:[#allocation3] ss:$2 sm:$0xff]
      %s2758 = scalar_lea.vmem [#allocation3], 48
      %v2759 = vld [vmem:[%s2758] ss:$2 sm:$0xff]
      %s2760 = scalar_lea.vmem [#allocation3], 96
      %v2761 = vld [vmem:[%s2760] ss:$2 sm:$0xff]
      %s2762 = scalar_lea.vmem [#allocation3], 144
      %v2763 = vld [vmem:[%s2762] ss:$2 sm:$0xff]
      %s2764 = scalar_lea.vmem [#allocation3], 192
      %v2765 = vld [vmem:[%s2764] ss:$2 sm:$0xff]
      %s2766 = scalar_lea.vmem [#allocation3], 240
      %v2767 = vld [vmem:[%s2766] ss:$2 sm:$0xff]
      %s2768 = scalar_lea.vmem [#allocation3], 288
      %v2769 = vld [vmem:[%s2768] ss:$2 sm:$0xff]
      %s2770 = scalar_lea.vmem [#allocation3], 336
      %v2771 = vld [vmem:[%s2770] ss:$2 sm:$0xff]
      %v2772 = vpack.c.bf16 %v2759, %v2757
      %v2773 = vpack.c.bf16 %v2763, %v2761
      %v2774 = vpack.c.bf16 %v2767, %v2765
      %v2775 = vpack.c.bf16 %v2771, %v2769
      %v2776 = vld [vmem:[%s7] sm:$0xf]
      %s2777 = scalar_lea.vmem [#allocation3], 1
      %v2778 = vld [vmem:[%s2777] ss:$2 sm:$0xff]
      %s2779 = scalar_lea.vmem [#allocation3], 49
      %v2780 = vld [vmem:[%s2779] ss:$2 sm:$0xff]
      %s2781 = scalar_lea.vmem [#allocation3], 97
      %v2782 = vld [vmem:[%s2781] ss:$2 sm:$0xff]
      %s2783 = scalar_lea.vmem [#allocation3], 145
      %v2784 = vld [vmem:[%s2783] ss:$2 sm:$0xff]
      %s2785 = scalar_lea.vmem [#allocation3], 193
      %v2786 = vld [vmem:[%s2785] ss:$2 sm:$0xff]
      %s2787 = scalar_lea.vmem [#allocation3], 241
      %v2788 = vld [vmem:[%s2787] ss:$2 sm:$0xff]
      %s2789 = scalar_lea.vmem [#allocation3], 289
      %v2790 = vld [vmem:[%s2789] ss:$2 sm:$0xff]
      %s2791 = scalar_lea.vmem [#allocation3], 337
      %v2792 = vld [vmem:[%s2791] ss:$2 sm:$0xff]
      %v2793 = vpack.c.bf16 %v2780, %v2778
      %v2794 = vpack.c.bf16 %v2784, %v2782
      %v2795 = vpack.c.bf16 %v2788, %v2786
      %v2796 = vpack.c.bf16 %v2792, %v2790
      %s2797 = scalar_lea.vmem %s7, 4
      %v2798 = vld [vmem:[%s2797] sm:$0xf]
      %v2800 = vsel %vm434, %v2793, 0
      %v2803 = vsel %vm434, %v2794, 0
      %v2806 = vsel %vm434, %v2795, 0
      %v2809 = vsel %vm434, %v2796, 0
      %vm2811 = vcmask 1043456
      %v2813 = vsel %vm2811, %v2798, 0
      %2815 = vmatpush.bf16.msra.mxu0 0
      %2816 = vmatpush.bf16.msra.mxu0 0
      %2817 = vmatpush.bf16.msra.mxu0 0
      %2818 = vmatpush.bf16.msra.mxu0 0
      %2819 = vmatpush.bf16.msra.mxu0 0
      %2820 = vmatpush.bf16.msra.mxu0 0
      %2821 = vmatpush.bf16.msra.mxu0 0
      %2822 = vmatpush.bf16.msra.mxu0 %v2813
      %2823 = vmatmul.bf16.gmra.mxu0 %v2800
      %v2824 = vpop.f32.mrf.mxu0
      %v2825 = vadd.f32 0.0, %v2824
      %v2826 = vpop.f32.mrf.mxu0
      %v2827 = vadd.f32 0.0, %v2826
      %2828 = vmatmul.bf16.gmra.mxu0 %v2803
      %v2829 = vpop.f32.mrf.mxu0
      %v2830 = vadd.f32 0.0, %v2829
      %v2831 = vpop.f32.mrf.mxu0
      %v2832 = vadd.f32 0.0, %v2831
      %2833 = vmatmul.bf16.gmra.mxu0 %v2806
      %v2834 = vpop.f32.mrf.mxu0
      %v2835 = vadd.f32 0.0, %v2834
      %v2836 = vpop.f32.mrf.mxu0
      %v2837 = vadd.f32 0.0, %v2836
      %2838 = vmatmul.bf16.gmra.mxu0 %v2809
      %v2839 = vpop.f32.mrf.mxu0
      %v2840 = vadd.f32 0.0, %v2839
      %v2841 = vpop.f32.mrf.mxu0
      %v2842 = vadd.f32 0.0, %v2841
      %2843 = vdwg.mxu0
      %v2845 = vsel %vm434, %v2772, 0
      %v2848 = vsel %vm434, %v2773, 0
      %v2851 = vsel %vm434, %v2774, 0
      %v2854 = vsel %vm434, %v2775, 0
      %v2857 = vsel %vm2811, %v2776, 0
      %2859 = vmatpush.bf16.msra.mxu0 0
      %2860 = vmatpush.bf16.msra.mxu0 0
      %2861 = vmatpush.bf16.msra.mxu0 0
      %2862 = vmatpush.bf16.msra.mxu0 0
      %2863 = vmatpush.bf16.msra.mxu0 0
      %2864 = vmatpush.bf16.msra.mxu0 0
      %2865 = vmatpush.bf16.msra.mxu0 0
      %2866 = vmatpush.bf16.msra.mxu0 %v2857
      %2867 = vmatmul.bf16.gmra.mxu0 %v2845
      %v2868 = vpop.f32.mrf.mxu0
      %v2869 = vadd.f32 %v2825, %v2868
      %v2870 = vpop.f32.mrf.mxu0
      %v2871 = vadd.f32 %v2827, %v2870
      %2872 = vmatmul.bf16.gmra.mxu0 %v2848
      %v2873 = vpop.f32.mrf.mxu0
      %v2874 = vadd.f32 %v2830, %v2873
      %v2875 = vpop.f32.mrf.mxu0
      %v2876 = vadd.f32 %v2832, %v2875
      %2877 = vmatmul.bf16.gmra.mxu0 %v2851
      %v2878 = vpop.f32.mrf.mxu0
      %v2879 = vadd.f32 %v2835, %v2878
      %v2880 = vpop.f32.mrf.mxu0
      %v2881 = vadd.f32 %v2837, %v2880
      %2882 = vmatmul.bf16.gmra.mxu0 %v2854
      %v2883 = vpop.f32.mrf.mxu0
      %v2884 = vadd.f32 %v2840, %v2883
      %v2885 = vpop.f32.mrf.mxu0
      %v2886 = vadd.f32 %v2842, %v2885
      %2887 = vdwg.mxu0
      %s2888 = scalar_lea.vmem [#allocation3], 2
      %v2889 = vld [vmem:[%s2888] ss:$2 sm:$0xff]
      %s2890 = scalar_lea.vmem [#allocation3], 50
      %v2891 = vld [vmem:[%s2890] ss:$2 sm:$0xff]
      %s2892 = scalar_lea.vmem [#allocation3], 98
      %v2893 = vld [vmem:[%s2892] ss:$2 sm:$0xff]
      %s2894 = scalar_lea.vmem [#allocation3], 146
      %v2895 = vld [vmem:[%s2894] ss:$2 sm:$0xff]
      %s2896 = scalar_lea.vmem [#allocation3], 194
      %v2897 = vld [vmem:[%s2896] ss:$2 sm:$0xff]
      %s2898 = scalar_lea.vmem [#allocation3], 242
      %v2899 = vld [vmem:[%s2898] ss:$2 sm:$0xff]
      %s2900 = scalar_lea.vmem [#allocation3], 290
      %v2901 = vld [vmem:[%s2900] ss:$2 sm:$0xff]
      %s2902 = scalar_lea.vmem [#allocation3], 338
      %v2903 = vld [vmem:[%s2902] ss:$2 sm:$0xff]
      %v2904 = vpack.c.bf16 %v2891, %v2889
      %v2905 = vpack.c.bf16 %v2895, %v2893
      %v2906 = vpack.c.bf16 %v2899, %v2897
      %v2907 = vpack.c.bf16 %v2903, %v2901
      %s2908 = scalar_lea.vmem %s7, 8
      %v2909 = vld [vmem:[%s2908] sm:$0xf]
      %v2911 = vsel %vm434, %v2904, 0
      %v2914 = vsel %vm434, %v2905, 0
      %v2917 = vsel %vm434, %v2906, 0
      %v2920 = vsel %vm434, %v2907, 0
      %v2923 = vsel %vm2811, %v2909, 0
      %2925 = vmatpush.bf16.msra.mxu0 0
      %2926 = vmatpush.bf16.msra.mxu0 0
      %2927 = vmatpush.bf16.msra.mxu0 0
      %2928 = vmatpush.bf16.msra.mxu0 0
      %2929 = vmatpush.bf16.msra.mxu0 0
      %2930 = vmatpush.bf16.msra.mxu0 0
      %2931 = vmatpush.bf16.msra.mxu0 0
      %2932 = vmatpush.bf16.msra.mxu0 %v2923
      %2933 = vmatmul.bf16.gmra.mxu0 %v2911
      %v2934 = vpop.f32.mrf.mxu0
      %v2935 = vadd.f32 0.0, %v2934
      %v2936 = vpop.f32.mrf.mxu0
      %v2937 = vadd.f32 0.0, %v2936
      %2938 = vmatmul.bf16.gmra.mxu0 %v2914
      %v2939 = vpop.f32.mrf.mxu0
      %v2940 = vadd.f32 0.0, %v2939
      %v2941 = vpop.f32.mrf.mxu0
      %v2942 = vadd.f32 0.0, %v2941
      %2943 = vmatmul.bf16.gmra.mxu0 %v2917
      %v2944 = vpop.f32.mrf.mxu0
      %v2945 = vadd.f32 0.0, %v2944
      %v2946 = vpop.f32.mrf.mxu0
      %v2947 = vadd.f32 0.0, %v2946
      %2948 = vmatmul.bf16.gmra.mxu0 %v2920
      %v2949 = vpop.f32.mrf.mxu0
      %v2950 = vadd.f32 0.0, %v2949
      %v2951 = vpop.f32.mrf.mxu0
      %v2952 = vadd.f32 0.0, %v2951
      %2953 = vdwg.mxu0
      %v2954 = vadd.f32 %v2869, %v2935
      %v2955 = vadd.f32 %v2871, %v2937
      %v2956 = vadd.f32 %v2874, %v2940
      %v2957 = vadd.f32 %v2876, %v2942
      %v2958 = vadd.f32 %v2879, %v2945
      %v2959 = vadd.f32 %v2881, %v2947
      %v2960 = vadd.f32 %v2884, %v2950
      %v2961 = vadd.f32 %v2886, %v2952
      %v2962 = vld [vmem:[%s2724] ss:$2 sm:$0xff]
      %s2963 = scalar_lea.vmem %s2724, 48 [#allocation3]
      %v2964 = vld [vmem:[%s2963] ss:$2 sm:$0xff]
      %s2965 = scalar_lea.vmem %s2724, 96 [#allocation3]
      %v2966 = vld [vmem:[%s2965] ss:$2 sm:$0xff]
      %s2967 = scalar_lea.vmem %s2724, 144 [#allocation3]
      %v2968 = vld [vmem:[%s2967] ss:$2 sm:$0xff]
      %s2969 = scalar_lea.vmem %s2724, 192 [#allocation3]
      %v2970 = vld [vmem:[%s2969] ss:$2 sm:$0xff]
      %s2971 = scalar_lea.vmem %s2724, 240 [#allocation3]
      %v2972 = vld [vmem:[%s2971] ss:$2 sm:$0xff]
      %s2973 = scalar_lea.vmem %s2724, 288 [#allocation3]
      %v2974 = vld [vmem:[%s2973] ss:$2 sm:$0xff]
      %s2975 = scalar_lea.vmem %s2724, 336 [#allocation3]
      %v2976 = vld [vmem:[%s2975] ss:$2 sm:$0xff]
      %v2977 = vpack.c.bf16 %v2964, %v2962
      %v2978 = vpack.c.bf16 %v2968, %v2966
      %v2979 = vpack.c.bf16 %v2972, %v2970
      %v2980 = vpack.c.bf16 %v2976, %v2974
      %s2981 = scalar_lea.vmem %s7, 12
      %v2982 = vld [vmem:[%s2981] sm:$0xf]
      %v2984 = vsel %vm434, %v2977, 0
      %v2987 = vsel %vm434, %v2978, 0
      %v2990 = vsel %vm434, %v2979, 0
      %v2993 = vsel %vm434, %v2980, 0
      %v2996 = vsel %vm2811, %v2982, 0
      %2998 = vmatpush.bf16.msra.mxu0 0
      %2999 = vmatpush.bf16.msra.mxu0 0
      %3000 = vmatpush.bf16.msra.mxu0 0
      %3001 = vmatpush.bf16.msra.mxu0 0
      %3002 = vmatpush.bf16.msra.mxu0 0
      %3003 = vmatpush.bf16.msra.mxu0 0
      %3004 = vmatpush.bf16.msra.mxu0 0
      %3005 = vmatpush.bf16.msra.mxu0 %v2996
      %3006 = vmatmul.bf16.gmra.mxu0 %v2984
      %v3007 = vpop.f32.mrf.mxu0
      %v3008 = vadd.f32 0.0, %v3007
      %v3009 = vpop.f32.mrf.mxu0
      %v3010 = vadd.f32 0.0, %v3009
      %3011 = vmatmul.bf16.gmra.mxu0 %v2987
      %v3012 = vpop.f32.mrf.mxu0
      %v3013 = vadd.f32 0.0, %v3012
      %v3014 = vpop.f32.mrf.mxu0
      %v3015 = vadd.f32 0.0, %v3014
      %3016 = vmatmul.bf16.gmra.mxu0 %v2990
      %v3017 = vpop.f32.mrf.mxu0
      %v3018 = vadd.f32 0.0, %v3017
      %v3019 = vpop.f32.mrf.mxu0
      %v3020 = vadd.f32 0.0, %v3019
      %3021 = vmatmul.bf16.gmra.mxu0 %v2993
      %v3022 = vpop.f32.mrf.mxu0
      %v3023 = vadd.f32 0.0, %v3022
      %v3024 = vpop.f32.mrf.mxu0
      %v3025 = vadd.f32 0.0, %v3024
      %3026 = vdwg.mxu0
      %v3027 = vadd.f32 %v2954, %v3008
      %v3028 = vadd.f32 %v2955, %v3010
      %v3029 = vadd.f32 %v2956, %v3013
      %v3030 = vadd.f32 %v2957, %v3015
      %v3031 = vadd.f32 %v2958, %v3018
      %v3032 = vadd.f32 %v2959, %v3020
      %v3033 = vadd.f32 %v2960, %v3023
      %v3034 = vadd.f32 %v2961, %v3025
      %s3035 = scalar_lea.vmem %s2724, 1 [#allocation3]
      %v3036 = vld [vmem:[%s3035] ss:$2 sm:$0xff]
      %s3037 = scalar_lea.vmem %s2724, 49 [#allocation3]
      %v3038 = vld [vmem:[%s3037] ss:$2 sm:$0xff]
      %s3039 = scalar_lea.vmem %s2724, 97 [#allocation3]
      %v3040 = vld [vmem:[%s3039] ss:$2 sm:$0xff]
      %s3041 = scalar_lea.vmem %s2724, 145 [#allocation3]
      %v3042 = vld [vmem:[%s3041] ss:$2 sm:$0xff]
      %s3043 = scalar_lea.vmem %s2724, 193 [#allocation3]
      %v3044 = vld [vmem:[%s3043] ss:$2 sm:$0xff]
      %s3045 = scalar_lea.vmem %s2724, 241 [#allocation3]
      %v3046 = vld [vmem:[%s3045] ss:$2 sm:$0xff]
      %s3047 = scalar_lea.vmem %s2724, 289 [#allocation3]
      %v3048 = vld [vmem:[%s3047] ss:$2 sm:$0xff]
      %s3049 = scalar_lea.vmem %s2724, 337 [#allocation3]
      %v3050 = vld [vmem:[%s3049] ss:$2 sm:$0xff]
      %v3051 = vpack.c.bf16 %v3038, %v3036
      %v3052 = vpack.c.bf16 %v3042, %v3040
      %v3053 = vpack.c.bf16 %v3046, %v3044
      %v3054 = vpack.c.bf16 %v3050, %v3048
      %s3055 = scalar_lea.vmem %s7, 16
      %v3056 = vld [vmem:[%s3055] sm:$0xf]
      %v3058 = vsel %vm434, %v3051, 0
      %v3061 = vsel %vm434, %v3052, 0
      %v3064 = vsel %vm434, %v3053, 0
      %v3067 = vsel %vm434, %v3054, 0
      %v3070 = vsel %vm2811, %v3056, 0
      %3072 = vmatpush.bf16.msra.mxu0 0
      %3073 = vmatpush.bf16.msra.mxu0 0
      %3074 = vmatpush.bf16.msra.mxu0 0
      %3075 = vmatpush.bf16.msra.mxu0 0
      %3076 = vmatpush.bf16.msra.mxu0 0
      %3077 = vmatpush.bf16.msra.mxu0 0
      %3078 = vmatpush.bf16.msra.mxu0 0
      %3079 = vmatpush.bf16.msra.mxu0 %v3070
      %3080 = vmatmul.bf16.gmra.mxu0 %v3058
      %v3081 = vpop.f32.mrf.mxu0
      %v3082 = vadd.f32 0.0, %v3081
      %v3083 = vpop.f32.mrf.mxu0
      %v3084 = vadd.f32 0.0, %v3083
      %3085 = vmatmul.bf16.gmra.mxu0 %v3061
      %v3086 = vpop.f32.mrf.mxu0
      %v3087 = vadd.f32 0.0, %v3086
      %v3088 = vpop.f32.mrf.mxu0
      %v3089 = vadd.f32 0.0, %v3088
      %3090 = vmatmul.bf16.gmra.mxu0 %v3064
      %v3091 = vpop.f32.mrf.mxu0
      %v3092 = vadd.f32 0.0, %v3091
      %v3093 = vpop.f32.mrf.mxu0
      %v3094 = vadd.f32 0.0, %v3093
      %3095 = vmatmul.bf16.gmra.mxu0 %v3067
      %v3096 = vpop.f32.mrf.mxu0
      %v3097 = vadd.f32 0.0, %v3096
      %v3098 = vpop.f32.mrf.mxu0
      %v3099 = vadd.f32 0.0, %v3098
      %3100 = vdwg.mxu0
      %v3101 = vadd.f32 %v3027, %v3082
      %v3102 = vadd.f32 %v3028, %v3084
      %v3103 = vadd.f32 %v3029, %v3087
      %v3104 = vadd.f32 %v3030, %v3089
      %v3105 = vadd.f32 %v3031, %v3092
      %v3106 = vadd.f32 %v3032, %v3094
      %v3107 = vadd.f32 %v3033, %v3097
      %v3108 = vadd.f32 %v3034, %v3099
      %s3109 = scalar_lea.vmem %s2724, 2 [#allocation3]
      %v3110 = vld [vmem:[%s3109] ss:$2 sm:$0xff]
      %s3111 = scalar_lea.vmem %s2724, 50 [#allocation3]
      %v3112 = vld [vmem:[%s3111] ss:$2 sm:$0xff]
      %s3113 = scalar_lea.vmem %s2724, 98 [#allocation3]
      %v3114 = vld [vmem:[%s3113] ss:$2 sm:$0xff]
      %s3115 = scalar_lea.vmem %s2724, 146 [#allocation3]
      %v3116 = vld [vmem:[%s3115] ss:$2 sm:$0xff]
      %s3117 = scalar_lea.vmem %s2724, 194 [#allocation3]
      %v3118 = vld [vmem:[%s3117] ss:$2 sm:$0xff]
      %s3119 = scalar_lea.vmem %s2724, 242 [#allocation3]
      %v3120 = vld [vmem:[%s3119] ss:$2 sm:$0xff]
      %s3121 = scalar_lea.vmem %s2724, 290 [#allocation3]
      %v3122 = vld [vmem:[%s3121] ss:$2 sm:$0xff]
      %s3123 = scalar_lea.vmem %s2724, 338 [#allocation3]
      %v3124 = vld [vmem:[%s3123] ss:$2 sm:$0xff]
      %v3125 = vpack.c.bf16 %v3112, %v3110
      %v3126 = vpack.c.bf16 %v3116, %v3114
      %v3127 = vpack.c.bf16 %v3120, %v3118
      %v3128 = vpack.c.bf16 %v3124, %v3122
      %s3129 = scalar_lea.vmem %s7, 20
      %v3130 = vld [vmem:[%s3129] sm:$0xf]
      %v3132 = vsel %vm434, %v3125, 0
      %v3135 = vsel %vm434, %v3126, 0
      %v3138 = vsel %vm434, %v3127, 0
      %v3141 = vsel %vm434, %v3128, 0
      %v3144 = vsel %vm2811, %v3130, 0
      %3146 = vmatpush.bf16.msra.mxu0 0
      %3147 = vmatpush.bf16.msra.mxu0 0
      %3148 = vmatpush.bf16.msra.mxu0 0
      %3149 = vmatpush.bf16.msra.mxu0 0
      %3150 = vmatpush.bf16.msra.mxu0 0
      %3151 = vmatpush.bf16.msra.mxu0 0
      %3152 = vmatpush.bf16.msra.mxu0 0
      %3153 = vmatpush.bf16.msra.mxu0 %v3144
      %3154 = vmatmul.bf16.gmra.mxu0 %v3132
      %v3155 = vpop.f32.mrf.mxu0
      %v3156 = vadd.f32 0.0, %v3155
      %v3157 = vpop.f32.mrf.mxu0
      %v3158 = vadd.f32 0.0, %v3157
      %3159 = vmatmul.bf16.gmra.mxu0 %v3135
      %v3160 = vpop.f32.mrf.mxu0
      %v3161 = vadd.f32 0.0, %v3160
      %v3162 = vpop.f32.mrf.mxu0
      %v3163 = vadd.f32 0.0, %v3162
      %3164 = vmatmul.bf16.gmra.mxu0 %v3138
      %v3165 = vpop.f32.mrf.mxu0
      %v3166 = vadd.f32 0.0, %v3165
      %v3167 = vpop.f32.mrf.mxu0
      %v3168 = vadd.f32 0.0, %v3167
      %3169 = vmatmul.bf16.gmra.mxu0 %v3141
      %v3170 = vpop.f32.mrf.mxu0
      %v3171 = vadd.f32 0.0, %v3170
      %v3172 = vpop.f32.mrf.mxu0
      %v3173 = vadd.f32 0.0, %v3172
      %3174 = vdwg.mxu0
      %v3175 = vadd.f32 %v3101, %v3156
      %v3176 = vadd.f32 %v3102, %v3158
      %v3177 = vadd.f32 %v3103, %v3161
      %v3178 = vadd.f32 %v3104, %v3163
      %v3179 = vadd.f32 %v3105, %v3166
      %v3180 = vadd.f32 %v3106, %v3168
      %v3181 = vadd.f32 %v3107, %v3171
      %v3182 = vadd.f32 %v3108, %v3173
      %s3183 = scalar_lea.vmem [#allocation3], 48
      %v3184 = vld [vmem:[%s3183] ss:$2 sm:$0xff]
      %s3185 = scalar_lea.vmem %s3183, 48 [#allocation3]
      %v3186 = vld [vmem:[%s3185] ss:$2 sm:$0xff]
      %s3187 = scalar_lea.vmem %s3183, 96 [#allocation3]
      %v3188 = vld [vmem:[%s3187] ss:$2 sm:$0xff]
      %s3189 = scalar_lea.vmem %s3183, 144 [#allocation3]
      %v3190 = vld [vmem:[%s3189] ss:$2 sm:$0xff]
      %s3191 = scalar_lea.vmem %s3183, 192 [#allocation3]
      %v3192 = vld [vmem:[%s3191] ss:$2 sm:$0xff]
      %s3193 = scalar_lea.vmem %s3183, 240 [#allocation3]
      %v3194 = vld [vmem:[%s3193] ss:$2 sm:$0xff]
      %s3195 = scalar_lea.vmem %s3183, 288 [#allocation3]
      %v3196 = vld [vmem:[%s3195] ss:$2 sm:$0xff]
      %s3197 = scalar_lea.vmem %s3183, 336 [#allocation3]
      %v3198 = vld [vmem:[%s3197] ss:$2 sm:$0xff]
      %v3199 = vpack.c.bf16 %v3186, %v3184
      %v3200 = vpack.c.bf16 %v3190, %v3188
      %v3201 = vpack.c.bf16 %v3194, %v3192
      %v3202 = vpack.c.bf16 %v3198, %v3196
      %s3203 = scalar_lea.vmem %s7, 24
      %v3204 = vld [vmem:[%s3203] sm:$0xf]
      %v3206 = vsel %vm434, %v3199, 0
      %v3209 = vsel %vm434, %v3200, 0
      %v3212 = vsel %vm434, %v3201, 0
      %v3215 = vsel %vm434, %v3202, 0
      %v3218 = vsel %vm2811, %v3204, 0
      %3220 = vmatpush.bf16.msra.mxu0 0
      %3221 = vmatpush.bf16.msra.mxu0 0
      %3222 = vmatpush.bf16.msra.mxu0 0
      %3223 = vmatpush.bf16.msra.mxu0 0
      %3224 = vmatpush.bf16.msra.mxu0 0
      %3225 = vmatpush.bf16.msra.mxu0 0
      %3226 = vmatpush.bf16.msra.mxu0 0
      %3227 = vmatpush.bf16.msra.mxu0 %v3218
      %3228 = vmatmul.bf16.gmra.mxu0 %v3206
      %v3229 = vpop.f32.mrf.mxu0
      %v3230 = vadd.f32 0.0, %v3229
      %v3231 = vpop.f32.mrf.mxu0
      %v3232 = vadd.f32 0.0, %v3231
      %3233 = vmatmul.bf16.gmra.mxu0 %v3209
      %v3234 = vpop.f32.mrf.mxu0
      %v3235 = vadd.f32 0.0, %v3234
      %v3236 = vpop.f32.mrf.mxu0
      %v3237 = vadd.f32 0.0, %v3236
      %3238 = vmatmul.bf16.gmra.mxu0 %v3212
      %v3239 = vpop.f32.mrf.mxu0
      %v3240 = vadd.f32 0.0, %v3239
      %v3241 = vpop.f32.mrf.mxu0
      %v3242 = vadd.f32 0.0, %v3241
      %3243 = vmatmul.bf16.gmra.mxu0 %v3215
      %v3244 = vpop.f32.mrf.mxu0
      %v3245 = vadd.f32 0.0, %v3244
      %v3246 = vpop.f32.mrf.mxu0
      %v3247 = vadd.f32 0.0, %v3246
      %3248 = vdwg.mxu0
      %v3249 = vadd.f32 %v3175, %v3230
      %v3250 = vadd.f32 %v3176, %v3232
      %v3251 = vadd.f32 %v3177, %v3235
      %v3252 = vadd.f32 %v3178, %v3237
      %v3253 = vadd.f32 %v3179, %v3240
      %v3254 = vadd.f32 %v3180, %v3242
      %v3255 = vadd.f32 %v3181, %v3245
      %v3256 = vadd.f32 %v3182, %v3247
      %s3257 = scalar_lea.vmem %s3183, 1 [#allocation3]
      %v3258 = vld [vmem:[%s3257] ss:$2 sm:$0xff]
      %s3259 = scalar_lea.vmem %s3183, 49 [#allocation3]
      %v3260 = vld [vmem:[%s3259] ss:$2 sm:$0xff]
      %s3261 = scalar_lea.vmem %s3183, 97 [#allocation3]
      %v3262 = vld [vmem:[%s3261] ss:$2 sm:$0xff]
      %s3263 = scalar_lea.vmem %s3183, 145 [#allocation3]
      %v3264 = vld [vmem:[%s3263] ss:$2 sm:$0xff]
      %s3265 = scalar_lea.vmem %s3183, 193 [#allocation3]
      %v3266 = vld [vmem:[%s3265] ss:$2 sm:$0xff]
      %s3267 = scalar_lea.vmem %s3183, 241 [#allocation3]
      %v3268 = vld [vmem:[%s3267] ss:$2 sm:$0xff]
      %s3269 = scalar_lea.vmem %s3183, 289 [#allocation3]
      %v3270 = vld [vmem:[%s3269] ss:$2 sm:$0xff]
      %s3271 = scalar_lea.vmem %s3183, 337 [#allocation3]
      %v3272 = vld [vmem:[%s3271] ss:$2 sm:$0xff]
      %v3273 = vpack.c.bf16 %v3260, %v3258
      %v3274 = vpack.c.bf16 %v3264, %v3262
      %v3275 = vpack.c.bf16 %v3268, %v3266
      %v3276 = vpack.c.bf16 %v3272, %v3270
      %s3277 = scalar_lea.vmem %s7, 28
      %v3278 = vld [vmem:[%s3277] sm:$0xf]
      %v3280 = vsel %vm434, %v3273, 0
      %v3283 = vsel %vm434, %v3274, 0
      %v3286 = vsel %vm434, %v3275, 0
      %v3289 = vsel %vm434, %v3276, 0
      %v3292 = vsel %vm2811, %v3278, 0
      %3294 = vmatpush.bf16.msra.mxu0 0
      %3295 = vmatpush.bf16.msra.mxu0 0
      %3296 = vmatpush.bf16.msra.mxu0 0
      %3297 = vmatpush.bf16.msra.mxu0 0
      %3298 = vmatpush.bf16.msra.mxu0 0
      %3299 = vmatpush.bf16.msra.mxu0 0
      %3300 = vmatpush.bf16.msra.mxu0 0
      %3301 = vmatpush.bf16.msra.mxu0 %v3292
      %3302 = vmatmul.bf16.gmra.mxu0 %v3280
      %v3303 = vpop.f32.mrf.mxu0
      %v3304 = vadd.f32 0.0, %v3303
      %v3305 = vpop.f32.mrf.mxu0
      %v3306 = vadd.f32 0.0, %v3305
      %3307 = vmatmul.bf16.gmra.mxu0 %v3283
      %v3308 = vpop.f32.mrf.mxu0
      %v3309 = vadd.f32 0.0, %v3308
      %v3310 = vpop.f32.mrf.mxu0
      %v3311 = vadd.f32 0.0, %v3310
      %3312 = vmatmul.bf16.gmra.mxu0 %v3286
      %v3313 = vpop.f32.mrf.mxu0
      %v3314 = vadd.f32 0.0, %v3313
      %v3315 = vpop.f32.mrf.mxu0
      %v3316 = vadd.f32 0.0, %v3315
      %3317 = vmatmul.bf16.gmra.mxu0 %v3289
      %v3318 = vpop.f32.mrf.mxu0
      %v3319 = vadd.f32 0.0, %v3318
      %v3320 = vpop.f32.mrf.mxu0
      %v3321 = vadd.f32 0.0, %v3320
      %3322 = vdwg.mxu0
      %v3323 = vadd.f32 %v3249, %v3304
      %v3324 = vadd.f32 %v3250, %v3306
      %v3325 = vadd.f32 %v3251, %v3309
      %v3326 = vadd.f32 %v3252, %v3311
      %v3327 = vadd.f32 %v3253, %v3314
      %v3328 = vadd.f32 %v3254, %v3316
      %v3329 = vadd.f32 %v3255, %v3319
      %v3330 = vadd.f32 %v3256, %v3321
      %s3331 = scalar_lea.vmem %s3183, 2 [#allocation3]
      %v3332 = vld [vmem:[%s3331] ss:$2 sm:$0xff]
      %s3333 = scalar_lea.vmem %s3183, 50 [#allocation3]
      %v3334 = vld [vmem:[%s3333] ss:$2 sm:$0xff]
      %s3335 = scalar_lea.vmem %s3183, 98 [#allocation3]
      %v3336 = vld [vmem:[%s3335] ss:$2 sm:$0xff]
      %s3337 = scalar_lea.vmem %s3183, 146 [#allocation3]
      %v3338 = vld [vmem:[%s3337] ss:$2 sm:$0xff]
      %s3339 = scalar_lea.vmem %s3183, 194 [#allocation3]
      %v3340 = vld [vmem:[%s3339] ss:$2 sm:$0xff]
      %s3341 = scalar_lea.vmem %s3183, 242 [#allocation3]
      %v3342 = vld [vmem:[%s3341] ss:$2 sm:$0xff]
      %s3343 = scalar_lea.vmem %s3183, 290 [#allocation3]
      %v3344 = vld [vmem:[%s3343] ss:$2 sm:$0xff]
      %s3345 = scalar_lea.vmem %s3183, 338 [#allocation3]
      %v3346 = vld [vmem:[%s3345] ss:$2 sm:$0xff]
      %v3347 = vpack.c.bf16 %v3334, %v3332
      %v3348 = vpack.c.bf16 %v3338, %v3336
      %v3349 = vpack.c.bf16 %v3342, %v3340
      %v3350 = vpack.c.bf16 %v3346, %v3344
      %s3351 = scalar_lea.vmem %s7, 32
      %v3352 = vld [vmem:[%s3351] sm:$0xf]
      %v3354 = vsel %vm434, %v3347, 0
      %v3357 = vsel %vm434, %v3348, 0
      %v3360 = vsel %vm434, %v3349, 0
      %v3363 = vsel %vm434, %v3350, 0
      %v3366 = vsel %vm2811, %v3352, 0
      %3368 = vmatpush.bf16.msra.mxu0 0
      %3369 = vmatpush.bf16.msra.mxu0 0
      %3370 = vmatpush.bf16.msra.mxu0 0
      %3371 = vmatpush.bf16.msra.mxu0 0
      %3372 = vmatpush.bf16.msra.mxu0 0
      %3373 = vmatpush.bf16.msra.mxu0 0
      %3374 = vmatpush.bf16.msra.mxu0 0
      %3375 = vmatpush.bf16.msra.mxu0 %v3366
      %3376 = vmatmul.bf16.gmra.mxu0 %v3354
      %v3377 = vpop.f32.mrf.mxu0
      %v3378 = vadd.f32 0.0, %v3377
      %v3379 = vpop.f32.mrf.mxu0
      %v3380 = vadd.f32 0.0, %v3379
      %3381 = vmatmul.bf16.gmra.mxu0 %v3357
      %v3382 = vpop.f32.mrf.mxu0
      %v3383 = vadd.f32 0.0, %v3382
      %v3384 = vpop.f32.mrf.mxu0
      %v3385 = vadd.f32 0.0, %v3384
      %3386 = vmatmul.bf16.gmra.mxu0 %v3360
      %v3387 = vpop.f32.mrf.mxu0
      %v3388 = vadd.f32 0.0, %v3387
      %v3389 = vpop.f32.mrf.mxu0
      %v3390 = vadd.f32 0.0, %v3389
      %3391 = vmatmul.bf16.gmra.mxu0 %v3363
      %v3392 = vpop.f32.mrf.mxu0
      %v3393 = vadd.f32 0.0, %v3392
      %v3394 = vpop.f32.mrf.mxu0
      %v3395 = vadd.f32 0.0, %v3394
      %3396 = vdwg.mxu0
      %v3397 = vadd.f32 %v3323, %v3378
      %v3398 = vadd.f32 %v3324, %v3380
      %v3399 = vadd.f32 %v3325, %v3383
      %v3400 = vadd.f32 %v3326, %v3385
      %v3401 = vadd.f32 %v3327, %v3388
      %v3402 = vadd.f32 %v3328, %v3390
      %v3403 = vadd.f32 %v3329, %v3393
      %v3404 = vadd.f32 %v3330, %v3395
      %v3405 = vld [vmem:[%s8] sm:$0x1]
      %v3407 = vperm.slane %v3405, 0
      %v3409 = vadd.f32 %v3397, %v3407
      %v3410 = vadd.f32 %v3398, %v3407
      %v3411 = vadd.f32 %v3399, %v3407
      %v3412 = vadd.f32 %v3400, %v3407
      %v3413 = vadd.f32 %v3401, %v3407
      %v3414 = vadd.f32 %v3402, %v3407
      %v3415 = vadd.f32 %v3403, %v3407
      %v3416 = vadd.f32 %v3404, %v3407
      %v3417 = vld [vmem:[%s381] ss:$2 sm:$0xff]
      %s3418 = scalar_lea.vmem %s381, 32
      %v3419 = vld [vmem:[%s3418] ss:$2 sm:$0xff]
      %s3420 = scalar_lea.vmem %s381, 64
      %v3421 = vld [vmem:[%s3420] ss:$2 sm:$0xff]
      %s3422 = scalar_lea.vmem %s381, 96
      %v3423 = vld [vmem:[%s3422] ss:$2 sm:$0xff]
      %s3424 = scalar_lea.vmem %s381, 128
      %v3425 = vld [vmem:[%s3424] ss:$2 sm:$0xff]
      %s3426 = scalar_lea.vmem %s381, 160
      %v3427 = vld [vmem:[%s3426] ss:$2 sm:$0xff]
      %s3428 = scalar_lea.vmem %s381, 192
      %v3429 = vld [vmem:[%s3428] ss:$2 sm:$0xff]
      %s3430 = scalar_lea.vmem %s381, 224
      %v3431 = vld [vmem:[%s3430] ss:$2 sm:$0xff]
      %v3432 = vpack.c.bf16 %v3419, %v3417
      %v3433 = vpack.c.bf16 %v3423, %v3421
      %v3434 = vpack.c.bf16 %v3427, %v3425
      %v3435 = vpack.c.bf16 %v3431, %v3429
      %v3436 = vld [vmem:[%s9] sm:$0x3]
      %v3437 = vld [vmem:[%s10] sm:$0x1]
      %v3439 = vperm.slane %v3437, 0
      %v3442 = vsel %vm388, %v3432, 0
      %v3445 = vsel %vm388, %v3433, 0
      %v3448 = vsel %vm388, %v3434, 0
      %v3451 = vsel %vm388, %v3435, 0
      %v3454 = vsel %vm796, %v3436, 0
      %3456 = vmatpush.bf16.msra.mxu0 0
      %3457 = vmatpush.bf16.msra.mxu0 0
      %3458 = vmatpush.bf16.msra.mxu0 0
      %3459 = vmatpush.bf16.msra.mxu0 0
      %3460 = vmatpush.bf16.msra.mxu0 0
      %3461 = vmatpush.bf16.msra.mxu0 0
      %3462 = vmatpush.bf16.msra.mxu0 0
      %3463 = vmatpush.bf16.msra.mxu0 %v3454
      %3464 = vmatmul.bf16.gmra.mxu0 %v3442
      %v3465 = vpop.f32.mrf.mxu0
      %v3466 = vadd.f32 %v3439, %v3465
      %v3467 = vpop.f32.mrf.mxu0
      %v3468 = vadd.f32 %v3439, %v3467
      %3469 = vmatmul.bf16.gmra.mxu0 %v3445
      %v3470 = vpop.f32.mrf.mxu0
      %v3471 = vadd.f32 %v3439, %v3470
      %v3472 = vpop.f32.mrf.mxu0
      %v3473 = vadd.f32 %v3439, %v3472
      %3474 = vmatmul.bf16.gmra.mxu0 %v3448
      %v3475 = vpop.f32.mrf.mxu0
      %v3476 = vadd.f32 %v3439, %v3475
      %v3477 = vpop.f32.mrf.mxu0
      %v3478 = vadd.f32 %v3439, %v3477
      %3479 = vmatmul.bf16.gmra.mxu0 %v3451
      %v3480 = vpop.f32.mrf.mxu0
      %v3481 = vadd.f32 %v3439, %v3480
      %v3482 = vpop.f32.mrf.mxu0
      %v3483 = vadd.f32 %v3439, %v3482
      %3484 = vdwg.mxu0
      %v3485 = vadd.f32 %v3409, %v3466
      %v3486 = vadd.f32 %v3410, %v3468
      %v3487 = vadd.f32 %v3411, %v3471
      %v3488 = vadd.f32 %v3412, %v3473
      %v3489 = vadd.f32 %v3413, %v3476
      %v3490 = vadd.f32 %v3414, %v3478
      %v3491 = vadd.f32 %v3415, %v3481
      %v3492 = vadd.f32 %v3416, %v3483
      %3493 = vst.msk [vmem:[%s386] sm:$0xff] %vm434, %v3485
      %3494 = vst.msk [vmem:[%s386 + $0x8] sm:$0xff] %vm434, %v3486
      %3495 = vst.msk [vmem:[%s386 + $0x10] sm:$0xff] %vm434, %v3487
      %3496 = vst.msk [vmem:[%s386 + $0x18] sm:$0xff] %vm434, %v3488
      %3497 = vst.msk [vmem:[%s386 + $0x20] sm:$0xff] %vm434, %v3489
      %3498 = vst.msk [vmem:[%s386 + $0x28] sm:$0xff] %vm434, %v3490
      %3499 = vst.msk [vmem:[%s386 + $0x30] sm:$0xff] %vm434, %v3491
      %3500 = vst.msk [vmem:[%s386 + $0x38] sm:$0xff] %vm434, %v3492
      %p3501 = scmp.lt.s32.totalorder %s22, 1
      %s3502 = scalar_select %p3501, %s22, 1
      %s3503 = smul.addr %s3502, 8
      %s3504 = smul.addr %s3503, 8
      %s3505 = scalar_lea.vmem %s11, %s3504
      // Predicated region
      $region65: #{tpu_custom_call.1} parent=63 // pred_check
        %p3506 = pneg %p276
      $region66: #{tpu_custom_call.1} parent=63 // pred_check_branch
        %3508 = sbr.rel (%p3506) target = $region68
      $region67: #{tpu_custom_call.1} parent=63 // pred_region
        _
      $region68: #{tpu_custom_call.1} parent=63 // pred_fallthru
        _
    $region64: #{tpu_custom_call.1} parent=5 // pred_fallthru
      _
    %p3509 = scmp.le.s32.totalorder 2, %s17
    // Predicated region
    $region69: #{tpu_custom_call.1} parent=5 // pred_check
      %p3510 = pneg %p3509
    $region70: #{tpu_custom_call.1} parent=5 // pred_check_branch
      %3512 = sbr.rel (%p3510) target = $region72
    $region71: #{tpu_custom_call.1} parent=5 // pred_region
      %s3513 = ssub.s32 %s17, 2
      // Predicated region
      $region73: #{tpu_custom_call.1} parent=71 // pred_check
        %p3514 = pneg %p282
      $region74: #{tpu_custom_call.1} parent=71 // pred_check_branch
        %3516 = sbr.rel (%p3514) target = $region76
      $region75: #{tpu_custom_call.1} parent=71 // pred_region
        %p3517 = scmp.lt.s32.totalorder %s23, 1
        %s3518 = scalar_select %p3517, %s23, 1
        %s3519 = smul.addr %s3518, 8
        %s3520 = smul.addr %s3519, 8
        %s3521 = scalar_lea.vmem %s11, %s3520
      $region76: #{tpu_custom_call.1} parent=71 // pred_fallthru
        _
    $region72: #{tpu_custom_call.1} parent=5 // pred_fallthru
      _
  $region6: #{tpu_custom_call.1} parent=0 // loop_footer
    %s21 = sadd.s32 1, %s17
  $region7: #{tpu_custom_call.1} parent=0 // loop_footer_branch
    %16 = sbr.rel target = $region3
  $region8: #{tpu_custom_call.1} parent=0 // loop_exit
    _

</llo_original>
